<compile_context>
chip_gen: v5e
topology: v5e:2x2
jax: 0.10.0
libtpu: 0.0.40
codegen_flags: <defaults>
</compile_context>

<pallas_src>
import jax
import jax.numpy as jnp
from jax import lax
from jax.experimental import pallas as pl
from jax.experimental.pallas import tpu as pltpu

# ---------------- config (small, consistent with the module) ----------------
B, S, H = 2, 8, 32          # batch, max_len, d_hidden
HEADS = 4
DH = H // HEADS
INTER = 64                  # FFN intermediate
LAYERS = 2                  # tiny "BERT"
VOCAB = 100
NTAG = 5                    # n_tag for the CRF
LN_EPS = 1e-12

# row offsets inside the packed (rows, H) f32 parameter array
PKH_EMB_G = 0
PKH_EMB_B = 1
PKH_TYPE0 = 2
PKH_POS = 3                       # S rows of positional embedding
PKH_WCT = PKH_POS + S             # NTAG rows of classifier weight, transposed
PKH_LAYER = PKH_WCT + NTAG        # 6 rows per layer: ln1_g, ln1_b, ln2_g, ln2_b, bo, b2
PKH_ROWS = PKH_LAYER + 6 * LAYERS

_VMEM = pl.BlockSpec(memory_space=pltpu.MemorySpace.VMEM)


# ------------------------- fused whole-model kernel ---------------------------
def _bert_ner_fused_kernel(
    ids_ref,        # (B*S, 1) int32   token ids
    labels_ref,     # (B*S, 1) int32   tag ids
    mask_ref,       # (B, S)   f32     attention / CRF mask
    word_emb_ref,   # (VOCAB, H) f32   word embedding table
    wqkv_ref,       # (L, H, 3H) bf16
    wo_ref,         # (L, H, H)  bf16
    w1_ref,         # (L, H, INTER) bf16
    w2_ref,         # (L, INTER, H) bf16
    pk_h_ref,       # (PKH_ROWS, H) f32   packed small params (lane width H)
    pk_w_ref,       # (2*L, 3H) f32       packed qkv / ffn1 biases
    pk_crf_ref,     # (3+NTAG, NTAG) f32  packed classifier bias + CRF params
    out_ref,        # (1, 1) f32  summed CRF NLL
):
    f32 = jnp.float32
    bf16 = jnp.bfloat16

    pk = pk_h_ref[...]          # (PKH_ROWS, H)
    pkw = pk_w_ref[...]         # (2L, 3H)
    pkc = pk_crf_ref[...]       # (3+T, T)
    mask = mask_ref[...]        # (B, S)

    def ln(x, g, b):            # LayerNorm (residual already added by caller)
        mu = jnp.mean(x, axis=-1, keepdims=True)
        var = jnp.mean((x - mu) ** 2, axis=-1, keepdims=True)
        return (x - mu) * lax.rsqrt(var + LN_EPS) * g + b

    # ---------------- embeddings (fused: one-hot gather via MXU, exact) ----------------
    ids = ids_ref[...]                                                      # (B*S, 1) i32
    vocab_iota = lax.broadcasted_iota(jnp.int32, (B * S, VOCAB), 1)
    oh_ids = (ids == vocab_iota).astype(f32)                                # (B*S, V)
    word = jnp.dot(oh_ids, word_emb_ref[...], preferred_element_type=f32)   # (B*S, H)
    pos = pk[PKH_POS:PKH_POS + S, :]                                        # (S, H)
    pos_b = jnp.concatenate([pos] * B, axis=0)                              # (B*S, H)
    x = ln(word + pos_b + pk[PKH_TYPE0:PKH_TYPE0 + 1, :],
           pk[PKH_EMB_G:PKH_EMB_G + 1, :], pk[PKH_EMB_B:PKH_EMB_B + 1, :])  # (B*S, H)

    # ---------------- block-diagonal attention bias, built ONCE ----------------
    key_bias = (1.0 - mask) * (-1e9)                                        # (B, S)
    neg = jnp.full((S, S), -1e9, f32)
    bias_rows = []
    for b in range(B):
        blocks = [jnp.broadcast_to(key_bias[b:b + 1, :], (S, S)) if bb == b else neg
                  for bb in range(B)]
        bias_rows.append(jnp.concatenate(blocks, axis=1))
    attn_bias = jnp.concatenate(bias_rows, axis=0)                          # (B*S, B*S)
    scale = float(DH) ** -0.5

    # ---------------- transformer layers (statically unrolled) ----------------
    for l in range(LAYERS):
        base = PKH_LAYER + 6 * l
        qkv = jnp.dot(x.astype(bf16), wqkv_ref[l],
                      preferred_element_type=f32) + pkw[l:l + 1, :]         # (B*S, 3H)
        q = qkv[:, 0 * H:1 * H]
        k = qkv[:, 1 * H:2 * H]
        v = qkv[:, 2 * H:3 * H]

        # one score matmul per head over the whole batch (block-diag bias kills cross-batch)
        ctx_parts = []
        for h in range(HEADS):
            c0, c1 = h * DH, (h + 1) * DH
            s = lax.dot_general(q[:, c0:c1], k[:, c0:c1],
                                (((1,), (1,)), ((), ())),
                                preferred_element_type=f32) * scale + attn_bias   # (B*S, B*S)
            m = jnp.max(s, axis=-1, keepdims=True)
            p = jnp.exp(s - m)
            p = p / jnp.sum(p, axis=-1, keepdims=True)
            ctx_parts.append(jnp.dot(p, v[:, c0:c1], preferred_element_type=f32))  # (B*S, DH)
        ctx = jnp.concatenate(ctx_parts, axis=-1)                           # (B*S, H), no scratch

        attn_out = jnp.dot(ctx.astype(bf16), wo_ref[l],
                           preferred_element_type=f32) + pk[base + 4:base + 5, :]
        x = ln(x + attn_out, pk[base + 0:base + 1, :], pk[base + 1:base + 2, :])

        ffh = jnp.dot(x.astype(bf16), w1_ref[l],
                      preferred_element_type=f32) + pkw[LAYERS + l:LAYERS + l + 1, :INTER]
        # TODO(synk): HF BERT uses exact erf GELU; tanh approximation kept (guaranteed TPU lowering).
        ffh = jax.nn.gelu(ffh, approximate=True)
        ffo = jnp.dot(ffh.astype(bf16), w2_ref[l],
                      preferred_element_type=f32) + pk[base + 5:base + 6, :]
        x = ln(x + ffo, pk[base + 2:base + 3, :], pk[base + 3:base + 4, :])

    # TODO(synk): nn.Dropout(0.1) omitted (eval-mode identity); train-mode RNG not reproducible.

    # ---------------- classifier (f32 path feeding the CRF) ----------------
    wcT = pk[PKH_WCT:PKH_WCT + NTAG, :]                                     # (T, H)
    logits = lax.dot_general(x, wcT, (((1,), (1,)), ((), ())),
                             preferred_element_type=f32) + pkc[0:1, :]      # (B*S, T)
    emis = logits.reshape(B, S, NTAG)                                       # sublane-only split

    # ---------------- CRF tag one-hots built in-kernel ----------------
    labels = labels_ref[...]                                                # (B*S, 1) i32
    tag_iota = lax.broadcasted_iota(jnp.int32, (B * S, NTAG), 1)
    oh_flat = (labels == tag_iota).astype(f32)                              # (B*S, T)
    oh = oh_flat.reshape(B, S, NTAG)                                        # (B, S, T)

    # last valid position = sum(mask) - 1 (exactly torchcrf's convention)
    col_idx = lax.broadcasted_iota(jnp.int32, (B, S), 1).astype(f32)
    last_idx = jnp.sum(mask, axis=-1, keepdims=True) - 1.0                  # (B, 1)
    is_last = (col_idx == last_idx).astype(f32)                             # (B, S)
    last_oh = jnp.sum(oh * is_last[:, :, None], axis=1)                     # (B, T)

    start = pkc[1:2, :]                                                     # (1, T)
    end = pkc[2:3, :]                                                       # (1, T)
    trans = pkc[3:3 + NTAG, :]                                              # (T, T) trans[prev, cur]

    # ----- numerator: vectorized path score -----
    # TODO(synk): assumes mask[:, 0] == 1 for every row (required by torchcrf as well).
    num = jnp.sum((start + emis[:, 0, :]) * oh[:, 0, :], axis=-1, keepdims=True)          # (B,1)
    trans_rows = jnp.dot(oh_flat, trans,
                         preferred_element_type=f32).reshape(B, S, NTAG)                  # (B,S,T)
    trans_sc = jnp.sum(trans_rows[:, :S - 1, :] * oh[:, 1:, :], axis=-1)                  # (B,S-1)
    emit_sc = jnp.sum(emis[:, 1:, :] * oh[:, 1:, :], axis=-1)                             # (B,S-1)
    num = num + jnp.sum((trans_sc + emit_sc) * mask[:, 1:], axis=-1, keepdims=True)
    num = num + jnp.sum(end * last_oh, axis=-1, keepdims=True)                            # (B,1)

    # ----- denominator: log partition via forward algorithm (serial in S) -----
    score = start + emis[:, 0, :]                                                         # (B,T)
    for i in range(1, S):
        e_i = emis[:, i, :]                                                               # (B,T)
        bcast = score[:, :, None] + trans[None, :, :] + e_i[:, None, :]                   # (B,T,T)
        m = jnp.max(bcast, axis=1, keepdims=True)                                         # (B,1,T)
        nxt = jnp.log(jnp.sum(jnp.exp(bcast - m), axis=1)) + m[:, 0, :]                   # (B,T)
        score = jnp.where(mask[:, i:i + 1] > 0, nxt, score)
    score = score + end
    m = jnp.max(score, axis=-1, keepdims=True)
    den = jnp.log(jnp.sum(jnp.exp(score - m), axis=-1, keepdims=True)) + m                # (B,1)

    out_ref[...] = -jnp.sum(num - den, axis=0, keepdims=True)                             # (1,1)


# ------------------------------ params / packing -----------------------------------
def init_params(key):
    keys = iter(jax.random.split(key, 32))

    def nrm(shape, s=0.02):
        return s * jax.random.normal(next(keys), shape, jnp.float32)

    def uni(shape):
        return jax.random.uniform(next(keys), shape, jnp.float32, -0.1, 0.1)

    bf16 = jnp.bfloat16

    word_emb = nrm((VOCAB, H))
    pos_emb = nrm((S, H))
    type_emb = nrm((2, H))
    emb_ln_g = jnp.ones((1, H), jnp.float32)
    emb_ln_b = jnp.zeros((1, H), jnp.float32)
    wqkv = nrm((LAYERS, H, 3 * H))
    bqkv = uni((LAYERS, 1, 3 * H))
    wo = nrm((LAYERS, H, H))
    bo = uni((LAYERS, 1, H))
    ln1_g = jnp.ones((LAYERS, 1, H), jnp.float32)
    ln1_b = jnp.zeros((LAYERS, 1, H), jnp.float32)
    w1 = nrm((LAYERS, H, INTER))
    b1 = uni((LAYERS, 1, INTER))
    w2 = nrm((LAYERS, INTER, H))
    b2 = uni((LAYERS, 1, H))
    ln2_g = jnp.ones((LAYERS, 1, H), jnp.float32)
    ln2_b = jnp.zeros((LAYERS, 1, H), jnp.float32)
    wc = nrm((H, NTAG))
    bc = uni((1, NTAG))
    crf_start = uni((1, NTAG))
    crf_end = uni((1, NTAG))
    crf_trans = uni((NTAG, NTAG))

    # --- pack all tiny f32 params into 3 arrays (3 entry DMAs instead of 16+) ---
    rows_h = [emb_ln_g, emb_ln_b, type_emb[0:1], pos_emb, wc.T]
    for l in range(LAYERS):
        rows_h += [ln1_g[l], ln1_b[l], ln2_g[l], ln2_b[l], bo[l], b2[l]]
    pk_h = jnp.concatenate(rows_h, axis=0)                     # (PKH_ROWS, H)
    assert pk_h.shape == (PKH_ROWS, H)

    b1_pad = jnp.pad(b1, ((0, 0), (0, 0), (0, 3 * H - INTER)))  # pad lanes to 3H
    pk_w = jnp.concatenate([bqkv[0], bqkv[1], b1_pad[0], b1_pad[1]], axis=0)   # (2L, 3H)

    pk_crf = jnp.concatenate([bc, crf_start, crf_end, crf_trans], axis=0)      # (3+T, T)

    return {
        "word_emb": word_emb,
        "wqkv": wqkv.astype(bf16), "wo": wo.astype(bf16),
        "w1": w1.astype(bf16), "w2": w2.astype(bf16),
        "pk_h": pk_h, "pk_w": pk_w, "pk_crf": pk_crf,
    }


# ------------------------------ model wrapper -----------------------------------
def bert_for_ner_loss(p, input_ids, attention_mask, labels):
    ids = input_ids.reshape(B * S, 1).astype(jnp.int32)
    labs = labels.reshape(B * S, 1).astype(jnp.int32)
    mask_f = attention_mask.astype(jnp.float32).reshape(B, S)

    loss = pl.pallas_call(
        _bert_ner_fused_kernel,
        out_shape=jax.ShapeDtypeStruct((1, 1), jnp.float32),
        in_specs=[_VMEM] * 11,
        out_specs=_VMEM,
    )(ids, labs, mask_f,
      p["word_emb"], p["wqkv"], p["wo"], p["w1"], p["w2"],
      p["pk_h"], p["pk_w"], p["pk_crf"])
    return loss[0, 0]


# ---------------------------------- main --------------------------------------
if __name__ == "__main__":
    key = jax.random.PRNGKey(0)
    pkey, ikey, lkey = jax.random.split(key, 3)

    params = init_params(pkey)
    input_ids = jax.random.randint(ikey, (B, S), 0, VOCAB, dtype=jnp.int32)
    # CRF requires the first timestep to be unmasked; second row has 2 padded positions.
    attention_mask = jnp.array([[1, 1, 1, 1, 1, 1, 1, 1],
                                [1, 1, 1, 1, 1, 1, 0, 0]], jnp.float32)
    labels = jax.random.randint(lkey, (B, S), 0, NTAG, dtype=jnp.int32)

    loss = jax.jit(bert_for_ner_loss)(params, input_ids, attention_mask, labels)
    jax.block_until_ready(loss)
    assert loss.shape == () and jnp.isfinite(loss)
    print("KERNEL_OK")
</pallas_src>

<mosaic_0001>
module attributes {stable_mosaic.version = 11 : i64} {
  func.func @_bert_ner_fused_kernel(%arg0: memref<16x1xi32, #tpu.memory_space<vmem>>, %arg1: memref<16x1xi32, #tpu.memory_space<vmem>>, %arg2: memref<2x8xf32, #tpu.memory_space<vmem>>, %arg3: memref<100x32xf32, #tpu.memory_space<vmem>>, %arg4: memref<2x32x96xbf16, #tpu.memory_space<vmem>>, %arg5: memref<2x32x32xbf16, #tpu.memory_space<vmem>>, %arg6: memref<2x32x64xbf16, #tpu.memory_space<vmem>>, %arg7: memref<2x64x32xbf16, #tpu.memory_space<vmem>>, %arg8: memref<28x32xf32, #tpu.memory_space<vmem>>, %arg9: memref<4x96xf32, #tpu.memory_space<vmem>>, %arg10: memref<8x5xf32, #tpu.memory_space<vmem>>, %arg11: memref<1x1xf32, #tpu.memory_space<vmem>>) attributes {dimension_semantics = [], scalar_prefetch = 0 : i64, scratch_operands = 0 : i64, tpu.core_type = #tpu.core_type<tc>} {
    %c0 = arith.constant 0 : index
    %c0_0 = arith.constant 0 : index
    %0 = vector.load %arg8[%c0, %c0_0] : memref<28x32xf32, #tpu.memory_space<vmem>>, vector<28x32xf32>
    %c0_1 = arith.constant 0 : index
    %c0_2 = arith.constant 0 : index
    %1 = vector.load %arg9[%c0_1, %c0_2] : memref<4x96xf32, #tpu.memory_space<vmem>>, vector<4x96xf32>
    %c0_3 = arith.constant 0 : index
    %c0_4 = arith.constant 0 : index
    %2 = vector.load %arg10[%c0_3, %c0_4] : memref<8x5xf32, #tpu.memory_space<vmem>>, vector<8x5xf32>
    %c0_5 = arith.constant 0 : index
    %c0_6 = arith.constant 0 : index
    %3 = vector.load %arg2[%c0_5, %c0_6] : memref<2x8xf32, #tpu.memory_space<vmem>>, vector<2x8xf32>
    %c0_7 = arith.constant 0 : index
    %c0_8 = arith.constant 0 : index
    %4 = vector.load %arg0[%c0_7, %c0_8] : memref<16x1xi32, #tpu.memory_space<vmem>>, vector<16x1xi32>
    %5 = tpu.iota {dimensions = array<i32: 1>} : vector<16x100xi32>
    %6 = vector.broadcast %4 : vector<16x1xi32> to vector<16x100xi32>
    %7 = arith.cmpi eq, %6, %5 : vector<16x100xi32>
    %8 = arith.extui %7 : vector<16x100xi1> to vector<16x100xi32>
    %9 = arith.sitofp %8 : vector<16x100xi32> to vector<16x100xf32>
    %c0_9 = arith.constant 0 : index
    %c0_10 = arith.constant 0 : index
    %10 = vector.load %arg3[%c0_9, %c0_10] : memref<100x32xf32, #tpu.memory_space<vmem>>, vector<100x32xf32>
    %cst = arith.constant dense<0.000000e+00> : vector<16x32xf32>
    %11 = tpu.matmul %9, %10, %cst {dimension_numbers = #tpu.dot_dimension_numbers<[1], [0], [0], [1], [0, 0, 1, 1], [], []>} : vector<16x100xf32>, vector<100x32xf32>, vector<16x32xf32> -> vector<16x32xf32>
    %12 = vector.extract_strided_slice %0 {offsets = [3, 0], sizes = [8, 32], strides = [1, 1]} : vector<28x32xf32> to vector<8x32xf32>
    %13 = tpu.concatenate %12, %12 in 0 : vector<8x32xf32>, vector<8x32xf32> -> vector<16x32xf32>
    %14 = arith.addf %11, %13 : vector<16x32xf32>
    %15 = vector.extract_strided_slice %0 {offsets = [2, 0], sizes = [1, 32], strides = [1, 1]} : vector<28x32xf32> to vector<1x32xf32>
    %16 = vector.broadcast %15 : vector<1x32xf32> to vector<16x32xf32>
    %17 = arith.addf %14, %16 : vector<16x32xf32>
    %18 = vector.extract_strided_slice %0 {offsets = [0, 0], sizes = [1, 32], strides = [1, 1]} : vector<28x32xf32> to vector<1x32xf32>
    %19 = vector.extract_strided_slice %0 {offsets = [1, 0], sizes = [1, 32], strides = [1, 1]} : vector<28x32xf32> to vector<1x32xf32>
    %cst_11 = arith.constant dense<0.000000e+00> : vector<16xf32>
    %20 = vector.multi_reduction <add>, %17, %cst_11 [1] : vector<16x32xf32> to vector<16xf32>
    %21 = vector.shape_cast %20 : vector<16xf32> to vector<16x1xf32>
    %cst_12 = arith.constant 3.200000e+01 : f32
    %22 = vector.broadcast %cst_12 : f32 to vector<16x1xf32>
    %23 = arith.divf %21, %22 : vector<16x1xf32>
    %24 = vector.broadcast %23 : vector<16x1xf32> to vector<16x32xf32>
    %25 = arith.subf %17, %24 : vector<16x32xf32>
    %26 = arith.mulf %25, %25 : vector<16x32xf32>
    %cst_13 = arith.constant dense<0.000000e+00> : vector<16xf32>
    %27 = vector.multi_reduction <add>, %26, %cst_13 [1] : vector<16x32xf32> to vector<16xf32>
    %28 = vector.shape_cast %27 : vector<16xf32> to vector<16x1xf32>
    %cst_14 = arith.constant 3.200000e+01 : f32
    %29 = vector.broadcast %cst_14 : f32 to vector<16x1xf32>
    %30 = arith.divf %28, %29 : vector<16x1xf32>
    %31 = vector.broadcast %23 : vector<16x1xf32> to vector<16x32xf32>
    %32 = arith.subf %17, %31 : vector<16x32xf32>
    %cst_15 = arith.constant 9.99999996E-13 : f32
    %33 = vector.broadcast %cst_15 : f32 to vector<16x1xf32>
    %34 = arith.addf %30, %33 : vector<16x1xf32>
    %35 = math.rsqrt %34 : vector<16x1xf32>
    %36 = vector.broadcast %35 : vector<16x1xf32> to vector<16x32xf32>
    %37 = arith.mulf %32, %36 : vector<16x32xf32>
    %38 = vector.broadcast %18 : vector<1x32xf32> to vector<16x32xf32>
    %39 = arith.mulf %37, %38 : vector<16x32xf32>
    %40 = vector.broadcast %19 : vector<1x32xf32> to vector<16x32xf32>
    %41 = arith.addf %39, %40 : vector<16x32xf32>
    %cst_16 = arith.constant 1.000000e+00 : f32
    %42 = vector.broadcast %cst_16 : f32 to vector<2x8xf32>
    %43 = arith.subf %42, %3 : vector<2x8xf32>
    %cst_17 = arith.constant -1.000000e+09 : f32
    %44 = vector.broadcast %cst_17 : f32 to vector<2x8xf32>
    %45 = arith.mulf %43, %44 : vector<2x8xf32>
    %cst_18 = arith.constant -1.000000e+09 : f32
    %46 = vector.broadcast %cst_18 : f32 to vector<8x8xf32>
    %47 = vector.extract_strided_slice %45 {offsets = [0, 0], sizes = [1, 8], strides = [1, 1]} : vector<2x8xf32> to vector<1x8xf32>
    %48 = vector.shape_cast %47 : vector<1x8xf32> to vector<1x8xf32>
    %49 = vector.broadcast %48 : vector<1x8xf32> to vector<8x8xf32>
    %50 = tpu.concatenate %49, %46 in 1 : vector<8x8xf32>, vector<8x8xf32> -> vector<8x16xf32>
    %51 = vector.extract_strided_slice %45 {offsets = [1, 0], sizes = [1, 8], strides = [1, 1]} : vector<2x8xf32> to vector<1x8xf32>
    %52 = vector.shape_cast %51 : vector<1x8xf32> to vector<1x8xf32>
    %53 = vector.broadcast %52 : vector<1x8xf32> to vector<8x8xf32>
    %54 = tpu.concatenate %46, %53 in 1 : vector<8x8xf32>, vector<8x8xf32> -> vector<8x16xf32>
    %55 = tpu.concatenate %50, %54 in 0 : vector<8x16xf32>, vector<8x16xf32> -> vector<16x16xf32>
    %56 = arith.truncf %41 : vector<16x32xf32> to vector<16x32xbf16>
    %c0_19 = arith.constant 0 : index
    %c0_20 = arith.constant 0 : index
    %c0_21 = arith.constant 0 : index
    %57 = vector.load %arg4[%c0_19, %c0_20, %c0_21] : memref<2x32x96xbf16, #tpu.memory_space<vmem>>, vector<1x32x96xbf16>
    %58 = vector.shape_cast %57 : vector<1x32x96xbf16> to vector<32x96xbf16>
    %cst_22 = arith.constant dense<0.000000e+00> : vector<16x96xf32>
    %59 = tpu.matmul %56, %58, %cst_22 {dimension_numbers = #tpu.dot_dimension_numbers<[1], [0], [0], [1], [0, 0, 1, 1], [], []>} : vector<16x32xbf16>, vector<32x96xbf16>, vector<16x96xf32> -> vector<16x96xf32>
    %60 = vector.extract_strided_slice %1 {offsets = [0, 0], sizes = [1, 96], strides = [1, 1]} : vector<4x96xf32> to vector<1x96xf32>
    %61 = vector.broadcast %60 : vector<1x96xf32> to vector<16x96xf32>
    %62 = arith.addf %59, %61 : vector<16x96xf32>
    %63 = vector.extract_strided_slice %62 {offsets = [0, 0], sizes = [16, 32], strides = [1, 1]} : vector<16x96xf32> to vector<16x32xf32>
    %64 = vector.extract_strided_slice %62 {offsets = [0, 32], sizes = [16, 32], strides = [1, 1]} : vector<16x96xf32> to vector<16x32xf32>
    %65 = vector.extract_strided_slice %62 {offsets = [0, 64], sizes = [16, 32], strides = [1, 1]} : vector<16x96xf32> to vector<16x32xf32>
    %66 = vector.extract_strided_slice %63 {offsets = [0, 0], sizes = [16, 8], strides = [1, 1]} : vector<16x32xf32> to vector<16x8xf32>
    %67 = vector.extract_strided_slice %64 {offsets = [0, 0], sizes = [16, 8], strides = [1, 1]} : vector<16x32xf32> to vector<16x8xf32>
    %cst_23 = arith.constant dense<0.000000e+00> : vector<16x16xf32>
    %68 = tpu.matmul %66, %67, %cst_23 {dimension_numbers = #tpu.dot_dimension_numbers<[1], [1], [0], [0], [0, 0, 1, 0], [], []>} : vector<16x8xf32>, vector<16x8xf32>, vector<16x16xf32> -> vector<16x16xf32>
    %cst_24 = arith.constant 0.353553385 : f32
    %69 = vector.broadcast %cst_24 : f32 to vector<16x16xf32>
    %70 = arith.mulf %68, %69 : vector<16x16xf32>
    %71 = arith.addf %70, %55 : vector<16x16xf32>
    %cst_25 = arith.constant dense<0xFF800000> : vector<16xf32>
    %72 = vector.multi_reduction <maximumf>, %71, %cst_25 [1] : vector<16x16xf32> to vector<16xf32>
    %73 = vector.shape_cast %72 : vector<16xf32> to vector<16x1xf32>
    %74 = vector.broadcast %73 : vector<16x1xf32> to vector<16x16xf32>
    %75 = arith.subf %71, %74 : vector<16x16xf32>
    %76 = math.exp %75 : vector<16x16xf32>
    %cst_26 = arith.constant dense<0.000000e+00> : vector<16xf32>
    %77 = vector.multi_reduction <add>, %76, %cst_26 [1] : vector<16x16xf32> to vector<16xf32>
    %78 = vector.shape_cast %77 : vector<16xf32> to vector<16x1xf32>
    %79 = vector.broadcast %78 : vector<16x1xf32> to vector<16x16xf32>
    %80 = arith.divf %76, %79 : vector<16x16xf32>
    %81 = vector.extract_strided_slice %65 {offsets = [0, 0], sizes = [16, 8], strides = [1, 1]} : vector<16x32xf32> to vector<16x8xf32>
    %cst_27 = arith.constant dense<0.000000e+00> : vector<16x8xf32>
    %82 = tpu.matmul %80, %81, %cst_27 {dimension_numbers = #tpu.dot_dimension_numbers<[1], [0], [0], [1], [0, 0, 1, 1], [], []>} : vector<16x16xf32>, vector<16x8xf32>, vector<16x8xf32> -> vector<16x8xf32>
    %83 = vector.extract_strided_slice %63 {offsets = [0, 8], sizes = [16, 8], strides = [1, 1]} : vector<16x32xf32> to vector<16x8xf32>
    %84 = vector.extract_strided_slice %64 {offsets = [0, 8], sizes = [16, 8], strides = [1, 1]} : vector<16x32xf32> to vector<16x8xf32>
    %cst_28 = arith.constant dense<0.000000e+00> : vector<16x16xf32>
    %85 = tpu.matmul %83, %84, %cst_28 {dimension_numbers = #tpu.dot_dimension_numbers<[1], [1], [0], [0], [0, 0, 1, 0], [], []>} : vector<16x8xf32>, vector<16x8xf32>, vector<16x16xf32> -> vector<16x16xf32>
    %cst_29 = arith.constant 0.353553385 : f32
    %86 = vector.broadcast %cst_29 : f32 to vector<16x16xf32>
    %87 = arith.mulf %85, %86 : vector<16x16xf32>
    %88 = arith.addf %87, %55 : vector<16x16xf32>
    %cst_30 = arith.constant dense<0xFF800000> : vector<16xf32>
    %89 = vector.multi_reduction <maximumf>, %88, %cst_30 [1] : vector<16x16xf32> to vector<16xf32>
    %90 = vector.shape_cast %89 : vector<16xf32> to vector<16x1xf32>
    %91 = vector.broadcast %90 : vector<16x1xf32> to vector<16x16xf32>
    %92 = arith.subf %88, %91 : vector<16x16xf32>
    %93 = math.exp %92 : vector<16x16xf32>
    %cst_31 = arith.constant dense<0.000000e+00> : vector<16xf32>
    %94 = vector.multi_reduction <add>, %93, %cst_31 [1] : vector<16x16xf32> to vector<16xf32>
    %95 = vector.shape_cast %94 : vector<16xf32> to vector<16x1xf32>
    %96 = vector.broadcast %95 : vector<16x1xf32> to vector<16x16xf32>
    %97 = arith.divf %93, %96 : vector<16x16xf32>
    %98 = vector.extract_strided_slice %65 {offsets = [0, 8], sizes = [16, 8], strides = [1, 1]} : vector<16x32xf32> to vector<16x8xf32>
    %cst_32 = arith.constant dense<0.000000e+00> : vector<16x8xf32>
    %99 = tpu.matmul %97, %98, %cst_32 {dimension_numbers = #tpu.dot_dimension_numbers<[1], [0], [0], [1], [0, 0, 1, 1], [], []>} : vector<16x16xf32>, vector<16x8xf32>, vector<16x8xf32> -> vector<16x8xf32>
    %100 = vector.extract_strided_slice %63 {offsets = [0, 16], sizes = [16, 8], strides = [1, 1]} : vector<16x32xf32> to vector<16x8xf32>
    %101 = vector.extract_strided_slice %64 {offsets = [0, 16], sizes = [16, 8], strides = [1, 1]} : vector<16x32xf32> to vector<16x8xf32>
    %cst_33 = arith.constant dense<0.000000e+00> : vector<16x16xf32>
    %102 = tpu.matmul %100, %101, %cst_33 {dimension_numbers = #tpu.dot_dimension_numbers<[1], [1], [0], [0], [0, 0, 1, 0], [], []>} : vector<16x8xf32>, vector<16x8xf32>, vector<16x16xf32> -> vector<16x16xf32>
    %cst_34 = arith.constant 0.353553385 : f32
    %103 = vector.broadcast %cst_34 : f32 to vector<16x16xf32>
    %104 = arith.mulf %102, %103 : vector<16x16xf32>
    %105 = arith.addf %104, %55 : vector<16x16xf32>
    %cst_35 = arith.constant dense<0xFF800000> : vector<16xf32>
    %106 = vector.multi_reduction <maximumf>, %105, %cst_35 [1] : vector<16x16xf32> to vector<16xf32>
    %107 = vector.shape_cast %106 : vector<16xf32> to vector<16x1xf32>
    %108 = vector.broadcast %107 : vector<16x1xf32> to vector<16x16xf32>
    %109 = arith.subf %105, %108 : vector<16x16xf32>
    %110 = math.exp %109 : vector<16x16xf32>
    %cst_36 = arith.constant dense<0.000000e+00> : vector<16xf32>
    %111 = vector.multi_reduction <add>, %110, %cst_36 [1] : vector<16x16xf32> to vector<16xf32>
    %112 = vector.shape_cast %111 : vector<16xf32> to vector<16x1xf32>
    %113 = vector.broadcast %112 : vector<16x1xf32> to vector<16x16xf32>
    %114 = arith.divf %110, %113 : vector<16x16xf32>
    %115 = vector.extract_strided_slice %65 {offsets = [0, 16], sizes = [16, 8], strides = [1, 1]} : vector<16x32xf32> to vector<16x8xf32>
    %cst_37 = arith.constant dense<0.000000e+00> : vector<16x8xf32>
    %116 = tpu.matmul %114, %115, %cst_37 {dimension_numbers = #tpu.dot_dimension_numbers<[1], [0], [0], [1], [0, 0, 1, 1], [], []>} : vector<16x16xf32>, vector<16x8xf32>, vector<16x8xf32> -> vector<16x8xf32>
    %117 = vector.extract_strided_slice %63 {offsets = [0, 24], sizes = [16, 8], strides = [1, 1]} : vector<16x32xf32> to vector<16x8xf32>
    %118 = vector.extract_strided_slice %64 {offsets = [0, 24], sizes = [16, 8], strides = [1, 1]} : vector<16x32xf32> to vector<16x8xf32>
    %cst_38 = arith.constant dense<0.000000e+00> : vector<16x16xf32>
    %119 = tpu.matmul %117, %118, %cst_38 {dimension_numbers = #tpu.dot_dimension_numbers<[1], [1], [0], [0], [0, 0, 1, 0], [], []>} : vector<16x8xf32>, vector<16x8xf32>, vector<16x16xf32> -> vector<16x16xf32>
    %cst_39 = arith.constant 0.353553385 : f32
    %120 = vector.broadcast %cst_39 : f32 to vector<16x16xf32>
    %121 = arith.mulf %119, %120 : vector<16x16xf32>
    %122 = arith.addf %121, %55 : vector<16x16xf32>
    %cst_40 = arith.constant dense<0xFF800000> : vector<16xf32>
    %123 = vector.multi_reduction <maximumf>, %122, %cst_40 [1] : vector<16x16xf32> to vector<16xf32>
    %124 = vector.shape_cast %123 : vector<16xf32> to vector<16x1xf32>
    %125 = vector.broadcast %124 : vector<16x1xf32> to vector<16x16xf32>
    %126 = arith.subf %122, %125 : vector<16x16xf32>
    %127 = math.exp %126 : vector<16x16xf32>
    %cst_41 = arith.constant dense<0.000000e+00> : vector<16xf32>
    %128 = vector.multi_reduction <add>, %127, %cst_41 [1] : vector<16x16xf32> to vector<16xf32>
    %129 = vector.shape_cast %128 : vector<16xf32> to vector<16x1xf32>
    %130 = vector.broadcast %129 : vector<16x1xf32> to vector<16x16xf32>
    %131 = arith.divf %127, %130 : vector<16x16xf32>
    %132 = vector.extract_strided_slice %65 {offsets = [0, 24], sizes = [16, 8], strides = [1, 1]} : vector<16x32xf32> to vector<16x8xf32>
    %cst_42 = arith.constant dense<0.000000e+00> : vector<16x8xf32>
    %133 = tpu.matmul %131, %132, %cst_42 {dimension_numbers = #tpu.dot_dimension_numbers<[1], [0], [0], [1], [0, 0, 1, 1], [], []>} : vector<16x16xf32>, vector<16x8xf32>, vector<16x8xf32> -> vector<16x8xf32>
    %134 = tpu.concatenate %82, %99, %116, %133 in 1 : vector<16x8xf32>, vector<16x8xf32>, vector<16x8xf32>, vector<16x8xf32> -> vector<16x32xf32>
    %135 = arith.truncf %134 : vector<16x32xf32> to vector<16x32xbf16>
    %c0_43 = arith.constant 0 : index
    %c0_44 = arith.constant 0 : index
    %c0_45 = arith.constant 0 : index
    %136 = vector.load %arg5[%c0_43, %c0_44, %c0_45] : memref<2x32x32xbf16, #tpu.memory_space<vmem>>, vector<1x32x32xbf16>
    %137 = vector.shape_cast %136 : vector<1x32x32xbf16> to vector<32x32xbf16>
    %cst_46 = arith.constant dense<0.000000e+00> : vector<16x32xf32>
    %138 = tpu.matmul %135, %137, %cst_46 {dimension_numbers = #tpu.dot_dimension_numbers<[1], [0], [0], [1], [0, 0, 1, 1], [], []>} : vector<16x32xbf16>, vector<32x32xbf16>, vector<16x32xf32> -> vector<16x32xf32>
    %139 = vector.extract_strided_slice %0 {offsets = [20, 0], sizes = [1, 32], strides = [1, 1]} : vector<28x32xf32> to vector<1x32xf32>
    %140 = vector.broadcast %139 : vector<1x32xf32> to vector<16x32xf32>
    %141 = arith.addf %138, %140 : vector<16x32xf32>
    %142 = arith.addf %41, %141 : vector<16x32xf32>
    %143 = vector.extract_strided_slice %0 {offsets = [16, 0], sizes = [1, 32], strides = [1, 1]} : vector<28x32xf32> to vector<1x32xf32>
    %144 = vector.extract_strided_slice %0 {offsets = [17, 0], sizes = [1, 32], strides = [1, 1]} : vector<28x32xf32> to vector<1x32xf32>
    %cst_47 = arith.constant dense<0.000000e+00> : vector<16xf32>
    %145 = vector.multi_reduction <add>, %142, %cst_47 [1] : vector<16x32xf32> to vector<16xf32>
    %146 = vector.shape_cast %145 : vector<16xf32> to vector<16x1xf32>
    %cst_48 = arith.constant 3.200000e+01 : f32
    %147 = vector.broadcast %cst_48 : f32 to vector<16x1xf32>
    %148 = arith.divf %146, %147 : vector<16x1xf32>
    %149 = vector.broadcast %148 : vector<16x1xf32> to vector<16x32xf32>
    %150 = arith.subf %142, %149 : vector<16x32xf32>
    %151 = arith.mulf %150, %150 : vector<16x32xf32>
    %cst_49 = arith.constant dense<0.000000e+00> : vector<16xf32>
    %152 = vector.multi_reduction <add>, %151, %cst_49 [1] : vector<16x32xf32> to vector<16xf32>
    %153 = vector.shape_cast %152 : vector<16xf32> to vector<16x1xf32>
    %cst_50 = arith.constant 3.200000e+01 : f32
    %154 = vector.broadcast %cst_50 : f32 to vector<16x1xf32>
    %155 = arith.divf %153, %154 : vector<16x1xf32>
    %156 = vector.broadcast %148 : vector<16x1xf32> to vector<16x32xf32>
    %157 = arith.subf %142, %156 : vector<16x32xf32>
    %cst_51 = arith.constant 9.99999996E-13 : f32
    %158 = vector.broadcast %cst_51 : f32 to vector<16x1xf32>
    %159 = arith.addf %155, %158 : vector<16x1xf32>
    %160 = math.rsqrt %159 : vector<16x1xf32>
    %161 = vector.broadcast %160 : vector<16x1xf32> to vector<16x32xf32>
    %162 = arith.mulf %157, %161 : vector<16x32xf32>
    %163 = vector.broadcast %143 : vector<1x32xf32> to vector<16x32xf32>
    %164 = arith.mulf %162, %163 : vector<16x32xf32>
    %165 = vector.broadcast %144 : vector<1x32xf32> to vector<16x32xf32>
    %166 = arith.addf %164, %165 : vector<16x32xf32>
    %167 = arith.truncf %166 : vector<16x32xf32> to vector<16x32xbf16>
    %c0_52 = arith.constant 0 : index
    %c0_53 = arith.constant 0 : index
    %c0_54 = arith.constant 0 : index
    %168 = vector.load %arg6[%c0_52, %c0_53, %c0_54] : memref<2x32x64xbf16, #tpu.memory_space<vmem>>, vector<1x32x64xbf16>
    %169 = vector.shape_cast %168 : vector<1x32x64xbf16> to vector<32x64xbf16>
    %cst_55 = arith.constant dense<0.000000e+00> : vector<16x64xf32>
    %170 = tpu.matmul %167, %169, %cst_55 {dimension_numbers = #tpu.dot_dimension_numbers<[1], [0], [0], [1], [0, 0, 1, 1], [], []>} : vector<16x32xbf16>, vector<32x64xbf16>, vector<16x64xf32> -> vector<16x64xf32>
    %171 = vector.extract_strided_slice %1 {offsets = [2, 0], sizes = [1, 64], strides = [1, 1]} : vector<4x96xf32> to vector<1x64xf32>
    %172 = vector.broadcast %171 : vector<1x64xf32> to vector<16x64xf32>
    %173 = arith.addf %170, %172 : vector<16x64xf32>
    %174 = arith.mulf %173, %173 : vector<16x64xf32>
    %175 = arith.mulf %173, %174 : vector<16x64xf32>
    %cst_56 = arith.constant 4.471500e-02 : f32
    %176 = vector.broadcast %cst_56 : f32 to vector<16x64xf32>
    %177 = arith.mulf %176, %175 : vector<16x64xf32>
    %178 = arith.addf %173, %177 : vector<16x64xf32>
    %cst_57 = arith.constant 0.797884583 : f32
    %179 = vector.broadcast %cst_57 : f32 to vector<16x64xf32>
    %180 = arith.mulf %179, %178 : vector<16x64xf32>
    %181 = math.tanh %180 : vector<16x64xf32>
    %cst_58 = arith.constant 1.000000e+00 : f32
    %182 = vector.broadcast %cst_58 : f32 to vector<16x64xf32>
    %183 = arith.addf %182, %181 : vector<16x64xf32>
    %cst_59 = arith.constant 5.000000e-01 : f32
    %184 = vector.broadcast %cst_59 : f32 to vector<16x64xf32>
    %185 = arith.mulf %184, %183 : vector<16x64xf32>
    %186 = arith.mulf %173, %185 : vector<16x64xf32>
    %187 = arith.truncf %186 : vector<16x64xf32> to vector<16x64xbf16>
    %c0_60 = arith.constant 0 : index
    %c0_61 = arith.constant 0 : index
    %c0_62 = arith.constant 0 : index
    %188 = vector.load %arg7[%c0_60, %c0_61, %c0_62] : memref<2x64x32xbf16, #tpu.memory_space<vmem>>, vector<1x64x32xbf16>
    %189 = vector.shape_cast %188 : vector<1x64x32xbf16> to vector<64x32xbf16>
    %cst_63 = arith.constant dense<0.000000e+00> : vector<16x32xf32>
    %190 = tpu.matmul %187, %189, %cst_63 {dimension_numbers = #tpu.dot_dimension_numbers<[1], [0], [0], [1], [0, 0, 1, 1], [], []>} : vector<16x64xbf16>, vector<64x32xbf16>, vector<16x32xf32> -> vector<16x32xf32>
    %191 = vector.extract_strided_slice %0 {offsets = [21, 0], sizes = [1, 32], strides = [1, 1]} : vector<28x32xf32> to vector<1x32xf32>
    %192 = vector.broadcast %191 : vector<1x32xf32> to vector<16x32xf32>
    %193 = arith.addf %190, %192 : vector<16x32xf32>
    %194 = arith.addf %166, %193 : vector<16x32xf32>
    %195 = vector.extract_strided_slice %0 {offsets = [18, 0], sizes = [1, 32], strides = [1, 1]} : vector<28x32xf32> to vector<1x32xf32>
    %196 = vector.extract_strided_slice %0 {offsets = [19, 0], sizes = [1, 32], strides = [1, 1]} : vector<28x32xf32> to vector<1x32xf32>
    %cst_64 = arith.constant dense<0.000000e+00> : vector<16xf32>
    %197 = vector.multi_reduction <add>, %194, %cst_64 [1] : vector<16x32xf32> to vector<16xf32>
    %198 = vector.shape_cast %197 : vector<16xf32> to vector<16x1xf32>
    %cst_65 = arith.constant 3.200000e+01 : f32
    %199 = vector.broadcast %cst_65 : f32 to vector<16x1xf32>
    %200 = arith.divf %198, %199 : vector<16x1xf32>
    %201 = vector.broadcast %200 : vector<16x1xf32> to vector<16x32xf32>
    %202 = arith.subf %194, %201 : vector<16x32xf32>
    %203 = arith.mulf %202, %202 : vector<16x32xf32>
    %cst_66 = arith.constant dense<0.000000e+00> : vector<16xf32>
    %204 = vector.multi_reduction <add>, %203, %cst_66 [1] : vector<16x32xf32> to vector<16xf32>
    %205 = vector.shape_cast %204 : vector<16xf32> to vector<16x1xf32>
    %cst_67 = arith.constant 3.200000e+01 : f32
    %206 = vector.broadcast %cst_67 : f32 to vector<16x1xf32>
    %207 = arith.divf %205, %206 : vector<16x1xf32>
    %208 = vector.broadcast %200 : vector<16x1xf32> to vector<16x32xf32>
    %209 = arith.subf %194, %208 : vector<16x32xf32>
    %cst_68 = arith.constant 9.99999996E-13 : f32
    %210 = vector.broadcast %cst_68 : f32 to vector<16x1xf32>
    %211 = arith.addf %207, %210 : vector<16x1xf32>
    %212 = math.rsqrt %211 : vector<16x1xf32>
    %213 = vector.broadcast %212 : vector<16x1xf32> to vector<16x32xf32>
    %214 = arith.mulf %209, %213 : vector<16x32xf32>
    %215 = vector.broadcast %195 : vector<1x32xf32> to vector<16x32xf32>
    %216 = arith.mulf %214, %215 : vector<16x32xf32>
    %217 = vector.broadcast %196 : vector<1x32xf32> to vector<16x32xf32>
    %218 = arith.addf %216, %217 : vector<16x32xf32>
    %219 = arith.truncf %218 : vector<16x32xf32> to vector<16x32xbf16>
    %c1 = arith.constant 1 : index
    %c0_69 = arith.constant 0 : index
    %c0_70 = arith.constant 0 : index
    %220 = vector.load %arg4[%c1, %c0_69, %c0_70] : memref<2x32x96xbf16, #tpu.memory_space<vmem>>, vector<1x32x96xbf16>
    %221 = vector.shape_cast %220 : vector<1x32x96xbf16> to vector<32x96xbf16>
    %cst_71 = arith.constant dense<0.000000e+00> : vector<16x96xf32>
    %222 = tpu.matmul %219, %221, %cst_71 {dimension_numbers = #tpu.dot_dimension_numbers<[1], [0], [0], [1], [0, 0, 1, 1], [], []>} : vector<16x32xbf16>, vector<32x96xbf16>, vector<16x96xf32> -> vector<16x96xf32>
    %223 = vector.extract_strided_slice %1 {offsets = [1, 0], sizes = [1, 96], strides = [1, 1]} : vector<4x96xf32> to vector<1x96xf32>
    %224 = vector.broadcast %223 : vector<1x96xf32> to vector<16x96xf32>
    %225 = arith.addf %222, %224 : vector<16x96xf32>
    %226 = vector.extract_strided_slice %225 {offsets = [0, 0], sizes = [16, 32], strides = [1, 1]} : vector<16x96xf32> to vector<16x32xf32>
    %227 = vector.extract_strided_slice %225 {offsets = [0, 32], sizes = [16, 32], strides = [1, 1]} : vector<16x96xf32> to vector<16x32xf32>
    %228 = vector.extract_strided_slice %225 {offsets = [0, 64], sizes = [16, 32], strides = [1, 1]} : vector<16x96xf32> to vector<16x32xf32>
    %229 = vector.extract_strided_slice %226 {offsets = [0, 0], sizes = [16, 8], strides = [1, 1]} : vector<16x32xf32> to vector<16x8xf32>
    %230 = vector.extract_strided_slice %227 {offsets = [0, 0], sizes = [16, 8], strides = [1, 1]} : vector<16x32xf32> to vector<16x8xf32>
    %cst_72 = arith.constant dense<0.000000e+00> : vector<16x16xf32>
    %231 = tpu.matmul %229, %230, %cst_72 {dimension_numbers = #tpu.dot_dimension_numbers<[1], [1], [0], [0], [0, 0, 1, 0], [], []>} : vector<16x8xf32>, vector<16x8xf32>, vector<16x16xf32> -> vector<16x16xf32>
    %cst_73 = arith.constant 0.353553385 : f32
    %232 = vector.broadcast %cst_73 : f32 to vector<16x16xf32>
    %233 = arith.mulf %231, %232 : vector<16x16xf32>
    %234 = arith.addf %233, %55 : vector<16x16xf32>
    %cst_74 = arith.constant dense<0xFF800000> : vector<16xf32>
    %235 = vector.multi_reduction <maximumf>, %234, %cst_74 [1] : vector<16x16xf32> to vector<16xf32>
    %236 = vector.shape_cast %235 : vector<16xf32> to vector<16x1xf32>
    %237 = vector.broadcast %236 : vector<16x1xf32> to vector<16x16xf32>
    %238 = arith.subf %234, %237 : vector<16x16xf32>
    %239 = math.exp %238 : vector<16x16xf32>
    %cst_75 = arith.constant dense<0.000000e+00> : vector<16xf32>
    %240 = vector.multi_reduction <add>, %239, %cst_75 [1] : vector<16x16xf32> to vector<16xf32>
    %241 = vector.shape_cast %240 : vector<16xf32> to vector<16x1xf32>
    %242 = vector.broadcast %241 : vector<16x1xf32> to vector<16x16xf32>
    %243 = arith.divf %239, %242 : vector<16x16xf32>
    %244 = vector.extract_strided_slice %228 {offsets = [0, 0], sizes = [16, 8], strides = [1, 1]} : vector<16x32xf32> to vector<16x8xf32>
    %cst_76 = arith.constant dense<0.000000e+00> : vector<16x8xf32>
    %245 = tpu.matmul %243, %244, %cst_76 {dimension_numbers = #tpu.dot_dimension_numbers<[1], [0], [0], [1], [0, 0, 1, 1], [], []>} : vector<16x16xf32>, vector<16x8xf32>, vector<16x8xf32> -> vector<16x8xf32>
    %246 = vector.extract_strided_slice %226 {offsets = [0, 8], sizes = [16, 8], strides = [1, 1]} : vector<16x32xf32> to vector<16x8xf32>
    %247 = vector.extract_strided_slice %227 {offsets = [0, 8], sizes = [16, 8], strides = [1, 1]} : vector<16x32xf32> to vector<16x8xf32>
    %cst_77 = arith.constant dense<0.000000e+00> : vector<16x16xf32>
    %248 = tpu.matmul %246, %247, %cst_77 {dimension_numbers = #tpu.dot_dimension_numbers<[1], [1], [0], [0], [0, 0, 1, 0], [], []>} : vector<16x8xf32>, vector<16x8xf32>, vector<16x16xf32> -> vector<16x16xf32>
    %cst_78 = arith.constant 0.353553385 : f32
    %249 = vector.broadcast %cst_78 : f32 to vector<16x16xf32>
    %250 = arith.mulf %248, %249 : vector<16x16xf32>
    %251 = arith.addf %250, %55 : vector<16x16xf32>
    %cst_79 = arith.constant dense<0xFF800000> : vector<16xf32>
    %252 = vector.multi_reduction <maximumf>, %251, %cst_79 [1] : vector<16x16xf32> to vector<16xf32>
    %253 = vector.shape_cast %252 : vector<16xf32> to vector<16x1xf32>
    %254 = vector.broadcast %253 : vector<16x1xf32> to vector<16x16xf32>
    %255 = arith.subf %251, %254 : vector<16x16xf32>
    %256 = math.exp %255 : vector<16x16xf32>
    %cst_80 = arith.constant dense<0.000000e+00> : vector<16xf32>
    %257 = vector.multi_reduction <add>, %256, %cst_80 [1] : vector<16x16xf32> to vector<16xf32>
    %258 = vector.shape_cast %257 : vector<16xf32> to vector<16x1xf32>
    %259 = vector.broadcast %258 : vector<16x1xf32> to vector<16x16xf32>
    %260 = arith.divf %256, %259 : vector<16x16xf32>
    %261 = vector.extract_strided_slice %228 {offsets = [0, 8], sizes = [16, 8], strides = [1, 1]} : vector<16x32xf32> to vector<16x8xf32>
    %cst_81 = arith.constant dense<0.000000e+00> : vector<16x8xf32>
    %262 = tpu.matmul %260, %261, %cst_81 {dimension_numbers = #tpu.dot_dimension_numbers<[1], [0], [0], [1], [0, 0, 1, 1], [], []>} : vector<16x16xf32>, vector<16x8xf32>, vector<16x8xf32> -> vector<16x8xf32>
    %263 = vector.extract_strided_slice %226 {offsets = [0, 16], sizes = [16, 8], strides = [1, 1]} : vector<16x32xf32> to vector<16x8xf32>
    %264 = vector.extract_strided_slice %227 {offsets = [0, 16], sizes = [16, 8], strides = [1, 1]} : vector<16x32xf32> to vector<16x8xf32>
    %cst_82 = arith.constant dense<0.000000e+00> : vector<16x16xf32>
    %265 = tpu.matmul %263, %264, %cst_82 {dimension_numbers = #tpu.dot_dimension_numbers<[1], [1], [0], [0], [0, 0, 1, 0], [], []>} : vector<16x8xf32>, vector<16x8xf32>, vector<16x16xf32> -> vector<16x16xf32>
    %cst_83 = arith.constant 0.353553385 : f32
    %266 = vector.broadcast %cst_83 : f32 to vector<16x16xf32>
    %267 = arith.mulf %265, %266 : vector<16x16xf32>
    %268 = arith.addf %267, %55 : vector<16x16xf32>
    %cst_84 = arith.constant dense<0xFF800000> : vector<16xf32>
    %269 = vector.multi_reduction <maximumf>, %268, %cst_84 [1] : vector<16x16xf32> to vector<16xf32>
    %270 = vector.shape_cast %269 : vector<16xf32> to vector<16x1xf32>
    %271 = vector.broadcast %270 : vector<16x1xf32> to vector<16x16xf32>
    %272 = arith.subf %268, %271 : vector<16x16xf32>
    %273 = math.exp %272 : vector<16x16xf32>
    %cst_85 = arith.constant dense<0.000000e+00> : vector<16xf32>
    %274 = vector.multi_reduction <add>, %273, %cst_85 [1] : vector<16x16xf32> to vector<16xf32>
    %275 = vector.shape_cast %274 : vector<16xf32> to vector<16x1xf32>
    %276 = vector.broadcast %275 : vector<16x1xf32> to vector<16x16xf32>
    %277 = arith.divf %273, %276 : vector<16x16xf32>
    %278 = vector.extract_strided_slice %228 {offsets = [0, 16], sizes = [16, 8], strides = [1, 1]} : vector<16x32xf32> to vector<16x8xf32>
    %cst_86 = arith.constant dense<0.000000e+00> : vector<16x8xf32>
    %279 = tpu.matmul %277, %278, %cst_86 {dimension_numbers = #tpu.dot_dimension_numbers<[1], [0], [0], [1], [0, 0, 1, 1], [], []>} : vector<16x16xf32>, vector<16x8xf32>, vector<16x8xf32> -> vector<16x8xf32>
    %280 = vector.extract_strided_slice %226 {offsets = [0, 24], sizes = [16, 8], strides = [1, 1]} : vector<16x32xf32> to vector<16x8xf32>
    %281 = vector.extract_strided_slice %227 {offsets = [0, 24], sizes = [16, 8], strides = [1, 1]} : vector<16x32xf32> to vector<16x8xf32>
    %cst_87 = arith.constant dense<0.000000e+00> : vector<16x16xf32>
    %282 = tpu.matmul %280, %281, %cst_87 {dimension_numbers = #tpu.dot_dimension_numbers<[1], [1], [0], [0], [0, 0, 1, 0], [], []>} : vector<16x8xf32>, vector<16x8xf32>, vector<16x16xf32> -> vector<16x16xf32>
    %cst_88 = arith.constant 0.353553385 : f32
    %283 = vector.broadcast %cst_88 : f32 to vector<16x16xf32>
    %284 = arith.mulf %282, %283 : vector<16x16xf32>
    %285 = arith.addf %284, %55 : vector<16x16xf32>
    %cst_89 = arith.constant dense<0xFF800000> : vector<16xf32>
    %286 = vector.multi_reduction <maximumf>, %285, %cst_89 [1] : vector<16x16xf32> to vector<16xf32>
    %287 = vector.shape_cast %286 : vector<16xf32> to vector<16x1xf32>
    %288 = vector.broadcast %287 : vector<16x1xf32> to vector<16x16xf32>
    %289 = arith.subf %285, %288 : vector<16x16xf32>
    %290 = math.exp %289 : vector<16x16xf32>
    %cst_90 = arith.constant dense<0.000000e+00> : vector<16xf32>
    %291 = vector.multi_reduction <add>, %290, %cst_90 [1] : vector<16x16xf32> to vector<16xf32>
    %292 = vector.shape_cast %291 : vector<16xf32> to vector<16x1xf32>
    %293 = vector.broadcast %292 : vector<16x1xf32> to vector<16x16xf32>
    %294 = arith.divf %290, %293 : vector<16x16xf32>
    %295 = vector.extract_strided_slice %228 {offsets = [0, 24], sizes = [16, 8], strides = [1, 1]} : vector<16x32xf32> to vector<16x8xf32>
    %cst_91 = arith.constant dense<0.000000e+00> : vector<16x8xf32>
    %296 = tpu.matmul %294, %295, %cst_91 {dimension_numbers = #tpu.dot_dimension_numbers<[1], [0], [0], [1], [0, 0, 1, 1], [], []>} : vector<16x16xf32>, vector<16x8xf32>, vector<16x8xf32> -> vector<16x8xf32>
    %297 = tpu.concatenate %245, %262, %279, %296 in 1 : vector<16x8xf32>, vector<16x8xf32>, vector<16x8xf32>, vector<16x8xf32> -> vector<16x32xf32>
    %298 = arith.truncf %297 : vector<16x32xf32> to vector<16x32xbf16>
    %c1_92 = arith.constant 1 : index
    %c0_93 = arith.constant 0 : index
    %c0_94 = arith.constant 0 : index
    %299 = vector.load %arg5[%c1_92, %c0_93, %c0_94] : memref<2x32x32xbf16, #tpu.memory_space<vmem>>, vector<1x32x32xbf16>
    %300 = vector.shape_cast %299 : vector<1x32x32xbf16> to vector<32x32xbf16>
    %cst_95 = arith.constant dense<0.000000e+00> : vector<16x32xf32>
    %301 = tpu.matmul %298, %300, %cst_95 {dimension_numbers = #tpu.dot_dimension_numbers<[1], [0], [0], [1], [0, 0, 1, 1], [], []>} : vector<16x32xbf16>, vector<32x32xbf16>, vector<16x32xf32> -> vector<16x32xf32>
    %302 = vector.extract_strided_slice %0 {offsets = [26, 0], sizes = [1, 32], strides = [1, 1]} : vector<28x32xf32> to vector<1x32xf32>
    %303 = vector.broadcast %302 : vector<1x32xf32> to vector<16x32xf32>
    %304 = arith.addf %301, %303 : vector<16x32xf32>
    %305 = arith.addf %218, %304 : vector<16x32xf32>
    %306 = vector.extract_strided_slice %0 {offsets = [22, 0], sizes = [1, 32], strides = [1, 1]} : vector<28x32xf32> to vector<1x32xf32>
    %307 = vector.extract_strided_slice %0 {offsets = [23, 0], sizes = [1, 32], strides = [1, 1]} : vector<28x32xf32> to vector<1x32xf32>
    %cst_96 = arith.constant dense<0.000000e+00> : vector<16xf32>
    %308 = vector.multi_reduction <add>, %305, %cst_96 [1] : vector<16x32xf32> to vector<16xf32>
    %309 = vector.shape_cast %308 : vector<16xf32> to vector<16x1xf32>
    %cst_97 = arith.constant 3.200000e+01 : f32
    %310 = vector.broadcast %cst_97 : f32 to vector<16x1xf32>
    %311 = arith.divf %309, %310 : vector<16x1xf32>
    %312 = vector.broadcast %311 : vector<16x1xf32> to vector<16x32xf32>
    %313 = arith.subf %305, %312 : vector<16x32xf32>
    %314 = arith.mulf %313, %313 : vector<16x32xf32>
    %cst_98 = arith.constant dense<0.000000e+00> : vector<16xf32>
    %315 = vector.multi_reduction <add>, %314, %cst_98 [1] : vector<16x32xf32> to vector<16xf32>
    %316 = vector.shape_cast %315 : vector<16xf32> to vector<16x1xf32>
    %cst_99 = arith.constant 3.200000e+01 : f32
    %317 = vector.broadcast %cst_99 : f32 to vector<16x1xf32>
    %318 = arith.divf %316, %317 : vector<16x1xf32>
    %319 = vector.broadcast %311 : vector<16x1xf32> to vector<16x32xf32>
    %320 = arith.subf %305, %319 : vector<16x32xf32>
    %cst_100 = arith.constant 9.99999996E-13 : f32
    %321 = vector.broadcast %cst_100 : f32 to vector<16x1xf32>
    %322 = arith.addf %318, %321 : vector<16x1xf32>
    %323 = math.rsqrt %322 : vector<16x1xf32>
    %324 = vector.broadcast %323 : vector<16x1xf32> to vector<16x32xf32>
    %325 = arith.mulf %320, %324 : vector<16x32xf32>
    %326 = vector.broadcast %306 : vector<1x32xf32> to vector<16x32xf32>
    %327 = arith.mulf %325, %326 : vector<16x32xf32>
    %328 = vector.broadcast %307 : vector<1x32xf32> to vector<16x32xf32>
    %329 = arith.addf %327, %328 : vector<16x32xf32>
    %330 = arith.truncf %329 : vector<16x32xf32> to vector<16x32xbf16>
    %c1_101 = arith.constant 1 : index
    %c0_102 = arith.constant 0 : index
    %c0_103 = arith.constant 0 : index
    %331 = vector.load %arg6[%c1_101, %c0_102, %c0_103] : memref<2x32x64xbf16, #tpu.memory_space<vmem>>, vector<1x32x64xbf16>
    %332 = vector.shape_cast %331 : vector<1x32x64xbf16> to vector<32x64xbf16>
    %cst_104 = arith.constant dense<0.000000e+00> : vector<16x64xf32>
    %333 = tpu.matmul %330, %332, %cst_104 {dimension_numbers = #tpu.dot_dimension_numbers<[1], [0], [0], [1], [0, 0, 1, 1], [], []>} : vector<16x32xbf16>, vector<32x64xbf16>, vector<16x64xf32> -> vector<16x64xf32>
    %334 = vector.extract_strided_slice %1 {offsets = [3, 0], sizes = [1, 64], strides = [1, 1]} : vector<4x96xf32> to vector<1x64xf32>
    %335 = vector.broadcast %334 : vector<1x64xf32> to vector<16x64xf32>
    %336 = arith.addf %333, %335 : vector<16x64xf32>
    %337 = arith.mulf %336, %336 : vector<16x64xf32>
    %338 = arith.mulf %336, %337 : vector<16x64xf32>
    %cst_105 = arith.constant 4.471500e-02 : f32
    %339 = vector.broadcast %cst_105 : f32 to vector<16x64xf32>
    %340 = arith.mulf %339, %338 : vector<16x64xf32>
    %341 = arith.addf %336, %340 : vector<16x64xf32>
    %cst_106 = arith.constant 0.797884583 : f32
    %342 = vector.broadcast %cst_106 : f32 to vector<16x64xf32>
    %343 = arith.mulf %342, %341 : vector<16x64xf32>
    %344 = math.tanh %343 : vector<16x64xf32>
    %cst_107 = arith.constant 1.000000e+00 : f32
    %345 = vector.broadcast %cst_107 : f32 to vector<16x64xf32>
    %346 = arith.addf %345, %344 : vector<16x64xf32>
    %cst_108 = arith.constant 5.000000e-01 : f32
    %347 = vector.broadcast %cst_108 : f32 to vector<16x64xf32>
    %348 = arith.mulf %347, %346 : vector<16x64xf32>
    %349 = arith.mulf %336, %348 : vector<16x64xf32>
    %350 = arith.truncf %349 : vector<16x64xf32> to vector<16x64xbf16>
    %c1_109 = arith.constant 1 : index
    %c0_110 = arith.constant 0 : index
    %c0_111 = arith.constant 0 : index
    %351 = vector.load %arg7[%c1_109, %c0_110, %c0_111] : memref<2x64x32xbf16, #tpu.memory_space<vmem>>, vector<1x64x32xbf16>
    %352 = vector.shape_cast %351 : vector<1x64x32xbf16> to vector<64x32xbf16>
    %cst_112 = arith.constant dense<0.000000e+00> : vector<16x32xf32>
    %353 = tpu.matmul %350, %352, %cst_112 {dimension_numbers = #tpu.dot_dimension_numbers<[1], [0], [0], [1], [0, 0, 1, 1], [], []>} : vector<16x64xbf16>, vector<64x32xbf16>, vector<16x32xf32> -> vector<16x32xf32>
    %354 = vector.extract_strided_slice %0 {offsets = [27, 0], sizes = [1, 32], strides = [1, 1]} : vector<28x32xf32> to vector<1x32xf32>
    %355 = vector.broadcast %354 : vector<1x32xf32> to vector<16x32xf32>
    %356 = arith.addf %353, %355 : vector<16x32xf32>
    %357 = arith.addf %329, %356 : vector<16x32xf32>
    %358 = vector.extract_strided_slice %0 {offsets = [24, 0], sizes = [1, 32], strides = [1, 1]} : vector<28x32xf32> to vector<1x32xf32>
    %359 = vector.extract_strided_slice %0 {offsets = [25, 0], sizes = [1, 32], strides = [1, 1]} : vector<28x32xf32> to vector<1x32xf32>
    %cst_113 = arith.constant dense<0.000000e+00> : vector<16xf32>
    %360 = vector.multi_reduction <add>, %357, %cst_113 [1] : vector<16x32xf32> to vector<16xf32>
    %361 = vector.shape_cast %360 : vector<16xf32> to vector<16x1xf32>
    %cst_114 = arith.constant 3.200000e+01 : f32
    %362 = vector.broadcast %cst_114 : f32 to vector<16x1xf32>
    %363 = arith.divf %361, %362 : vector<16x1xf32>
    %364 = vector.broadcast %363 : vector<16x1xf32> to vector<16x32xf32>
    %365 = arith.subf %357, %364 : vector<16x32xf32>
    %366 = arith.mulf %365, %365 : vector<16x32xf32>
    %cst_115 = arith.constant dense<0.000000e+00> : vector<16xf32>
    %367 = vector.multi_reduction <add>, %366, %cst_115 [1] : vector<16x32xf32> to vector<16xf32>
    %368 = vector.shape_cast %367 : vector<16xf32> to vector<16x1xf32>
    %cst_116 = arith.constant 3.200000e+01 : f32
    %369 = vector.broadcast %cst_116 : f32 to vector<16x1xf32>
    %370 = arith.divf %368, %369 : vector<16x1xf32>
    %371 = vector.broadcast %363 : vector<16x1xf32> to vector<16x32xf32>
    %372 = arith.subf %357, %371 : vector<16x32xf32>
    %cst_117 = arith.constant 9.99999996E-13 : f32
    %373 = vector.broadcast %cst_117 : f32 to vector<16x1xf32>
    %374 = arith.addf %370, %373 : vector<16x1xf32>
    %375 = math.rsqrt %374 : vector<16x1xf32>
    %376 = vector.broadcast %375 : vector<16x1xf32> to vector<16x32xf32>
    %377 = arith.mulf %372, %376 : vector<16x32xf32>
    %378 = vector.broadcast %358 : vector<1x32xf32> to vector<16x32xf32>
    %379 = arith.mulf %377, %378 : vector<16x32xf32>
    %380 = vector.broadcast %359 : vector<1x32xf32> to vector<16x32xf32>
    %381 = arith.addf %379, %380 : vector<16x32xf32>
    %382 = vector.extract_strided_slice %0 {offsets = [11, 0], sizes = [5, 32], strides = [1, 1]} : vector<28x32xf32> to vector<5x32xf32>
    %cst_118 = arith.constant dense<0.000000e+00> : vector<16x5xf32>
    %383 = tpu.matmul %381, %382, %cst_118 {dimension_numbers = #tpu.dot_dimension_numbers<[1], [1], [0], [0], [0, 0, 1, 0], [], []>} : vector<16x32xf32>, vector<5x32xf32>, vector<16x5xf32> -> vector<16x5xf32>
    %384 = vector.extract_strided_slice %2 {offsets = [0, 0], sizes = [1, 5], strides = [1, 1]} : vector<8x5xf32> to vector<1x5xf32>
    %385 = vector.broadcast %384 : vector<1x5xf32> to vector<16x5xf32>
    %386 = arith.addf %383, %385 : vector<16x5xf32>
    %387 = vector.shape_cast %386 : vector<16x5xf32> to vector<2x8x5xf32>
    %c0_119 = arith.constant 0 : index
    %c0_120 = arith.constant 0 : index
    %388 = vector.load %arg1[%c0_119, %c0_120] : memref<16x1xi32, #tpu.memory_space<vmem>>, vector<16x1xi32>
    %389 = tpu.iota {dimensions = array<i32: 1>} : vector<16x5xi32>
    %390 = vector.broadcast %388 : vector<16x1xi32> to vector<16x5xi32>
    %391 = arith.cmpi eq, %390, %389 : vector<16x5xi32>
    %392 = arith.extui %391 : vector<16x5xi1> to vector<16x5xi32>
    %393 = arith.sitofp %392 : vector<16x5xi32> to vector<16x5xf32>
    %394 = vector.shape_cast %393 : vector<16x5xf32> to vector<2x8x5xf32>
    %395 = tpu.iota {dimensions = array<i32: 1>} : vector<2x8xi32>
    %396 = arith.sitofp %395 : vector<2x8xi32> to vector<2x8xf32>
    %cst_121 = arith.constant dense<0.000000e+00> : vector<2xf32>
    %397 = vector.multi_reduction <add>, %3, %cst_121 [1] : vector<2x8xf32> to vector<2xf32>
    %398 = vector.shape_cast %397 : vector<2xf32> to vector<2x1xf32>
    %cst_122 = arith.constant 1.000000e+00 : f32
    %399 = vector.broadcast %cst_122 : f32 to vector<2x1xf32>
    %400 = arith.subf %398, %399 : vector<2x1xf32>
    %401 = vector.broadcast %400 : vector<2x1xf32> to vector<2x8xf32>
    %402 = arith.cmpf oeq, %396, %401 : vector<2x8xf32>
    %403 = arith.extui %402 : vector<2x8xi1> to vector<2x8xi32>
    %404 = arith.sitofp %403 : vector<2x8xi32> to vector<2x8xf32>
    %405 = vector.shape_cast %404 : vector<2x8xf32> to vector<2x8x1xf32>
    %406 = vector.broadcast %405 : vector<2x8x1xf32> to vector<2x8x5xf32>
    %407 = arith.mulf %394, %406 : vector<2x8x5xf32>
    %cst_123 = arith.constant dense<0.000000e+00> : vector<2x5xf32>
    %408 = vector.multi_reduction <add>, %407, %cst_123 [1] : vector<2x8x5xf32> to vector<2x5xf32>
    %409 = vector.extract_strided_slice %2 {offsets = [1, 0], sizes = [1, 5], strides = [1, 1]} : vector<8x5xf32> to vector<1x5xf32>
    %410 = vector.extract_strided_slice %2 {offsets = [2, 0], sizes = [1, 5], strides = [1, 1]} : vector<8x5xf32> to vector<1x5xf32>
    %411 = vector.extract_strided_slice %2 {offsets = [3, 0], sizes = [5, 5], strides = [1, 1]} : vector<8x5xf32> to vector<5x5xf32>
    %412 = vector.extract_strided_slice %387 {offsets = [0, 0, 0], sizes = [2, 1, 5], strides = [1, 1, 1]} : vector<2x8x5xf32> to vector<2x1x5xf32>
    %413 = vector.shape_cast %412 : vector<2x1x5xf32> to vector<2x5xf32>
    %414 = vector.broadcast %409 : vector<1x5xf32> to vector<2x5xf32>
    %415 = arith.addf %414, %413 : vector<2x5xf32>
    %416 = vector.extract_strided_slice %394 {offsets = [0, 0, 0], sizes = [2, 1, 5], strides = [1, 1, 1]} : vector<2x8x5xf32> to vector<2x1x5xf32>
    %417 = vector.shape_cast %416 : vector<2x1x5xf32> to vector<2x5xf32>
    %418 = arith.mulf %415, %417 : vector<2x5xf32>
    %cst_124 = arith.constant dense<0.000000e+00> : vector<2xf32>
    %419 = vector.multi_reduction <add>, %418, %cst_124 [1] : vector<2x5xf32> to vector<2xf32>
    %420 = vector.shape_cast %419 : vector<2xf32> to vector<2x1xf32>
    %cst_125 = arith.constant dense<0.000000e+00> : vector<16x5xf32>
    %421 = tpu.matmul %393, %411, %cst_125 {dimension_numbers = #tpu.dot_dimension_numbers<[1], [0], [0], [1], [0, 0, 1, 1], [], []>} : vector<16x5xf32>, vector<5x5xf32>, vector<16x5xf32> -> vector<16x5xf32>
    %422 = vector.shape_cast %421 : vector<16x5xf32> to vector<2x8x5xf32>
    %423 = vector.extract_strided_slice %422 {offsets = [0, 0, 0], sizes = [2, 7, 5], strides = [1, 1, 1]} : vector<2x8x5xf32> to vector<2x7x5xf32>
    %424 = vector.extract_strided_slice %394 {offsets = [0, 1, 0], sizes = [2, 7, 5], strides = [1, 1, 1]} : vector<2x8x5xf32> to vector<2x7x5xf32>
    %425 = arith.mulf %423, %424 : vector<2x7x5xf32>
    %cst_126 = arith.constant dense<0.000000e+00> : vector<2x7xf32>
    %426 = vector.multi_reduction <add>, %425, %cst_126 [2] : vector<2x7x5xf32> to vector<2x7xf32>
    %427 = vector.extract_strided_slice %387 {offsets = [0, 1, 0], sizes = [2, 7, 5], strides = [1, 1, 1]} : vector<2x8x5xf32> to vector<2x7x5xf32>
    %428 = vector.extract_strided_slice %394 {offsets = [0, 1, 0], sizes = [2, 7, 5], strides = [1, 1, 1]} : vector<2x8x5xf32> to vector<2x7x5xf32>
    %429 = arith.mulf %427, %428 : vector<2x7x5xf32>
    %cst_127 = arith.constant dense<0.000000e+00> : vector<2x7xf32>
    %430 = vector.multi_reduction <add>, %429, %cst_127 [2] : vector<2x7x5xf32> to vector<2x7xf32>
    %431 = arith.addf %426, %430 : vector<2x7xf32>
    %432 = vector.extract_strided_slice %3 {offsets = [0, 1], sizes = [2, 7], strides = [1, 1]} : vector<2x8xf32> to vector<2x7xf32>
    %433 = arith.mulf %431, %432 : vector<2x7xf32>
    %cst_128 = arith.constant dense<0.000000e+00> : vector<2xf32>
    %434 = vector.multi_reduction <add>, %433, %cst_128 [1] : vector<2x7xf32> to vector<2xf32>
    %435 = vector.shape_cast %434 : vector<2xf32> to vector<2x1xf32>
    %436 = arith.addf %420, %435 : vector<2x1xf32>
    %437 = vector.broadcast %410 : vector<1x5xf32> to vector<2x5xf32>
    %438 = arith.mulf %437, %408 : vector<2x5xf32>
    %cst_129 = arith.constant dense<0.000000e+00> : vector<2xf32>
    %439 = vector.multi_reduction <add>, %438, %cst_129 [1] : vector<2x5xf32> to vector<2xf32>
    %440 = vector.shape_cast %439 : vector<2xf32> to vector<2x1xf32>
    %441 = arith.addf %436, %440 : vector<2x1xf32>
    %442 = vector.extract_strided_slice %387 {offsets = [0, 0, 0], sizes = [2, 1, 5], strides = [1, 1, 1]} : vector<2x8x5xf32> to vector<2x1x5xf32>
    %443 = vector.shape_cast %442 : vector<2x1x5xf32> to vector<2x5xf32>
    %444 = vector.broadcast %409 : vector<1x5xf32> to vector<2x5xf32>
    %445 = arith.addf %444, %443 : vector<2x5xf32>
    %446 = vector.extract_strided_slice %387 {offsets = [0, 1, 0], sizes = [2, 1, 5], strides = [1, 1, 1]} : vector<2x8x5xf32> to vector<2x1x5xf32>
    %447 = vector.shape_cast %446 : vector<2x1x5xf32> to vector<2x5xf32>
    %448 = vector.shape_cast %445 : vector<2x5xf32> to vector<2x5x1xf32>
    %449 = vector.shape_cast %411 : vector<5x5xf32> to vector<1x5x5xf32>
    %450 = vector.broadcast %448 : vector<2x5x1xf32> to vector<2x5x5xf32>
    %451 = vector.broadcast %449 : vector<1x5x5xf32> to vector<2x5x5xf32>
    %452 = arith.addf %450, %451 : vector<2x5x5xf32>
    %453 = vector.shape_cast %447 : vector<2x5xf32> to vector<2x1x5xf32>
    %454 = vector.broadcast %453 : vector<2x1x5xf32> to vector<2x5x5xf32>
    %455 = arith.addf %452, %454 : vector<2x5x5xf32>
    %cst_130 = arith.constant dense<0xFF800000> : vector<2x5xf32>
    %456 = vector.multi_reduction <maximumf>, %455, %cst_130 [1] : vector<2x5x5xf32> to vector<2x5xf32>
    %457 = vector.shape_cast %456 : vector<2x5xf32> to vector<2x1x5xf32>
    %458 = vector.broadcast %457 : vector<2x1x5xf32> to vector<2x5x5xf32>
    %459 = arith.subf %455, %458 : vector<2x5x5xf32>
    %460 = math.exp %459 : vector<2x5x5xf32>
    %cst_131 = arith.constant dense<0.000000e+00> : vector<2x5xf32>
    %461 = vector.multi_reduction <add>, %460, %cst_131 [1] : vector<2x5x5xf32> to vector<2x5xf32>
    %462 = math.log %461 : vector<2x5xf32>
    %463 = vector.shape_cast %457 : vector<2x1x5xf32> to vector<2x5xf32>
    %464 = arith.addf %462, %463 : vector<2x5xf32>
    %465 = vector.extract_strided_slice %3 {offsets = [0, 1], sizes = [2, 1], strides = [1, 1]} : vector<2x8xf32> to vector<2x1xf32>
    %cst_132 = arith.constant 0.000000e+00 : f32
    %466 = vector.broadcast %cst_132 : f32 to vector<2x1xf32>
    %467 = arith.cmpf ogt, %465, %466 : vector<2x1xf32>
    %468 = vector.shape_cast %467 : vector<2x1xi1> to vector<2x1xi1>
    %469 = vector.broadcast %468 : vector<2x1xi1> to vector<2x5xi1>
    %470 = arith.select %469, %464, %445 : vector<2x5xi1>, vector<2x5xf32>
    %471 = vector.extract_strided_slice %387 {offsets = [0, 2, 0], sizes = [2, 1, 5], strides = [1, 1, 1]} : vector<2x8x5xf32> to vector<2x1x5xf32>
    %472 = vector.shape_cast %471 : vector<2x1x5xf32> to vector<2x5xf32>
    %473 = vector.shape_cast %470 : vector<2x5xf32> to vector<2x5x1xf32>
    %474 = vector.shape_cast %411 : vector<5x5xf32> to vector<1x5x5xf32>
    %475 = vector.broadcast %473 : vector<2x5x1xf32> to vector<2x5x5xf32>
    %476 = vector.broadcast %474 : vector<1x5x5xf32> to vector<2x5x5xf32>
    %477 = arith.addf %475, %476 : vector<2x5x5xf32>
    %478 = vector.shape_cast %472 : vector<2x5xf32> to vector<2x1x5xf32>
    %479 = vector.broadcast %478 : vector<2x1x5xf32> to vector<2x5x5xf32>
    %480 = arith.addf %477, %479 : vector<2x5x5xf32>
    %cst_133 = arith.constant dense<0xFF800000> : vector<2x5xf32>
    %481 = vector.multi_reduction <maximumf>, %480, %cst_133 [1] : vector<2x5x5xf32> to vector<2x5xf32>
    %482 = vector.shape_cast %481 : vector<2x5xf32> to vector<2x1x5xf32>
    %483 = vector.broadcast %482 : vector<2x1x5xf32> to vector<2x5x5xf32>
    %484 = arith.subf %480, %483 : vector<2x5x5xf32>
    %485 = math.exp %484 : vector<2x5x5xf32>
    %cst_134 = arith.constant dense<0.000000e+00> : vector<2x5xf32>
    %486 = vector.multi_reduction <add>, %485, %cst_134 [1] : vector<2x5x5xf32> to vector<2x5xf32>
    %487 = math.log %486 : vector<2x5xf32>
    %488 = vector.shape_cast %482 : vector<2x1x5xf32> to vector<2x5xf32>
    %489 = arith.addf %487, %488 : vector<2x5xf32>
    %490 = vector.extract_strided_slice %3 {offsets = [0, 2], sizes = [2, 1], strides = [1, 1]} : vector<2x8xf32> to vector<2x1xf32>
    %cst_135 = arith.constant 0.000000e+00 : f32
    %491 = vector.broadcast %cst_135 : f32 to vector<2x1xf32>
    %492 = arith.cmpf ogt, %490, %491 : vector<2x1xf32>
    %493 = vector.shape_cast %492 : vector<2x1xi1> to vector<2x1xi1>
    %494 = vector.broadcast %493 : vector<2x1xi1> to vector<2x5xi1>
    %495 = arith.select %494, %489, %470 : vector<2x5xi1>, vector<2x5xf32>
    %496 = vector.extract_strided_slice %387 {offsets = [0, 3, 0], sizes = [2, 1, 5], strides = [1, 1, 1]} : vector<2x8x5xf32> to vector<2x1x5xf32>
    %497 = vector.shape_cast %496 : vector<2x1x5xf32> to vector<2x5xf32>
    %498 = vector.shape_cast %495 : vector<2x5xf32> to vector<2x5x1xf32>
    %499 = vector.shape_cast %411 : vector<5x5xf32> to vector<1x5x5xf32>
    %500 = vector.broadcast %498 : vector<2x5x1xf32> to vector<2x5x5xf32>
    %501 = vector.broadcast %499 : vector<1x5x5xf32> to vector<2x5x5xf32>
    %502 = arith.addf %500, %501 : vector<2x5x5xf32>
    %503 = vector.shape_cast %497 : vector<2x5xf32> to vector<2x1x5xf32>
    %504 = vector.broadcast %503 : vector<2x1x5xf32> to vector<2x5x5xf32>
    %505 = arith.addf %502, %504 : vector<2x5x5xf32>
    %cst_136 = arith.constant dense<0xFF800000> : vector<2x5xf32>
    %506 = vector.multi_reduction <maximumf>, %505, %cst_136 [1] : vector<2x5x5xf32> to vector<2x5xf32>
    %507 = vector.shape_cast %506 : vector<2x5xf32> to vector<2x1x5xf32>
    %508 = vector.broadcast %507 : vector<2x1x5xf32> to vector<2x5x5xf32>
    %509 = arith.subf %505, %508 : vector<2x5x5xf32>
    %510 = math.exp %509 : vector<2x5x5xf32>
    %cst_137 = arith.constant dense<0.000000e+00> : vector<2x5xf32>
    %511 = vector.multi_reduction <add>, %510, %cst_137 [1] : vector<2x5x5xf32> to vector<2x5xf32>
    %512 = math.log %511 : vector<2x5xf32>
    %513 = vector.shape_cast %507 : vector<2x1x5xf32> to vector<2x5xf32>
    %514 = arith.addf %512, %513 : vector<2x5xf32>
    %515 = vector.extract_strided_slice %3 {offsets = [0, 3], sizes = [2, 1], strides = [1, 1]} : vector<2x8xf32> to vector<2x1xf32>
    %cst_138 = arith.constant 0.000000e+00 : f32
    %516 = vector.broadcast %cst_138 : f32 to vector<2x1xf32>
    %517 = arith.cmpf ogt, %515, %516 : vector<2x1xf32>
    %518 = vector.shape_cast %517 : vector<2x1xi1> to vector<2x1xi1>
    %519 = vector.broadcast %518 : vector<2x1xi1> to vector<2x5xi1>
    %520 = arith.select %519, %514, %495 : vector<2x5xi1>, vector<2x5xf32>
    %521 = vector.extract_strided_slice %387 {offsets = [0, 4, 0], sizes = [2, 1, 5], strides = [1, 1, 1]} : vector<2x8x5xf32> to vector<2x1x5xf32>
    %522 = vector.shape_cast %521 : vector<2x1x5xf32> to vector<2x5xf32>
    %523 = vector.shape_cast %520 : vector<2x5xf32> to vector<2x5x1xf32>
    %524 = vector.shape_cast %411 : vector<5x5xf32> to vector<1x5x5xf32>
    %525 = vector.broadcast %523 : vector<2x5x1xf32> to vector<2x5x5xf32>
    %526 = vector.broadcast %524 : vector<1x5x5xf32> to vector<2x5x5xf32>
    %527 = arith.addf %525, %526 : vector<2x5x5xf32>
    %528 = vector.shape_cast %522 : vector<2x5xf32> to vector<2x1x5xf32>
    %529 = vector.broadcast %528 : vector<2x1x5xf32> to vector<2x5x5xf32>
    %530 = arith.addf %527, %529 : vector<2x5x5xf32>
    %cst_139 = arith.constant dense<0xFF800000> : vector<2x5xf32>
    %531 = vector.multi_reduction <maximumf>, %530, %cst_139 [1] : vector<2x5x5xf32> to vector<2x5xf32>
    %532 = vector.shape_cast %531 : vector<2x5xf32> to vector<2x1x5xf32>
    %533 = vector.broadcast %532 : vector<2x1x5xf32> to vector<2x5x5xf32>
    %534 = arith.subf %530, %533 : vector<2x5x5xf32>
    %535 = math.exp %534 : vector<2x5x5xf32>
    %cst_140 = arith.constant dense<0.000000e+00> : vector<2x5xf32>
    %536 = vector.multi_reduction <add>, %535, %cst_140 [1] : vector<2x5x5xf32> to vector<2x5xf32>
    %537 = math.log %536 : vector<2x5xf32>
    %538 = vector.shape_cast %532 : vector<2x1x5xf32> to vector<2x5xf32>
    %539 = arith.addf %537, %538 : vector<2x5xf32>
    %540 = vector.extract_strided_slice %3 {offsets = [0, 4], sizes = [2, 1], strides = [1, 1]} : vector<2x8xf32> to vector<2x1xf32>
    %cst_141 = arith.constant 0.000000e+00 : f32
    %541 = vector.broadcast %cst_141 : f32 to vector<2x1xf32>
    %542 = arith.cmpf ogt, %540, %541 : vector<2x1xf32>
    %543 = vector.shape_cast %542 : vector<2x1xi1> to vector<2x1xi1>
    %544 = vector.broadcast %543 : vector<2x1xi1> to vector<2x5xi1>
    %545 = arith.select %544, %539, %520 : vector<2x5xi1>, vector<2x5xf32>
    %546 = vector.extract_strided_slice %387 {offsets = [0, 5, 0], sizes = [2, 1, 5], strides = [1, 1, 1]} : vector<2x8x5xf32> to vector<2x1x5xf32>
    %547 = vector.shape_cast %546 : vector<2x1x5xf32> to vector<2x5xf32>
    %548 = vector.shape_cast %545 : vector<2x5xf32> to vector<2x5x1xf32>
    %549 = vector.shape_cast %411 : vector<5x5xf32> to vector<1x5x5xf32>
    %550 = vector.broadcast %548 : vector<2x5x1xf32> to vector<2x5x5xf32>
    %551 = vector.broadcast %549 : vector<1x5x5xf32> to vector<2x5x5xf32>
    %552 = arith.addf %550, %551 : vector<2x5x5xf32>
    %553 = vector.shape_cast %547 : vector<2x5xf32> to vector<2x1x5xf32>
    %554 = vector.broadcast %553 : vector<2x1x5xf32> to vector<2x5x5xf32>
    %555 = arith.addf %552, %554 : vector<2x5x5xf32>
    %cst_142 = arith.constant dense<0xFF800000> : vector<2x5xf32>
    %556 = vector.multi_reduction <maximumf>, %555, %cst_142 [1] : vector<2x5x5xf32> to vector<2x5xf32>
    %557 = vector.shape_cast %556 : vector<2x5xf32> to vector<2x1x5xf32>
    %558 = vector.broadcast %557 : vector<2x1x5xf32> to vector<2x5x5xf32>
    %559 = arith.subf %555, %558 : vector<2x5x5xf32>
    %560 = math.exp %559 : vector<2x5x5xf32>
    %cst_143 = arith.constant dense<0.000000e+00> : vector<2x5xf32>
    %561 = vector.multi_reduction <add>, %560, %cst_143 [1] : vector<2x5x5xf32> to vector<2x5xf32>
    %562 = math.log %561 : vector<2x5xf32>
    %563 = vector.shape_cast %557 : vector<2x1x5xf32> to vector<2x5xf32>
    %564 = arith.addf %562, %563 : vector<2x5xf32>
    %565 = vector.extract_strided_slice %3 {offsets = [0, 5], sizes = [2, 1], strides = [1, 1]} : vector<2x8xf32> to vector<2x1xf32>
    %cst_144 = arith.constant 0.000000e+00 : f32
    %566 = vector.broadcast %cst_144 : f32 to vector<2x1xf32>
    %567 = arith.cmpf ogt, %565, %566 : vector<2x1xf32>
    %568 = vector.shape_cast %567 : vector<2x1xi1> to vector<2x1xi1>
    %569 = vector.broadcast %568 : vector<2x1xi1> to vector<2x5xi1>
    %570 = arith.select %569, %564, %545 : vector<2x5xi1>, vector<2x5xf32>
    %571 = vector.extract_strided_slice %387 {offsets = [0, 6, 0], sizes = [2, 1, 5], strides = [1, 1, 1]} : vector<2x8x5xf32> to vector<2x1x5xf32>
    %572 = vector.shape_cast %571 : vector<2x1x5xf32> to vector<2x5xf32>
    %573 = vector.shape_cast %570 : vector<2x5xf32> to vector<2x5x1xf32>
    %574 = vector.shape_cast %411 : vector<5x5xf32> to vector<1x5x5xf32>
    %575 = vector.broadcast %573 : vector<2x5x1xf32> to vector<2x5x5xf32>
    %576 = vector.broadcast %574 : vector<1x5x5xf32> to vector<2x5x5xf32>
    %577 = arith.addf %575, %576 : vector<2x5x5xf32>
    %578 = vector.shape_cast %572 : vector<2x5xf32> to vector<2x1x5xf32>
    %579 = vector.broadcast %578 : vector<2x1x5xf32> to vector<2x5x5xf32>
    %580 = arith.addf %577, %579 : vector<2x5x5xf32>
    %cst_145 = arith.constant dense<0xFF800000> : vector<2x5xf32>
    %581 = vector.multi_reduction <maximumf>, %580, %cst_145 [1] : vector<2x5x5xf32> to vector<2x5xf32>
    %582 = vector.shape_cast %581 : vector<2x5xf32> to vector<2x1x5xf32>
    %583 = vector.broadcast %582 : vector<2x1x5xf32> to vector<2x5x5xf32>
    %584 = arith.subf %580, %583 : vector<2x5x5xf32>
    %585 = math.exp %584 : vector<2x5x5xf32>
    %cst_146 = arith.constant dense<0.000000e+00> : vector<2x5xf32>
    %586 = vector.multi_reduction <add>, %585, %cst_146 [1] : vector<2x5x5xf32> to vector<2x5xf32>
    %587 = math.log %586 : vector<2x5xf32>
    %588 = vector.shape_cast %582 : vector<2x1x5xf32> to vector<2x5xf32>
    %589 = arith.addf %587, %588 : vector<2x5xf32>
    %590 = vector.extract_strided_slice %3 {offsets = [0, 6], sizes = [2, 1], strides = [1, 1]} : vector<2x8xf32> to vector<2x1xf32>
    %cst_147 = arith.constant 0.000000e+00 : f32
    %591 = vector.broadcast %cst_147 : f32 to vector<2x1xf32>
    %592 = arith.cmpf ogt, %590, %591 : vector<2x1xf32>
    %593 = vector.shape_cast %592 : vector<2x1xi1> to vector<2x1xi1>
    %594 = vector.broadcast %593 : vector<2x1xi1> to vector<2x5xi1>
    %595 = arith.select %594, %589, %570 : vector<2x5xi1>, vector<2x5xf32>
    %596 = vector.extract_strided_slice %387 {offsets = [0, 7, 0], sizes = [2, 1, 5], strides = [1, 1, 1]} : vector<2x8x5xf32> to vector<2x1x5xf32>
    %597 = vector.shape_cast %596 : vector<2x1x5xf32> to vector<2x5xf32>
    %598 = vector.shape_cast %595 : vector<2x5xf32> to vector<2x5x1xf32>
    %599 = vector.shape_cast %411 : vector<5x5xf32> to vector<1x5x5xf32>
    %600 = vector.broadcast %598 : vector<2x5x1xf32> to vector<2x5x5xf32>
    %601 = vector.broadcast %599 : vector<1x5x5xf32> to vector<2x5x5xf32>
    %602 = arith.addf %600, %601 : vector<2x5x5xf32>
    %603 = vector.shape_cast %597 : vector<2x5xf32> to vector<2x1x5xf32>
    %604 = vector.broadcast %603 : vector<2x1x5xf32> to vector<2x5x5xf32>
    %605 = arith.addf %602, %604 : vector<2x5x5xf32>
    %cst_148 = arith.constant dense<0xFF800000> : vector<2x5xf32>
    %606 = vector.multi_reduction <maximumf>, %605, %cst_148 [1] : vector<2x5x5xf32> to vector<2x5xf32>
    %607 = vector.shape_cast %606 : vector<2x5xf32> to vector<2x1x5xf32>
    %608 = vector.broadcast %607 : vector<2x1x5xf32> to vector<2x5x5xf32>
    %609 = arith.subf %605, %608 : vector<2x5x5xf32>
    %610 = math.exp %609 : vector<2x5x5xf32>
    %cst_149 = arith.constant dense<0.000000e+00> : vector<2x5xf32>
    %611 = vector.multi_reduction <add>, %610, %cst_149 [1] : vector<2x5x5xf32> to vector<2x5xf32>
    %612 = math.log %611 : vector<2x5xf32>
    %613 = vector.shape_cast %607 : vector<2x1x5xf32> to vector<2x5xf32>
    %614 = arith.addf %612, %613 : vector<2x5xf32>
    %615 = vector.extract_strided_slice %3 {offsets = [0, 7], sizes = [2, 1], strides = [1, 1]} : vector<2x8xf32> to vector<2x1xf32>
    %cst_150 = arith.constant 0.000000e+00 : f32
    %616 = vector.broadcast %cst_150 : f32 to vector<2x1xf32>
    %617 = arith.cmpf ogt, %615, %616 : vector<2x1xf32>
    %618 = vector.shape_cast %617 : vector<2x1xi1> to vector<2x1xi1>
    %619 = vector.broadcast %618 : vector<2x1xi1> to vector<2x5xi1>
    %620 = arith.select %619, %614, %595 : vector<2x5xi1>, vector<2x5xf32>
    %621 = vector.broadcast %410 : vector<1x5xf32> to vector<2x5xf32>
    %622 = arith.addf %620, %621 : vector<2x5xf32>
    %cst_151 = arith.constant dense<0xFF800000> : vector<2xf32>
    %623 = vector.multi_reduction <maximumf>, %622, %cst_151 [1] : vector<2x5xf32> to vector<2xf32>
    %624 = vector.shape_cast %623 : vector<2xf32> to vector<2x1xf32>
    %625 = vector.broadcast %624 : vector<2x1xf32> to vector<2x5xf32>
    %626 = arith.subf %622, %625 : vector<2x5xf32>
    %627 = math.exp %626 : vector<2x5xf32>
    %cst_152 = arith.constant dense<0.000000e+00> : vector<2xf32>
    %628 = vector.multi_reduction <add>, %627, %cst_152 [1] : vector<2x5xf32> to vector<2xf32>
    %629 = vector.shape_cast %628 : vector<2xf32> to vector<2x1xf32>
    %630 = math.log %629 : vector<2x1xf32>
    %631 = arith.addf %630, %624 : vector<2x1xf32>
    %632 = arith.subf %441, %631 : vector<2x1xf32>
    %cst_153 = arith.constant dense<0.000000e+00> : vector<1xf32>
    %633 = vector.multi_reduction <add>, %632, %cst_153 [0] : vector<2x1xf32> to vector<1xf32>
    %634 = vector.shape_cast %633 : vector<1xf32> to vector<1x1xf32>
    %cst_154 = arith.constant 0.000000e+00 : f32
    %635 = vector.broadcast %cst_154 : f32 to vector<1x1xf32>
    %636 = arith.subf %635, %634 : vector<1x1xf32>
    %c0_155 = arith.constant 0 : index
    %c0_156 = arith.constant 0 : index
    %637 = vector.load %arg11[%c0_155, %c0_156] : memref<1x1xf32, #tpu.memory_space<vmem>>, vector<1x1xf32>
    tpu.vector_store %arg11[%c0_155, %c0_156], %636 {strides = array<i32>} : memref<1x1xf32, #tpu.memory_space<vmem>>, vector<1x1xf32>,
    return
  }
}

</mosaic_0001>

<llo_original>
// kernel: bert_for_ner_loss.1
$region0: #{bert_for_ner_loss.1}
  #allocation0 [shape = 'u32[]', space=smem, size = 0x4, offset = 0x4, fixed_abs, tag = 'smem constant byte address 0x4 - core index']
  #allocation1 [shape = 'u32[72,128]{1,0:T(1,128)}', space=vmem, size = 0x9000, scoped, tag = 'internal scratch']
  %s0 = inlined_call_operand.vmem [shape: s32[16,1], index: 0, kind: input, shape index: {}]
  %s1 = inlined_call_operand.vmem [shape: s32[16,1], index: 1, kind: input, shape index: {}]
  %s2 = inlined_call_operand.vmem [shape: f32[2,8], index: 2, kind: input, shape index: {}]
  %s3 = inlined_call_operand.vmem [shape: f32[100,32], index: 3, kind: input, shape index: {}]
  %s4 = inlined_call_operand.vmem [shape: bf16[2,32,96], index: 4, kind: input, shape index: {}]
  %s5 = inlined_call_operand.vmem [shape: bf16[2,32,32], index: 5, kind: input, shape index: {}]
  %s6 = inlined_call_operand.vmem [shape: bf16[2,32,64], index: 6, kind: input, shape index: {}]
  %s7 = inlined_call_operand.vmem [shape: bf16[2,64,32], index: 7, kind: input, shape index: {}]
  %s8 = inlined_call_operand.vmem [shape: f32[28,32], index: 8, kind: input, shape index: {}]
  %s9 = inlined_call_operand.vmem [shape: f32[4,96], index: 9, kind: input, shape index: {}]
  %s10 = inlined_call_operand.vmem [shape: f32[8,5], index: 10, kind: input, shape index: {}]
  %s11 = inlined_call_operand.hbm [shape: f32[1,1], index: 11, kind: output, shape index: {}]
  %s12 = sld [smem:[#allocation0]]
  $region54: #{bert_for_ner_loss.1} parent=0
    _
  %s14 = ssub.s32 1, %s12
  %s15 = scalar_select 0, %s14, %s12
  $region1: #{bert_for_ner_loss.1} parent=0
    #allocation2 [shape = 'u8[512]{0}', space=vmem, size = 0x400, scoped, tag = 'output window, operand 0, single buffered']
    #allocation3 [shape = 's32[1]{0}', space=sflag, size = 0x4, scoped, tag = 'scoped memory for bert_for_ner_loss.1']
    %16 = vsyncpa [#allocation3], 0
    // Predicated region
    $region2: #{bert_for_ner_loss.1} parent=1 // pred_check
      _
    $region3: #{bert_for_ner_loss.1} parent=1 // pred_check_branch
      %18 = sbr.rel (0) target = $region5
    $region4: #{bert_for_ner_loss.1} parent=1 // pred_region
      _
    $region5: #{bert_for_ner_loss.1} parent=1 // pred_fallthru
      _
    // Predicated region
    $region6: #{bert_for_ner_loss.1} parent=1 // pred_check
      _
    $region7: #{bert_for_ner_loss.1} parent=1 // pred_check_branch
      %20 = sbr.rel (0) target = $region9
    $region8: #{bert_for_ner_loss.1} parent=1 // pred_region
      _
    $region9: #{bert_for_ner_loss.1} parent=1 // pred_fallthru
      _
    // Predicated region
    $region10: #{bert_for_ner_loss.1} parent=1 // pred_check
      _
    $region11: #{bert_for_ner_loss.1} parent=1 // pred_check_branch
      %22 = sbr.rel (0) target = $region13
    $region12: #{bert_for_ner_loss.1} parent=1 // pred_region
      _
    $region13: #{bert_for_ner_loss.1} parent=1 // pred_fallthru
      _
    // Predicated region
    $region14: #{bert_for_ner_loss.1} parent=1 // pred_check
      _
    $region15: #{bert_for_ner_loss.1} parent=1 // pred_check_branch
      %24 = sbr.rel (0) target = $region17
    $region16: #{bert_for_ner_loss.1} parent=1 // pred_region
      _
    $region17: #{bert_for_ner_loss.1} parent=1 // pred_fallthru
      _
    // Predicated region
    $region18: #{bert_for_ner_loss.1} parent=1 // pred_check
      _
    $region19: #{bert_for_ner_loss.1} parent=1 // pred_check_branch
      %26 = sbr.rel (0) target = $region21
    $region20: #{bert_for_ner_loss.1} parent=1 // pred_region
      _
    $region21: #{bert_for_ner_loss.1} parent=1 // pred_fallthru
      _
    // Predicated region
    $region22: #{bert_for_ner_loss.1} parent=1 // pred_check
      _
    $region23: #{bert_for_ner_loss.1} parent=1 // pred_check_branch
      %28 = sbr.rel (0) target = $region25
    $region24: #{bert_for_ner_loss.1} parent=1 // pred_region
      _
    $region25: #{bert_for_ner_loss.1} parent=1 // pred_fallthru
      _
    // Predicated region
    $region26: #{bert_for_ner_loss.1} parent=1 // pred_check
      _
    $region27: #{bert_for_ner_loss.1} parent=1 // pred_check_branch
      %30 = sbr.rel (0) target = $region29
    $region28: #{bert_for_ner_loss.1} parent=1 // pred_region
      _
    $region29: #{bert_for_ner_loss.1} parent=1 // pred_fallthru
      _
    // Predicated region
    $region30: #{bert_for_ner_loss.1} parent=1 // pred_check
      _
    $region31: #{bert_for_ner_loss.1} parent=1 // pred_check_branch
      %32 = sbr.rel (0) target = $region33
    $region32: #{bert_for_ner_loss.1} parent=1 // pred_region
      _
    $region33: #{bert_for_ner_loss.1} parent=1 // pred_fallthru
      _
    // Predicated region
    $region34: #{bert_for_ner_loss.1} parent=1 // pred_check
      _
    $region35: #{bert_for_ner_loss.1} parent=1 // pred_check_branch
      %34 = sbr.rel (0) target = $region37
    $region36: #{bert_for_ner_loss.1} parent=1 // pred_region
      _
    $region37: #{bert_for_ner_loss.1} parent=1 // pred_fallthru
      _
    // Predicated region
    $region38: #{bert_for_ner_loss.1} parent=1 // pred_check
      _
    $region39: #{bert_for_ner_loss.1} parent=1 // pred_check_branch
      %36 = sbr.rel (0) target = $region41
    $region40: #{bert_for_ner_loss.1} parent=1 // pred_region
      _
    $region41: #{bert_for_ner_loss.1} parent=1 // pred_fallthru
      _
    // Predicated region
    $region42: #{bert_for_ner_loss.1} parent=1 // pred_check
      _
    $region43: #{bert_for_ner_loss.1} parent=1 // pred_check_branch
      %38 = sbr.rel (0) target = $region45
    $region44: #{bert_for_ner_loss.1} parent=1 // pred_region
      _
    $region45: #{bert_for_ner_loss.1} parent=1 // pred_fallthru
      _
    %v40 = vld [vmem:[%s8] sm:$0xff]
    %v41 = vld [vmem:[%s8 + $0x8] sm:$0xff]
    %v42 = vld [vmem:[%s8 + $0x10] sm:$0xff]
    %v43 = vld [vmem:[%s8 + $0x18] sm:$0xf]
    %v44 = vld [vmem:[%s9] sm:$0xf]
    %v45 = vld [vmem:[%s10] sm:$0xff]
    %v46 = vld [vmem:[%s2] sm:$0x3]
    %v47 = vld [vmem:[%s0] sm:$0xff]
    %v48 = vld [vmem:[%s0 + $0x8] sm:$0xff]
    %v49 = vlaneseq
    %v50 = vand.u32 %v49, 127
    %51 = vset.pattern.permute.xlu0 0
    %52 = vperm.xlu0 %51, %v47
    %v53 = vpop.permute.xlu0 %52
    %54 = vset.pattern.permute.xlu0 0
    %55 = vperm.xlu0 %54, %v48
    %v56 = vpop.permute.xlu0 %55
    %vm57 = vcmp.eq.s32.totalorder %v53, %v50
    %vm58 = vcmp.eq.s32.totalorder %v56, %v50
    %v59 = vsel %vm57, 1, 0
    %v60 = vsel %vm58, 1, 0
    %v61 = vcvt.s32.f32 %v59
    %v62 = vcvt.s32.f32 %v60
    %v63 = vld [vmem:[%s3] sm:$0xff]
    %v64 = vld [vmem:[%s3 + $0x8] sm:$0xff]
    %v65 = vld [vmem:[%s3 + $0x10] sm:$0xff]
    %v66 = vld [vmem:[%s3 + $0x18] sm:$0xff]
    %v67 = vld [vmem:[%s3 + $0x20] sm:$0xff]
    %v68 = vld [vmem:[%s3 + $0x28] sm:$0xff]
    %v69 = vld [vmem:[%s3 + $0x30] sm:$0xff]
    %v70 = vld [vmem:[%s3 + $0x38] sm:$0xff]
    %v71 = vld [vmem:[%s3 + $0x40] sm:$0xff]
    %v72 = vld [vmem:[%s3 + $0x48] sm:$0xff]
    %v73 = vld [vmem:[%s3 + $0x50] sm:$0xff]
    %v74 = vld [vmem:[%s3 + $0x58] sm:$0xff]
    %v75 = vld [vmem:[%s3 + $0x60] sm:$0xf]
    %vm78 = vcmask 1044480
    %v79 = vrot.slane %v40, 3
    %v80 = vrot.slane %v41, 3
    %v81 = vsel %vm78, %v79, %v80
    %vm83 = vcmask 818176
    %v85 = vsel %vm83, %v61, 0
    %v88 = vsel %vm83, %v62, 0
    %vm90 = vcmask 1043456
    %v92 = vsel %vm90, %v75, 0
    %94 = vmatpush.msra.mxu0 0.0
    %95 = vmatpush.msra.mxu0 0.0
    %96 = vmatpush.msra.mxu0 0.0
    %97 = vmatpush.msra.mxu0 %v92
    %98 = vmatpush.msra.mxu0 %v74
    %99 = vmatpush.msra.mxu0 %v73
    %100 = vmatpush.msra.mxu0 %v72
    %101 = vmatpush.msra.mxu0 %v71
    %102 = vmatpush.msra.mxu0 %v70
    %103 = vmatpush.msra.mxu0 %v69
    %104 = vmatpush.msra.mxu0 %v68
    %105 = vmatpush.msra.mxu0 %v67
    %106 = vmatpush.msra.mxu0 %v66
    %107 = vmatpush.msra.mxu0 %v65
    %108 = vmatpush.msra.mxu0 %v64
    %109 = vmatpush.msra.mxu0 %v63
    %110 = vmatmul.f32.gmra.mxu0 %v85
    %v111 = vpop.f32.mrf.mxu0
    %v112 = vadd.f32 %v81, %v111
    %113 = vmatmul.f32.gmra.mxu0 %v88
    %v114 = vpop.f32.mrf.mxu0
    %v115 = vadd.f32 %v81, %v114
    %116 = vdwg.mxu0
    %v117 = vperm.slane %v40, 2
    %v118 = vadd.f32 %v112, %v117
    %v119 = vadd.f32 %v115, %v117
    %vm120 = vcmask 261120
    %v121 = vsel %vm120, %v118, 0.0
    %122 = vadd.xlane.f32.xlu0 %v121
    %v123 = vpop.xlane.xlu0 %122
    %v124 = vsel %vm120, %v119, 0.0
    %125 = vadd.xlane.f32.xlu0 %v124
    %v126 = vpop.xlane.xlu0 %125
    %v127 = vrcp.pop 32.0
    %v128 = vmul.f32 32.0, %v127
    %v129 = vsub.f32 1.0, %v128
    %v130 = vmul.f32 %v127, %v129
    %v131 = vadd.f32 %v127, %v130
    %vm132 = vweird.f32 %v127
    %v133 = vsel %vm132, %v127, %v131
    %v134 = vmul.f32 %v123, %v133
    %v135 = vmul.f32 %v126, %v133
    %v136 = vsub.f32 %v118, %v134
    %v137 = vsub.f32 %v119, %v135
    %v138 = vmul.f32 %v136, %v136
    %v139 = vmul.f32 %v137, %v137
    %v140 = vsel %vm120, %v138, 0.0
    %141 = vadd.xlane.f32.xlu0 %v140
    %v142 = vpop.xlane.xlu0 %141
    %v143 = vsel %vm120, %v139, 0.0
    %144 = vadd.xlane.f32.xlu0 %v143
    %v145 = vpop.xlane.xlu0 %144
    %v146 = vmul.f32 %v142, %v133
    %v147 = vmul.f32 %v145, %v133
    %v148 = vadd.f32 %v146, 1e-12
    %v149 = vadd.f32 %v147, 1e-12
    %v150 = vrsqrt.pop %v148
    %v151 = vmul.f32 %v150, %v148
    %v152 = vmul.f32 %v151, %v150
    %v153 = vmul.f32 0.5, %v152
    %v154 = vsub.f32 1.5, %v153
    %v155 = vmul.f32 %v150, %v154
    %vm156 = vweird.f32 %v148
    %vm157 = vweird.f32 %v150
    %vm158 = vmor %vm156, %vm157
    %v159 = vsel %vm158, %v150, %v155
    %v160 = vrsqrt.pop %v149
    %v161 = vmul.f32 %v160, %v149
    %v162 = vmul.f32 %v161, %v160
    %v163 = vmul.f32 0.5, %v162
    %v164 = vsub.f32 1.5, %v163
    %v165 = vmul.f32 %v160, %v164
    %vm166 = vweird.f32 %v149
    %vm167 = vweird.f32 %v160
    %vm168 = vmor %vm166, %vm167
    %v169 = vsel %vm168, %v160, %v165
    %v170 = vmul.f32 %v136, %v159
    %v171 = vmul.f32 %v137, %v169
    %v172 = vperm.slane %v40, 0
    %v173 = vmul.f32 %v170, %v172
    %v174 = vmul.f32 %v171, %v172
    %v175 = vperm.slane %v40, 1
    %v176 = vadd.f32 %v173, %v175
    %v177 = vadd.f32 %v174, %v175
    %v178 = vsub.f32 1.0, %v46
    %v179 = vmul.f32 %v178, -1e+09
    %v180 = vperm.slane %v179, 0
    %vm181 = vcmask 64512
    %v182 = vsel %vm181, %v180, -1e+09
    %v183 = vperm.slane %v179, 1
    %185 = vrot.lane.b32.xlu0 %v183, 8
    %v186 = vpop.permute.xlu0 %185
    %v188 = vsel %vm181, -1e+09, %v186
    %v189 = vpack.c.bf16 %v177, %v176
    %v190 = vld [vmem:[%s4] sm:$0xf]
    %v191 = vld [vmem:[%s4 + $0x4] sm:$0xf]
    %v192 = vld [vmem:[%s4 + $0x8] sm:$0xf]
    %v193 = vld [vmem:[%s4 + $0xc] sm:$0xf]
    %v194 = vperm.slane %v44, 0
    %v199 = vunpack.c.l.b16 %v190
    %v200 = vunpack.c.l.b16 %v191
    %v201 = vunpack.c.l.b16 %v192
    %v202 = vunpack.c.l.b16 %v193
    %v203 = vpack.c.b16 %v200, %v199
    %v204 = vpack.c.b16 %v202, %v201
    %v208 = vsel %vm120, %v189, 0
    %210 = vmatpush.bf16.msra.mxu0 0
    %211 = vmatpush.bf16.msra.mxu0 0
    %212 = vmatpush.bf16.msra.mxu0 0
    %213 = vmatpush.bf16.msra.mxu0 0
    %214 = vmatpush.bf16.msra.mxu0 0
    %215 = vmatpush.bf16.msra.mxu0 0
    %216 = vmatpush.bf16.msra.mxu0 %v204
    %217 = vmatpush.bf16.msra.mxu0 %v203
    %218 = vmatmul.bf16.gmra.mxu0 %v208
    %v219 = vpop.f32.mrf.mxu0
    %v220 = vadd.f32 %v194, %v219
    %v221 = vpop.f32.mrf.mxu0
    %v222 = vadd.f32 %v194, %v221
    %223 = vdwg.mxu0
    %226 = vrot.lane.b32.xlu0 %v220, 96
    %v227 = vpop.permute.xlu0 %226
    %228 = vrot.lane.b32.xlu0 %v222, 96
    %v229 = vpop.permute.xlu0 %228
    %v230 = vsel %vm181, %v220, 0
    %v232 = vsel %vm181, %v222, 0
    %v234 = vsel %vm181, %v227, 0
    %v236 = vsel %vm181, %v229, 0
    %238 = vmatpush.xpose.msra.mxu0 0.0
    %239 = vmatpush.xpose.msra.mxu0 0.0
    %240 = vmatpush.xpose.msra.mxu0 0.0
    %241 = vmatpush.xpose.msra.mxu0 0.0
    %242 = vmatpush.xpose.msra.mxu0 0.0
    %243 = vmatpush.xpose.msra.mxu0 0.0
    %244 = vmatpush.xpose.msra.mxu0 0.0
    %245 = vmatpush.xpose.msra.mxu0 0.0
    %246 = vmatpush.xpose.msra.mxu0 0.0
    %247 = vmatpush.xpose.msra.mxu0 0.0
    %248 = vmatpush.xpose.msra.mxu0 0.0
    %249 = vmatpush.xpose.msra.mxu0 0.0
    %250 = vmatpush.xpose.msra.mxu0 0.0
    %251 = vmatpush.xpose.msra.mxu0 0.0
    %252 = vmatpush.xpose.msra.mxu0 %v236
    %253 = vmatpush.xpose.msra.mxu0 %v234
    %254 = vmatmul.f32.gmra.mxu0 %v230
    %v255 = vpop.f32.mrf.mxu0
    %v256 = vadd.f32 0.0, %v255
    %257 = vmatmul.f32.gmra.mxu0 %v232
    %v258 = vpop.f32.mrf.mxu0
    %v259 = vadd.f32 0.0, %v258
    %260 = vdwg.mxu0
    %v261 = vmul.f32 %v256, 0.35355338
    %v262 = vmul.f32 %v259, 0.35355338
    %v263 = vadd.f32 %v261, %v182
    %v264 = vadd.f32 %v262, %v188
    %vm265 = vcmask 130048
    %v266 = vsel %vm265, %v263, -inf
    %267 = vmax.xlane.f32.xlu0 %v266
    %v268 = vpop.xlane.xlu0 %267
    %v269 = vsel %vm265, %v264, -inf
    %270 = vmax.xlane.f32.xlu0 %v269
    %v271 = vpop.xlane.xlu0 %270
    %v272 = vsub.f32 %v263, %v268
    %v273 = vsub.f32 %v264, %v271
    %v274 = vmul.f32 %v272, 1.442695
    %v275 = vpow.pop %v274
    %v276 = vmul.f32 %v273, 1.442695
    %v277 = vpow.pop %v276
    %v278 = vsel %vm265, %v275, 0.0
    %279 = vadd.xlane.f32.xlu0 %v278
    %v280 = vpop.xlane.xlu0 %279
    %v281 = vsel %vm265, %v277, 0.0
    %282 = vadd.xlane.f32.xlu0 %v281
    %v283 = vpop.xlane.xlu0 %282
    %v284 = vrcp.pop %v280
    %v285 = vmul.f32 %v280, %v284
    %v286 = vsub.f32 1.0, %v285
    %v287 = vmul.f32 %v284, %v286
    %v288 = vadd.f32 %v284, %v287
    %vm289 = vweird.f32 %v280
    %vm290 = vweird.f32 %v284
    %vm291 = vmor %vm289, %vm290
    %v292 = vsel %vm291, %v284, %v288
    %v293 = vand.u32 2147483647, %v280
    %vm294 = vcmp.eq.f32.partialorder %v293, 8.507059e+37
    %v295 = vand.u32 %v280, 2147483648
    %v296 = vor.u32 1.1754944e-38, %v295
    %v297 = vsel %vm294, %v296, %v292
    %v298 = vmul.f32 %v275, %v297
    %v299 = vrcp.pop %v283
    %v300 = vmul.f32 %v283, %v299
    %v301 = vsub.f32 1.0, %v300
    %v302 = vmul.f32 %v299, %v301
    %v303 = vadd.f32 %v299, %v302
    %vm304 = vweird.f32 %v283
    %vm305 = vweird.f32 %v299
    %vm306 = vmor %vm304, %vm305
    %v307 = vsel %vm306, %v299, %v303
    %v308 = vand.u32 2147483647, %v283
    %vm309 = vcmp.eq.f32.partialorder %v308, 8.507059e+37
    %v310 = vand.u32 %v283, 2147483648
    %v311 = vor.u32 1.1754944e-38, %v310
    %v312 = vsel %vm309, %v311, %v307
    %v313 = vmul.f32 %v277, %v312
    %314 = vrot.lane.b32.xlu0 %v220, 64
    %v315 = vpop.permute.xlu0 %314
    %316 = vrot.lane.b32.xlu0 %v222, 64
    %v317 = vpop.permute.xlu0 %316
    %v321 = vsel %vm265, %v298, 0
    %v324 = vsel %vm265, %v313, 0
    %326 = vmatpush.msra.mxu0 0.0
    %327 = vmatpush.msra.mxu0 0.0
    %328 = vmatpush.msra.mxu0 0.0
    %329 = vmatpush.msra.mxu0 0.0
    %330 = vmatpush.msra.mxu0 0.0
    %331 = vmatpush.msra.mxu0 0.0
    %332 = vmatpush.msra.mxu0 0.0
    %333 = vmatpush.msra.mxu0 0.0
    %334 = vmatpush.msra.mxu0 0.0
    %335 = vmatpush.msra.mxu0 0.0
    %336 = vmatpush.msra.mxu0 0.0
    %337 = vmatpush.msra.mxu0 0.0
    %338 = vmatpush.msra.mxu0 0.0
    %339 = vmatpush.msra.mxu0 0.0
    %340 = vmatpush.msra.mxu0 %v317
    %341 = vmatpush.msra.mxu0 %v315
    %342 = vmatmul.f32.gmra.mxu0 %v321
    %v343 = vpop.f32.mrf.mxu0
    %v344 = vadd.f32 0.0, %v343
    %345 = vmatmul.f32.gmra.mxu0 %v324
    %v346 = vpop.f32.mrf.mxu0
    %v347 = vadd.f32 0.0, %v346
    %348 = vdwg.mxu0
    %349 = vrot.lane.b32.xlu0 %v220, 120
    %v350 = vpop.permute.xlu0 %349
    %351 = vrot.lane.b32.xlu0 %v222, 120
    %v352 = vpop.permute.xlu0 %351
    %353 = vrot.lane.b32.xlu0 %v220, 88
    %v354 = vpop.permute.xlu0 %353
    %355 = vrot.lane.b32.xlu0 %v222, 88
    %v356 = vpop.permute.xlu0 %355
    %v357 = vsel %vm181, %v350, 0
    %v359 = vsel %vm181, %v352, 0
    %v361 = vsel %vm181, %v354, 0
    %v363 = vsel %vm181, %v356, 0
    %365 = vmatpush.xpose.msra.mxu0 0.0
    %366 = vmatpush.xpose.msra.mxu0 0.0
    %367 = vmatpush.xpose.msra.mxu0 0.0
    %368 = vmatpush.xpose.msra.mxu0 0.0
    %369 = vmatpush.xpose.msra.mxu0 0.0
    %370 = vmatpush.xpose.msra.mxu0 0.0
    %371 = vmatpush.xpose.msra.mxu0 0.0
    %372 = vmatpush.xpose.msra.mxu0 0.0
    %373 = vmatpush.xpose.msra.mxu0 0.0
    %374 = vmatpush.xpose.msra.mxu0 0.0
    %375 = vmatpush.xpose.msra.mxu0 0.0
    %376 = vmatpush.xpose.msra.mxu0 0.0
    %377 = vmatpush.xpose.msra.mxu0 0.0
    %378 = vmatpush.xpose.msra.mxu0 0.0
    %379 = vmatpush.xpose.msra.mxu0 %v363
    %380 = vmatpush.xpose.msra.mxu0 %v361
    %381 = vmatmul.f32.gmra.mxu0 %v357
    %v382 = vpop.f32.mrf.mxu0
    %v383 = vadd.f32 0.0, %v382
    %384 = vmatmul.f32.gmra.mxu0 %v359
    %v385 = vpop.f32.mrf.mxu0
    %v386 = vadd.f32 0.0, %v385
    %387 = vdwg.mxu0
    %v388 = vmul.f32 %v383, 0.35355338
    %v389 = vmul.f32 %v386, 0.35355338
    %v390 = vadd.f32 %v388, %v182
    %v391 = vadd.f32 %v389, %v188
    %v392 = vsel %vm265, %v390, -inf
    %393 = vmax.xlane.f32.xlu0 %v392
    %v394 = vpop.xlane.xlu0 %393
    %v395 = vsel %vm265, %v391, -inf
    %396 = vmax.xlane.f32.xlu0 %v395
    %v397 = vpop.xlane.xlu0 %396
    %v398 = vsub.f32 %v390, %v394
    %v399 = vsub.f32 %v391, %v397
    %v400 = vmul.f32 %v398, 1.442695
    %v401 = vpow.pop %v400
    %v402 = vmul.f32 %v399, 1.442695
    %v403 = vpow.pop %v402
    %v404 = vsel %vm265, %v401, 0.0
    %405 = vadd.xlane.f32.xlu0 %v404
    %v406 = vpop.xlane.xlu0 %405
    %v407 = vsel %vm265, %v403, 0.0
    %408 = vadd.xlane.f32.xlu0 %v407
    %v409 = vpop.xlane.xlu0 %408
    %v410 = vrcp.pop %v406
    %v411 = vmul.f32 %v406, %v410
    %v412 = vsub.f32 1.0, %v411
    %v413 = vmul.f32 %v410, %v412
    %v414 = vadd.f32 %v410, %v413
    %vm415 = vweird.f32 %v406
    %vm416 = vweird.f32 %v410
    %vm417 = vmor %vm415, %vm416
    %v418 = vsel %vm417, %v410, %v414
    %v419 = vand.u32 2147483647, %v406
    %vm420 = vcmp.eq.f32.partialorder %v419, 8.507059e+37
    %v421 = vand.u32 %v406, 2147483648
    %v422 = vor.u32 1.1754944e-38, %v421
    %v423 = vsel %vm420, %v422, %v418
    %v424 = vmul.f32 %v401, %v423
    %v425 = vrcp.pop %v409
    %v426 = vmul.f32 %v409, %v425
    %v427 = vsub.f32 1.0, %v426
    %v428 = vmul.f32 %v425, %v427
    %v429 = vadd.f32 %v425, %v428
    %vm430 = vweird.f32 %v409
    %vm431 = vweird.f32 %v425
    %vm432 = vmor %vm430, %vm431
    %v433 = vsel %vm432, %v425, %v429
    %v434 = vand.u32 2147483647, %v409
    %vm435 = vcmp.eq.f32.partialorder %v434, 8.507059e+37
    %v436 = vand.u32 %v409, 2147483648
    %v437 = vor.u32 1.1754944e-38, %v436
    %v438 = vsel %vm435, %v437, %v433
    %v439 = vmul.f32 %v403, %v438
    %440 = vrot.lane.b32.xlu0 %v220, 56
    %v441 = vpop.permute.xlu0 %440
    %442 = vrot.lane.b32.xlu0 %v222, 56
    %v443 = vpop.permute.xlu0 %442
    %v447 = vsel %vm265, %v424, 0
    %v450 = vsel %vm265, %v439, 0
    %452 = vmatpush.msra.mxu0 0.0
    %453 = vmatpush.msra.mxu0 0.0
    %454 = vmatpush.msra.mxu0 0.0
    %455 = vmatpush.msra.mxu0 0.0
    %456 = vmatpush.msra.mxu0 0.0
    %457 = vmatpush.msra.mxu0 0.0
    %458 = vmatpush.msra.mxu0 0.0
    %459 = vmatpush.msra.mxu0 0.0
    %460 = vmatpush.msra.mxu0 0.0
    %461 = vmatpush.msra.mxu0 0.0
    %462 = vmatpush.msra.mxu0 0.0
    %463 = vmatpush.msra.mxu0 0.0
    %464 = vmatpush.msra.mxu0 0.0
    %465 = vmatpush.msra.mxu0 0.0
    %466 = vmatpush.msra.mxu0 %v443
    %467 = vmatpush.msra.mxu0 %v441
    %468 = vmatmul.f32.gmra.mxu0 %v447
    %v469 = vpop.f32.mrf.mxu0
    %v470 = vadd.f32 0.0, %v469
    %471 = vmatmul.f32.gmra.mxu0 %v450
    %v472 = vpop.f32.mrf.mxu0
    %v473 = vadd.f32 0.0, %v472
    %474 = vdwg.mxu0
    %475 = vrot.lane.b32.xlu0 %v220, 112
    %v476 = vpop.permute.xlu0 %475
    %477 = vrot.lane.b32.xlu0 %v222, 112
    %v478 = vpop.permute.xlu0 %477
    %479 = vrot.lane.b32.xlu0 %v220, 80
    %v480 = vpop.permute.xlu0 %479
    %481 = vrot.lane.b32.xlu0 %v222, 80
    %v482 = vpop.permute.xlu0 %481
    %v483 = vsel %vm181, %v476, 0
    %v485 = vsel %vm181, %v478, 0
    %v487 = vsel %vm181, %v480, 0
    %v489 = vsel %vm181, %v482, 0
    %491 = vmatpush.xpose.msra.mxu0 0.0
    %492 = vmatpush.xpose.msra.mxu0 0.0
    %493 = vmatpush.xpose.msra.mxu0 0.0
    %494 = vmatpush.xpose.msra.mxu0 0.0
    %495 = vmatpush.xpose.msra.mxu0 0.0
    %496 = vmatpush.xpose.msra.mxu0 0.0
    %497 = vmatpush.xpose.msra.mxu0 0.0
    %498 = vmatpush.xpose.msra.mxu0 0.0
    %499 = vmatpush.xpose.msra.mxu0 0.0
    %500 = vmatpush.xpose.msra.mxu0 0.0
    %501 = vmatpush.xpose.msra.mxu0 0.0
    %502 = vmatpush.xpose.msra.mxu0 0.0
    %503 = vmatpush.xpose.msra.mxu0 0.0
    %504 = vmatpush.xpose.msra.mxu0 0.0
    %505 = vmatpush.xpose.msra.mxu0 %v489
    %506 = vmatpush.xpose.msra.mxu0 %v487
    %507 = vmatmul.f32.gmra.mxu0 %v483
    %v508 = vpop.f32.mrf.mxu0
    %v509 = vadd.f32 0.0, %v508
    %510 = vmatmul.f32.gmra.mxu0 %v485
    %v511 = vpop.f32.mrf.mxu0
    %v512 = vadd.f32 0.0, %v511
    %513 = vdwg.mxu0
    %v514 = vmul.f32 %v509, 0.35355338
    %v515 = vmul.f32 %v512, 0.35355338
    %v516 = vadd.f32 %v514, %v182
    %v517 = vadd.f32 %v515, %v188
    %v518 = vsel %vm265, %v516, -inf
    %519 = vmax.xlane.f32.xlu0 %v518
    %v520 = vpop.xlane.xlu0 %519
    %v521 = vsel %vm265, %v517, -inf
    %522 = vmax.xlane.f32.xlu0 %v521
    %v523 = vpop.xlane.xlu0 %522
    %v524 = vsub.f32 %v516, %v520
    %v525 = vsub.f32 %v517, %v523
    %v526 = vmul.f32 %v524, 1.442695
    %v527 = vpow.pop %v526
    %v528 = vmul.f32 %v525, 1.442695
    %v529 = vpow.pop %v528
    %v530 = vsel %vm265, %v527, 0.0
    %531 = vadd.xlane.f32.xlu0 %v530
    %v532 = vpop.xlane.xlu0 %531
    %v533 = vsel %vm265, %v529, 0.0
    %534 = vadd.xlane.f32.xlu0 %v533
    %v535 = vpop.xlane.xlu0 %534
    %v536 = vrcp.pop %v532
    %v537 = vmul.f32 %v532, %v536
    %v538 = vsub.f32 1.0, %v537
    %v539 = vmul.f32 %v536, %v538
    %v540 = vadd.f32 %v536, %v539
    %vm541 = vweird.f32 %v532
    %vm542 = vweird.f32 %v536
    %vm543 = vmor %vm541, %vm542
    %v544 = vsel %vm543, %v536, %v540
    %v545 = vand.u32 2147483647, %v532
    %vm546 = vcmp.eq.f32.partialorder %v545, 8.507059e+37
    %v547 = vand.u32 %v532, 2147483648
    %v548 = vor.u32 1.1754944e-38, %v547
    %v549 = vsel %vm546, %v548, %v544
    %v550 = vmul.f32 %v527, %v549
    %v551 = vrcp.pop %v535
    %v552 = vmul.f32 %v535, %v551
    %v553 = vsub.f32 1.0, %v552
    %v554 = vmul.f32 %v551, %v553
    %v555 = vadd.f32 %v551, %v554
    %vm556 = vweird.f32 %v535
    %vm557 = vweird.f32 %v551
    %vm558 = vmor %vm556, %vm557
    %v559 = vsel %vm558, %v551, %v555
    %v560 = vand.u32 2147483647, %v535
    %vm561 = vcmp.eq.f32.partialorder %v560, 8.507059e+37
    %v562 = vand.u32 %v535, 2147483648
    %v563 = vor.u32 1.1754944e-38, %v562
    %v564 = vsel %vm561, %v563, %v559
    %v565 = vmul.f32 %v529, %v564
    %566 = vrot.lane.b32.xlu0 %v220, 48
    %v567 = vpop.permute.xlu0 %566
    %568 = vrot.lane.b32.xlu0 %v222, 48
    %v569 = vpop.permute.xlu0 %568
    %v573 = vsel %vm265, %v550, 0
    %v576 = vsel %vm265, %v565, 0
    %578 = vmatpush.msra.mxu0 0.0
    %579 = vmatpush.msra.mxu0 0.0
    %580 = vmatpush.msra.mxu0 0.0
    %581 = vmatpush.msra.mxu0 0.0
    %582 = vmatpush.msra.mxu0 0.0
    %583 = vmatpush.msra.mxu0 0.0
    %584 = vmatpush.msra.mxu0 0.0
    %585 = vmatpush.msra.mxu0 0.0
    %586 = vmatpush.msra.mxu0 0.0
    %587 = vmatpush.msra.mxu0 0.0
    %588 = vmatpush.msra.mxu0 0.0
    %589 = vmatpush.msra.mxu0 0.0
    %590 = vmatpush.msra.mxu0 0.0
    %591 = vmatpush.msra.mxu0 0.0
    %592 = vmatpush.msra.mxu0 %v569
    %593 = vmatpush.msra.mxu0 %v567
    %594 = vmatmul.f32.gmra.mxu0 %v573
    %v595 = vpop.f32.mrf.mxu0
    %v596 = vadd.f32 0.0, %v595
    %597 = vmatmul.f32.gmra.mxu0 %v576
    %v598 = vpop.f32.mrf.mxu0
    %v599 = vadd.f32 0.0, %v598
    %600 = vdwg.mxu0
    %601 = vrot.lane.b32.xlu0 %v220, 104
    %v602 = vpop.permute.xlu0 %601
    %603 = vrot.lane.b32.xlu0 %v222, 104
    %v604 = vpop.permute.xlu0 %603
    %605 = vrot.lane.b32.xlu0 %v220, 72
    %v606 = vpop.permute.xlu0 %605
    %607 = vrot.lane.b32.xlu0 %v222, 72
    %v608 = vpop.permute.xlu0 %607
    %v609 = vsel %vm181, %v602, 0
    %v611 = vsel %vm181, %v604, 0
    %v613 = vsel %vm181, %v606, 0
    %v615 = vsel %vm181, %v608, 0
    %617 = vmatpush.xpose.msra.mxu0 0.0
    %618 = vmatpush.xpose.msra.mxu0 0.0
    %619 = vmatpush.xpose.msra.mxu0 0.0
    %620 = vmatpush.xpose.msra.mxu0 0.0
    %621 = vmatpush.xpose.msra.mxu0 0.0
    %622 = vmatpush.xpose.msra.mxu0 0.0
    %623 = vmatpush.xpose.msra.mxu0 0.0
    %624 = vmatpush.xpose.msra.mxu0 0.0
    %625 = vmatpush.xpose.msra.mxu0 0.0
    %626 = vmatpush.xpose.msra.mxu0 0.0
    %627 = vmatpush.xpose.msra.mxu0 0.0
    %628 = vmatpush.xpose.msra.mxu0 0.0
    %629 = vmatpush.xpose.msra.mxu0 0.0
    %630 = vmatpush.xpose.msra.mxu0 0.0
    %631 = vmatpush.xpose.msra.mxu0 %v615
    %632 = vmatpush.xpose.msra.mxu0 %v613
    %633 = vmatmul.f32.gmra.mxu0 %v609
    %v634 = vpop.f32.mrf.mxu0
    %v635 = vadd.f32 0.0, %v634
    %636 = vmatmul.f32.gmra.mxu0 %v611
    %v637 = vpop.f32.mrf.mxu0
    %v638 = vadd.f32 0.0, %v637
    %639 = vdwg.mxu0
    %v640 = vmul.f32 %v635, 0.35355338
    %v641 = vmul.f32 %v638, 0.35355338
    %v642 = vadd.f32 %v640, %v182
    %v643 = vadd.f32 %v641, %v188
    %v644 = vsel %vm265, %v642, -inf
    %645 = vmax.xlane.f32.xlu0 %v644
    %v646 = vpop.xlane.xlu0 %645
    %v647 = vsel %vm265, %v643, -inf
    %648 = vmax.xlane.f32.xlu0 %v647
    %v649 = vpop.xlane.xlu0 %648
    %v650 = vsub.f32 %v642, %v646
    %v651 = vsub.f32 %v643, %v649
    %v652 = vmul.f32 %v650, 1.442695
    %v653 = vpow.pop %v652
    %v654 = vmul.f32 %v651, 1.442695
    %v655 = vpow.pop %v654
    %v656 = vsel %vm265, %v653, 0.0
    %657 = vadd.xlane.f32.xlu0 %v656
    %v658 = vpop.xlane.xlu0 %657
    %v659 = vsel %vm265, %v655, 0.0
    %660 = vadd.xlane.f32.xlu0 %v659
    %v661 = vpop.xlane.xlu0 %660
    %v662 = vrcp.pop %v658
    %v663 = vmul.f32 %v658, %v662
    %v664 = vsub.f32 1.0, %v663
    %v665 = vmul.f32 %v662, %v664
    %v666 = vadd.f32 %v662, %v665
    %vm667 = vweird.f32 %v658
    %vm668 = vweird.f32 %v662
    %vm669 = vmor %vm667, %vm668
    %v670 = vsel %vm669, %v662, %v666
    %v671 = vand.u32 2147483647, %v658
    %vm672 = vcmp.eq.f32.partialorder %v671, 8.507059e+37
    %v673 = vand.u32 %v658, 2147483648
    %v674 = vor.u32 1.1754944e-38, %v673
    %v675 = vsel %vm672, %v674, %v670
    %v676 = vmul.f32 %v653, %v675
    %v677 = vrcp.pop %v661
    %v678 = vmul.f32 %v661, %v677
    %v679 = vsub.f32 1.0, %v678
    %v680 = vmul.f32 %v677, %v679
    %v681 = vadd.f32 %v677, %v680
    %vm682 = vweird.f32 %v661
    %vm683 = vweird.f32 %v677
    %vm684 = vmor %vm682, %vm683
    %v685 = vsel %vm684, %v677, %v681
    %v686 = vand.u32 2147483647, %v661
    %vm687 = vcmp.eq.f32.partialorder %v686, 8.507059e+37
    %v688 = vand.u32 %v661, 2147483648
    %v689 = vor.u32 1.1754944e-38, %v688
    %v690 = vsel %vm687, %v689, %v685
    %v691 = vmul.f32 %v655, %v690
    %692 = vrot.lane.b32.xlu0 %v220, 40
    %v693 = vpop.permute.xlu0 %692
    %694 = vrot.lane.b32.xlu0 %v222, 40
    %v695 = vpop.permute.xlu0 %694
    %v699 = vsel %vm265, %v676, 0
    %v702 = vsel %vm265, %v691, 0
    %704 = vmatpush.msra.mxu0 0.0
    %705 = vmatpush.msra.mxu0 0.0
    %706 = vmatpush.msra.mxu0 0.0
    %707 = vmatpush.msra.mxu0 0.0
    %708 = vmatpush.msra.mxu0 0.0
    %709 = vmatpush.msra.mxu0 0.0
    %710 = vmatpush.msra.mxu0 0.0
    %711 = vmatpush.msra.mxu0 0.0
    %712 = vmatpush.msra.mxu0 0.0
    %713 = vmatpush.msra.mxu0 0.0
    %714 = vmatpush.msra.mxu0 0.0
    %715 = vmatpush.msra.mxu0 0.0
    %716 = vmatpush.msra.mxu0 0.0
    %717 = vmatpush.msra.mxu0 0.0
    %718 = vmatpush.msra.mxu0 %v695
    %719 = vmatpush.msra.mxu0 %v693
    %720 = vmatmul.f32.gmra.mxu0 %v699
    %v721 = vpop.f32.mrf.mxu0
    %v722 = vadd.f32 0.0, %v721
    %723 = vmatmul.f32.gmra.mxu0 %v702
    %v724 = vpop.f32.mrf.mxu0
    %v725 = vadd.f32 0.0, %v724
    %726 = vdwg.mxu0
    %729 = vrot.lane.b32.xlu0 %v470, 8
    %v730 = vpop.permute.xlu0 %729
    %731 = vrot.lane.b32.xlu0 %v473, 8
    %v732 = vpop.permute.xlu0 %731
    %737 = vrot.lane.b32.xlu0 %v596, 16
    %v738 = vpop.permute.xlu0 %737
    %739 = vrot.lane.b32.xlu0 %v599, 16
    %v740 = vpop.permute.xlu0 %739
    %745 = vrot.lane.b32.xlu0 %v722, 24
    %v746 = vpop.permute.xlu0 %745
    %747 = vrot.lane.b32.xlu0 %v725, 24
    %v748 = vpop.permute.xlu0 %747
    %v751 = vsel %vm181, %v344, %v730
    %v752 = vsel %vm181, %v347, %v732
    %v753 = vsel %vm265, %v751, %v738
    %v754 = vsel %vm265, %v752, %v740
    %vm755 = vcmask 195584
    %v756 = vsel %vm755, %v753, %v746
    %v757 = vsel %vm755, %v754, %v748
    %v758 = vpack.c.bf16 %v757, %v756
    %v759 = vld [vmem:[%s5] sm:$0xf]
    %v760 = vld [vmem:[%s5 + $0x4] sm:$0xf]
    %v761 = vld [vmem:[%s5 + $0x8] sm:$0xf]
    %v762 = vld [vmem:[%s5 + $0xc] sm:$0xf]
    %v763 = vperm.slane %v42, 4
    %v768 = vunpack.c.l.b16 %v759
    %v769 = vunpack.c.l.b16 %v760
    %v770 = vunpack.c.l.b16 %v761
    %v771 = vunpack.c.l.b16 %v762
    %v772 = vpack.c.b16 %v769, %v768
    %v773 = vpack.c.b16 %v771, %v770
    %v777 = vsel %vm120, %v758, 0
    %779 = vmatpush.bf16.msra.mxu0 0
    %780 = vmatpush.bf16.msra.mxu0 0
    %781 = vmatpush.bf16.msra.mxu0 0
    %782 = vmatpush.bf16.msra.mxu0 0
    %783 = vmatpush.bf16.msra.mxu0 0
    %784 = vmatpush.bf16.msra.mxu0 0
    %785 = vmatpush.bf16.msra.mxu0 %v773
    %786 = vmatpush.bf16.msra.mxu0 %v772
    %787 = vmatmul.bf16.gmra.mxu0 %v777
    %v788 = vpop.f32.mrf.mxu0
    %v789 = vadd.f32 %v763, %v788
    %v790 = vpop.f32.mrf.mxu0
    %v791 = vadd.f32 %v763, %v790
    %792 = vdwg.mxu0
    %v793 = vadd.f32 %v176, %v789
    %v794 = vadd.f32 %v177, %v791
    %v795 = vsel %vm120, %v793, 0.0
    %796 = vadd.xlane.f32.xlu0 %v795
    %v797 = vpop.xlane.xlu0 %796
    %v798 = vsel %vm120, %v794, 0.0
    %799 = vadd.xlane.f32.xlu0 %v798
    %v800 = vpop.xlane.xlu0 %799
    %v801 = vmul.f32 %v797, %v133
    %v802 = vmul.f32 %v800, %v133
    %v803 = vsub.f32 %v793, %v801
    %v804 = vsub.f32 %v794, %v802
    %v805 = vmul.f32 %v803, %v803
    %v806 = vmul.f32 %v804, %v804
    %v807 = vsel %vm120, %v805, 0.0
    %808 = vadd.xlane.f32.xlu0 %v807
    %v809 = vpop.xlane.xlu0 %808
    %v810 = vsel %vm120, %v806, 0.0
    %811 = vadd.xlane.f32.xlu0 %v810
    %v812 = vpop.xlane.xlu0 %811
    %v813 = vmul.f32 %v809, %v133
    %v814 = vmul.f32 %v812, %v133
    %v815 = vadd.f32 %v813, 1e-12
    %v816 = vadd.f32 %v814, 1e-12
    %v817 = vrsqrt.pop %v815
    %v818 = vmul.f32 %v817, %v815
    %v819 = vmul.f32 %v818, %v817
    %v820 = vmul.f32 0.5, %v819
    %v821 = vsub.f32 1.5, %v820
    %v822 = vmul.f32 %v817, %v821
    %vm823 = vweird.f32 %v815
    %vm824 = vweird.f32 %v817
    %vm825 = vmor %vm823, %vm824
    %v826 = vsel %vm825, %v817, %v822
    %v827 = vrsqrt.pop %v816
    %v828 = vmul.f32 %v827, %v816
    %v829 = vmul.f32 %v828, %v827
    %v830 = vmul.f32 0.5, %v829
    %v831 = vsub.f32 1.5, %v830
    %v832 = vmul.f32 %v827, %v831
    %vm833 = vweird.f32 %v816
    %vm834 = vweird.f32 %v827
    %vm835 = vmor %vm833, %vm834
    %v836 = vsel %vm835, %v827, %v832
    %v837 = vmul.f32 %v803, %v826
    %v838 = vmul.f32 %v804, %v836
    %v839 = vperm.slane %v42, 0
    %v840 = vmul.f32 %v837, %v839
    %v841 = vmul.f32 %v838, %v839
    %v842 = vperm.slane %v42, 1
    %v843 = vadd.f32 %v840, %v842
    %v844 = vadd.f32 %v841, %v842
    %v845 = vpack.c.bf16 %v844, %v843
    %v846 = vld [vmem:[%s6] sm:$0xf]
    %v847 = vld [vmem:[%s6 + $0x4] sm:$0xf]
    %v848 = vld [vmem:[%s6 + $0x8] sm:$0xf]
    %v849 = vld [vmem:[%s6 + $0xc] sm:$0xf]
    %v850 = vperm.slane %v44, 2
    %v855 = vunpack.c.l.b16 %v846
    %v856 = vunpack.c.l.b16 %v847
    %v857 = vunpack.c.l.b16 %v848
    %v858 = vunpack.c.l.b16 %v849
    %v859 = vpack.c.b16 %v856, %v855
    %v860 = vpack.c.b16 %v858, %v857
    %v864 = vsel %vm120, %v845, 0
    %866 = vmatpush.bf16.msra.mxu0 0
    %867 = vmatpush.bf16.msra.mxu0 0
    %868 = vmatpush.bf16.msra.mxu0 0
    %869 = vmatpush.bf16.msra.mxu0 0
    %870 = vmatpush.bf16.msra.mxu0 0
    %871 = vmatpush.bf16.msra.mxu0 0
    %872 = vmatpush.bf16.msra.mxu0 %v860
    %873 = vmatpush.bf16.msra.mxu0 %v859
    %874 = vmatmul.bf16.gmra.mxu0 %v864
    %v875 = vpop.f32.mrf.mxu0
    %v876 = vadd.f32 %v850, %v875
    %v877 = vpop.f32.mrf.mxu0
    %v878 = vadd.f32 %v850, %v877
    %879 = vdwg.mxu0
    %v880 = vmul.f32 %v876, %v876
    %v881 = vmul.f32 %v878, %v878
    %v882 = vmul.f32 %v876, %v880
    %v883 = vmul.f32 %v878, %v881
    %v884 = vmul.f32 %v882, 0.044715
    %v885 = vmul.f32 %v883, 0.044715
    %v886 = vadd.f32 %v876, %v884
    %v887 = vadd.f32 %v878, %v885
    %v888 = vmul.f32 %v886, 0.7978846
    %v889 = vmul.f32 %v887, 0.7978846
    %v890 = vtanh.pop %v888
    %v891 = vtanh.pop %v889
    %v892 = vadd.f32 %v890, 1.0
    %v893 = vadd.f32 %v891, 1.0
    %v894 = vmul.f32 %v892, 0.5
    %v895 = vmul.f32 %v893, 0.5
    %v896 = vmul.f32 %v876, %v894
    %v897 = vmul.f32 %v878, %v895
    %v898 = vpack.c.bf16 %v897, %v896
    %v899 = vld [vmem:[%s7] sm:$0xf]
    %v900 = vld [vmem:[%s7 + $0x4] sm:$0xf]
    %v901 = vld [vmem:[%s7 + $0x8] sm:$0xf]
    %v902 = vld [vmem:[%s7 + $0xc] sm:$0xf]
    %v903 = vld [vmem:[%s7 + $0x10] sm:$0xf]
    %v904 = vld [vmem:[%s7 + $0x14] sm:$0xf]
    %v905 = vld [vmem:[%s7 + $0x18] sm:$0xf]
    %v906 = vld [vmem:[%s7 + $0x1c] sm:$0xf]
    %v907 = vperm.slane %v42, 5
    %v916 = vunpack.c.l.b16 %v899
    %v917 = vunpack.c.l.b16 %v900
    %v918 = vunpack.c.l.b16 %v901
    %v919 = vunpack.c.l.b16 %v902
    %v920 = vunpack.c.l.b16 %v903
    %v921 = vunpack.c.l.b16 %v904
    %v922 = vunpack.c.l.b16 %v905
    %v923 = vunpack.c.l.b16 %v906
    %v924 = vpack.c.b16 %v917, %v916
    %v925 = vpack.c.b16 %v919, %v918
    %v926 = vpack.c.b16 %v921, %v920
    %v927 = vpack.c.b16 %v923, %v922
    %vm932 = vcmask 523264
    %v934 = vsel %vm932, %v898, 0
    %936 = vmatpush.bf16.msra.mxu0 0
    %937 = vmatpush.bf16.msra.mxu0 0
    %938 = vmatpush.bf16.msra.mxu0 0
    %939 = vmatpush.bf16.msra.mxu0 0
    %940 = vmatpush.bf16.msra.mxu0 %v927
    %941 = vmatpush.bf16.msra.mxu0 %v926
    %942 = vmatpush.bf16.msra.mxu0 %v925
    %943 = vmatpush.bf16.msra.mxu0 %v924
    %944 = vmatmul.bf16.gmra.mxu0 %v934
    %v945 = vpop.f32.mrf.mxu0
    %v946 = vadd.f32 %v907, %v945
    %v947 = vpop.f32.mrf.mxu0
    %v948 = vadd.f32 %v907, %v947
    %949 = vdwg.mxu0
    %v950 = vadd.f32 %v843, %v946
    %v951 = vadd.f32 %v844, %v948
    %v952 = vsel %vm120, %v950, 0.0
    %953 = vadd.xlane.f32.xlu0 %v952
    %v954 = vpop.xlane.xlu0 %953
    %v955 = vsel %vm120, %v951, 0.0
    %956 = vadd.xlane.f32.xlu0 %v955
    %v957 = vpop.xlane.xlu0 %956
    %v958 = vmul.f32 %v954, %v133
    %v959 = vmul.f32 %v957, %v133
    %v960 = vsub.f32 %v950, %v958
    %v961 = vsub.f32 %v951, %v959
    %v962 = vmul.f32 %v960, %v960
    %v963 = vmul.f32 %v961, %v961
    %v964 = vsel %vm120, %v962, 0.0
    %965 = vadd.xlane.f32.xlu0 %v964
    %v966 = vpop.xlane.xlu0 %965
    %v967 = vsel %vm120, %v963, 0.0
    %968 = vadd.xlane.f32.xlu0 %v967
    %v969 = vpop.xlane.xlu0 %968
    %v970 = vmul.f32 %v966, %v133
    %v971 = vmul.f32 %v969, %v133
    %v972 = vadd.f32 %v970, 1e-12
    %v973 = vadd.f32 %v971, 1e-12
    %v974 = vrsqrt.pop %v972
    %v975 = vmul.f32 %v974, %v972
    %v976 = vmul.f32 %v975, %v974
    %v977 = vmul.f32 0.5, %v976
    %v978 = vsub.f32 1.5, %v977
    %v979 = vmul.f32 %v974, %v978
    %vm980 = vweird.f32 %v972
    %vm981 = vweird.f32 %v974
    %vm982 = vmor %vm980, %vm981
    %v983 = vsel %vm982, %v974, %v979
    %v984 = vrsqrt.pop %v973
    %v985 = vmul.f32 %v984, %v973
    %v986 = vmul.f32 %v985, %v984
    %v987 = vmul.f32 0.5, %v986
    %v988 = vsub.f32 1.5, %v987
    %v989 = vmul.f32 %v984, %v988
    %vm990 = vweird.f32 %v973
    %vm991 = vweird.f32 %v984
    %vm992 = vmor %vm990, %vm991
    %v993 = vsel %vm992, %v984, %v989
    %v994 = vmul.f32 %v960, %v983
    %v995 = vmul.f32 %v961, %v993
    %v996 = vperm.slane %v42, 2
    %v997 = vmul.f32 %v994, %v996
    %v998 = vmul.f32 %v995, %v996
    %v999 = vperm.slane %v42, 3
    %v1000 = vadd.f32 %v997, %v999
    %v1001 = vadd.f32 %v998, %v999
    %v1002 = vpack.c.bf16 %v1001, %v1000
    %s1003 = scalar_lea.vmem %s4, 16
    %v1004 = vld [vmem:[%s1003] sm:$0xf]
    %v1005 = vld [vmem:[%s1003 + $0x4] sm:$0xf]
    %v1006 = vld [vmem:[%s1003 + $0x8] sm:$0xf]
    %v1007 = vld [vmem:[%s1003 + $0xc] sm:$0xf]
    %v1008 = vperm.slane %v44, 1
    %v1013 = vunpack.c.l.b16 %v1004
    %v1014 = vunpack.c.l.b16 %v1005
    %v1015 = vunpack.c.l.b16 %v1006
    %v1016 = vunpack.c.l.b16 %v1007
    %v1017 = vpack.c.b16 %v1014, %v1013
    %v1018 = vpack.c.b16 %v1016, %v1015
    %v1022 = vsel %vm120, %v1002, 0
    %1024 = vmatpush.bf16.msra.mxu0 0
    %1025 = vmatpush.bf16.msra.mxu0 0
    %1026 = vmatpush.bf16.msra.mxu0 0
    %1027 = vmatpush.bf16.msra.mxu0 0
    %1028 = vmatpush.bf16.msra.mxu0 0
    %1029 = vmatpush.bf16.msra.mxu0 0
    %1030 = vmatpush.bf16.msra.mxu0 %v1018
    %1031 = vmatpush.bf16.msra.mxu0 %v1017
    %1032 = vmatmul.bf16.gmra.mxu0 %v1022
    %v1033 = vpop.f32.mrf.mxu0
    %v1034 = vadd.f32 %v1008, %v1033
    %v1035 = vpop.f32.mrf.mxu0
    %v1036 = vadd.f32 %v1008, %v1035
    %1037 = vdwg.mxu0
    %1040 = vrot.lane.b32.xlu0 %v1034, 96
    %v1041 = vpop.permute.xlu0 %1040
    %1042 = vrot.lane.b32.xlu0 %v1036, 96
    %v1043 = vpop.permute.xlu0 %1042
    %v1044 = vsel %vm181, %v1034, 0
    %v1046 = vsel %vm181, %v1036, 0
    %v1048 = vsel %vm181, %v1041, 0
    %v1050 = vsel %vm181, %v1043, 0
    %1052 = vmatpush.xpose.msra.mxu0 0.0
    %1053 = vmatpush.xpose.msra.mxu0 0.0
    %1054 = vmatpush.xpose.msra.mxu0 0.0
    %1055 = vmatpush.xpose.msra.mxu0 0.0
    %1056 = vmatpush.xpose.msra.mxu0 0.0
    %1057 = vmatpush.xpose.msra.mxu0 0.0
    %1058 = vmatpush.xpose.msra.mxu0 0.0
    %1059 = vmatpush.xpose.msra.mxu0 0.0
    %1060 = vmatpush.xpose.msra.mxu0 0.0
    %1061 = vmatpush.xpose.msra.mxu0 0.0
    %1062 = vmatpush.xpose.msra.mxu0 0.0
    %1063 = vmatpush.xpose.msra.mxu0 0.0
    %1064 = vmatpush.xpose.msra.mxu0 0.0
    %1065 = vmatpush.xpose.msra.mxu0 0.0
    %1066 = vmatpush.xpose.msra.mxu0 %v1050
    %1067 = vmatpush.xpose.msra.mxu0 %v1048
    %1068 = vmatmul.f32.gmra.mxu0 %v1044
    %v1069 = vpop.f32.mrf.mxu0
    %v1070 = vadd.f32 0.0, %v1069
    %1071 = vmatmul.f32.gmra.mxu0 %v1046
    %v1072 = vpop.f32.mrf.mxu0
    %v1073 = vadd.f32 0.0, %v1072
    %1074 = vdwg.mxu0
    %v1075 = vmul.f32 %v1070, 0.35355338
    %v1076 = vmul.f32 %v1073, 0.35355338
    %v1077 = vadd.f32 %v1075, %v182
    %v1078 = vadd.f32 %v1076, %v188
    %v1079 = vsel %vm265, %v1077, -inf
    %1080 = vmax.xlane.f32.xlu0 %v1079
    %v1081 = vpop.xlane.xlu0 %1080
    %v1082 = vsel %vm265, %v1078, -inf
    %1083 = vmax.xlane.f32.xlu0 %v1082
    %v1084 = vpop.xlane.xlu0 %1083
    %v1085 = vsub.f32 %v1077, %v1081
    %v1086 = vsub.f32 %v1078, %v1084
    %v1087 = vmul.f32 %v1085, 1.442695
    %v1088 = vpow.pop %v1087
    %v1089 = vmul.f32 %v1086, 1.442695
    %v1090 = vpow.pop %v1089
    %v1091 = vsel %vm265, %v1088, 0.0
    %1092 = vadd.xlane.f32.xlu0 %v1091
    %v1093 = vpop.xlane.xlu0 %1092
    %v1094 = vsel %vm265, %v1090, 0.0
    %1095 = vadd.xlane.f32.xlu0 %v1094
    %v1096 = vpop.xlane.xlu0 %1095
    %v1097 = vrcp.pop %v1093
    %v1098 = vmul.f32 %v1093, %v1097
    %v1099 = vsub.f32 1.0, %v1098
    %v1100 = vmul.f32 %v1097, %v1099
    %v1101 = vadd.f32 %v1097, %v1100
    %vm1102 = vweird.f32 %v1093
    %vm1103 = vweird.f32 %v1097
    %vm1104 = vmor %vm1102, %vm1103
    %v1105 = vsel %vm1104, %v1097, %v1101
    %v1106 = vand.u32 2147483647, %v1093
    %vm1107 = vcmp.eq.f32.partialorder %v1106, 8.507059e+37
    %v1108 = vand.u32 %v1093, 2147483648
    %v1109 = vor.u32 1.1754944e-38, %v1108
    %v1110 = vsel %vm1107, %v1109, %v1105
    %v1111 = vmul.f32 %v1088, %v1110
    %v1112 = vrcp.pop %v1096
    %v1113 = vmul.f32 %v1096, %v1112
    %v1114 = vsub.f32 1.0, %v1113
    %v1115 = vmul.f32 %v1112, %v1114
    %v1116 = vadd.f32 %v1112, %v1115
    %vm1117 = vweird.f32 %v1096
    %vm1118 = vweird.f32 %v1112
    %vm1119 = vmor %vm1117, %vm1118
    %v1120 = vsel %vm1119, %v1112, %v1116
    %v1121 = vand.u32 2147483647, %v1096
    %vm1122 = vcmp.eq.f32.partialorder %v1121, 8.507059e+37
    %v1123 = vand.u32 %v1096, 2147483648
    %v1124 = vor.u32 1.1754944e-38, %v1123
    %v1125 = vsel %vm1122, %v1124, %v1120
    %v1126 = vmul.f32 %v1090, %v1125
    %1127 = vrot.lane.b32.xlu0 %v1034, 64
    %v1128 = vpop.permute.xlu0 %1127
    %1129 = vrot.lane.b32.xlu0 %v1036, 64
    %v1130 = vpop.permute.xlu0 %1129
    %v1134 = vsel %vm265, %v1111, 0
    %v1137 = vsel %vm265, %v1126, 0
    %1139 = vmatpush.msra.mxu0 0.0
    %1140 = vmatpush.msra.mxu0 0.0
    %1141 = vmatpush.msra.mxu0 0.0
    %1142 = vmatpush.msra.mxu0 0.0
    %1143 = vmatpush.msra.mxu0 0.0
    %1144 = vmatpush.msra.mxu0 0.0
    %1145 = vmatpush.msra.mxu0 0.0
    %1146 = vmatpush.msra.mxu0 0.0
    %1147 = vmatpush.msra.mxu0 0.0
    %1148 = vmatpush.msra.mxu0 0.0
    %1149 = vmatpush.msra.mxu0 0.0
    %1150 = vmatpush.msra.mxu0 0.0
    %1151 = vmatpush.msra.mxu0 0.0
    %1152 = vmatpush.msra.mxu0 0.0
    %1153 = vmatpush.msra.mxu0 %v1130
    %1154 = vmatpush.msra.mxu0 %v1128
    %1155 = vmatmul.f32.gmra.mxu0 %v1134
    %v1156 = vpop.f32.mrf.mxu0
    %v1157 = vadd.f32 0.0, %v1156
    %1158 = vmatmul.f32.gmra.mxu0 %v1137
    %v1159 = vpop.f32.mrf.mxu0
    %v1160 = vadd.f32 0.0, %v1159
    %1161 = vdwg.mxu0
    %1162 = vrot.lane.b32.xlu0 %v1034, 120
    %v1163 = vpop.permute.xlu0 %1162
    %1164 = vrot.lane.b32.xlu0 %v1036, 120
    %v1165 = vpop.permute.xlu0 %1164
    %1166 = vrot.lane.b32.xlu0 %v1034, 88
    %v1167 = vpop.permute.xlu0 %1166
    %1168 = vrot.lane.b32.xlu0 %v1036, 88
    %v1169 = vpop.permute.xlu0 %1168
    %v1170 = vsel %vm181, %v1163, 0
    %v1172 = vsel %vm181, %v1165, 0
    %v1174 = vsel %vm181, %v1167, 0
    %v1176 = vsel %vm181, %v1169, 0
    %1178 = vmatpush.xpose.msra.mxu0 0.0
    %1179 = vmatpush.xpose.msra.mxu0 0.0
    %1180 = vmatpush.xpose.msra.mxu0 0.0
    %1181 = vmatpush.xpose.msra.mxu0 0.0
    %1182 = vmatpush.xpose.msra.mxu0 0.0
    %1183 = vmatpush.xpose.msra.mxu0 0.0
    %1184 = vmatpush.xpose.msra.mxu0 0.0
    %1185 = vmatpush.xpose.msra.mxu0 0.0
    %1186 = vmatpush.xpose.msra.mxu0 0.0
    %1187 = vmatpush.xpose.msra.mxu0 0.0
    %1188 = vmatpush.xpose.msra.mxu0 0.0
    %1189 = vmatpush.xpose.msra.mxu0 0.0
    %1190 = vmatpush.xpose.msra.mxu0 0.0
    %1191 = vmatpush.xpose.msra.mxu0 0.0
    %1192 = vmatpush.xpose.msra.mxu0 %v1176
    %1193 = vmatpush.xpose.msra.mxu0 %v1174
    %1194 = vmatmul.f32.gmra.mxu0 %v1170
    %v1195 = vpop.f32.mrf.mxu0
    %v1196 = vadd.f32 0.0, %v1195
    %1197 = vmatmul.f32.gmra.mxu0 %v1172
    %v1198 = vpop.f32.mrf.mxu0
    %v1199 = vadd.f32 0.0, %v1198
    %1200 = vdwg.mxu0
    %v1201 = vmul.f32 %v1196, 0.35355338
    %v1202 = vmul.f32 %v1199, 0.35355338
    %v1203 = vadd.f32 %v1201, %v182
    %v1204 = vadd.f32 %v1202, %v188
    %v1205 = vsel %vm265, %v1203, -inf
    %1206 = vmax.xlane.f32.xlu0 %v1205
    %v1207 = vpop.xlane.xlu0 %1206
    %v1208 = vsel %vm265, %v1204, -inf
    %1209 = vmax.xlane.f32.xlu0 %v1208
    %v1210 = vpop.xlane.xlu0 %1209
    %v1211 = vsub.f32 %v1203, %v1207
    %v1212 = vsub.f32 %v1204, %v1210
    %v1213 = vmul.f32 %v1211, 1.442695
    %v1214 = vpow.pop %v1213
    %v1215 = vmul.f32 %v1212, 1.442695
    %v1216 = vpow.pop %v1215
    %v1217 = vsel %vm265, %v1214, 0.0
    %1218 = vadd.xlane.f32.xlu0 %v1217
    %v1219 = vpop.xlane.xlu0 %1218
    %v1220 = vsel %vm265, %v1216, 0.0
    %1221 = vadd.xlane.f32.xlu0 %v1220
    %v1222 = vpop.xlane.xlu0 %1221
    %v1223 = vrcp.pop %v1219
    %v1224 = vmul.f32 %v1219, %v1223
    %v1225 = vsub.f32 1.0, %v1224
    %v1226 = vmul.f32 %v1223, %v1225
    %v1227 = vadd.f32 %v1223, %v1226
    %vm1228 = vweird.f32 %v1219
    %vm1229 = vweird.f32 %v1223
    %vm1230 = vmor %vm1228, %vm1229
    %v1231 = vsel %vm1230, %v1223, %v1227
    %v1232 = vand.u32 2147483647, %v1219
    %vm1233 = vcmp.eq.f32.partialorder %v1232, 8.507059e+37
    %v1234 = vand.u32 %v1219, 2147483648
    %v1235 = vor.u32 1.1754944e-38, %v1234
    %v1236 = vsel %vm1233, %v1235, %v1231
    %v1237 = vmul.f32 %v1214, %v1236
    %v1238 = vrcp.pop %v1222
    %v1239 = vmul.f32 %v1222, %v1238
    %v1240 = vsub.f32 1.0, %v1239
    %v1241 = vmul.f32 %v1238, %v1240
    %v1242 = vadd.f32 %v1238, %v1241
    %vm1243 = vweird.f32 %v1222
    %vm1244 = vweird.f32 %v1238
    %vm1245 = vmor %vm1243, %vm1244
    %v1246 = vsel %vm1245, %v1238, %v1242
    %v1247 = vand.u32 2147483647, %v1222
    %vm1248 = vcmp.eq.f32.partialorder %v1247, 8.507059e+37
    %v1249 = vand.u32 %v1222, 2147483648
    %v1250 = vor.u32 1.1754944e-38, %v1249
    %v1251 = vsel %vm1248, %v1250, %v1246
    %v1252 = vmul.f32 %v1216, %v1251
    %1253 = vrot.lane.b32.xlu0 %v1034, 56
    %v1254 = vpop.permute.xlu0 %1253
    %1255 = vrot.lane.b32.xlu0 %v1036, 56
    %v1256 = vpop.permute.xlu0 %1255
    %v1260 = vsel %vm265, %v1237, 0
    %v1263 = vsel %vm265, %v1252, 0
    %1265 = vmatpush.msra.mxu0 0.0
    %1266 = vmatpush.msra.mxu0 0.0
    %1267 = vmatpush.msra.mxu0 0.0
    %1268 = vmatpush.msra.mxu0 0.0
    %1269 = vmatpush.msra.mxu0 0.0
    %1270 = vmatpush.msra.mxu0 0.0
    %1271 = vmatpush.msra.mxu0 0.0
    %1272 = vmatpush.msra.mxu0 0.0
    %1273 = vmatpush.msra.mxu0 0.0
    %1274 = vmatpush.msra.mxu0 0.0
    %1275 = vmatpush.msra.mxu0 0.0
    %1276 = vmatpush.msra.mxu0 0.0
    %1277 = vmatpush.msra.mxu0 0.0
    %1278 = vmatpush.msra.mxu0 0.0
    %1279 = vmatpush.msra.mxu0 %v1256
    %1280 = vmatpush.msra.mxu0 %v1254
    %1281 = vmatmul.f32.gmra.mxu0 %v1260
    %v1282 = vpop.f32.mrf.mxu0
    %v1283 = vadd.f32 0.0, %v1282
    %1284 = vmatmul.f32.gmra.mxu0 %v1263
    %v1285 = vpop.f32.mrf.mxu0
    %v1286 = vadd.f32 0.0, %v1285
    %1287 = vdwg.mxu0
    %1288 = vrot.lane.b32.xlu0 %v1034, 112
    %v1289 = vpop.permute.xlu0 %1288
    %1290 = vrot.lane.b32.xlu0 %v1036, 112
    %v1291 = vpop.permute.xlu0 %1290
    %1292 = vrot.lane.b32.xlu0 %v1034, 80
    %v1293 = vpop.permute.xlu0 %1292
    %1294 = vrot.lane.b32.xlu0 %v1036, 80
    %v1295 = vpop.permute.xlu0 %1294
    %v1296 = vsel %vm181, %v1289, 0
    %v1298 = vsel %vm181, %v1291, 0
    %v1300 = vsel %vm181, %v1293, 0
    %v1302 = vsel %vm181, %v1295, 0
    %1304 = vmatpush.xpose.msra.mxu0 0.0
    %1305 = vmatpush.xpose.msra.mxu0 0.0
    %1306 = vmatpush.xpose.msra.mxu0 0.0
    %1307 = vmatpush.xpose.msra.mxu0 0.0
    %1308 = vmatpush.xpose.msra.mxu0 0.0
    %1309 = vmatpush.xpose.msra.mxu0 0.0
    %1310 = vmatpush.xpose.msra.mxu0 0.0
    %1311 = vmatpush.xpose.msra.mxu0 0.0
    %1312 = vmatpush.xpose.msra.mxu0 0.0
    %1313 = vmatpush.xpose.msra.mxu0 0.0
    %1314 = vmatpush.xpose.msra.mxu0 0.0
    %1315 = vmatpush.xpose.msra.mxu0 0.0
    %1316 = vmatpush.xpose.msra.mxu0 0.0
    %1317 = vmatpush.xpose.msra.mxu0 0.0
    %1318 = vmatpush.xpose.msra.mxu0 %v1302
    %1319 = vmatpush.xpose.msra.mxu0 %v1300
    %1320 = vmatmul.f32.gmra.mxu0 %v1296
    %v1321 = vpop.f32.mrf.mxu0
    %v1322 = vadd.f32 0.0, %v1321
    %1323 = vmatmul.f32.gmra.mxu0 %v1298
    %v1324 = vpop.f32.mrf.mxu0
    %v1325 = vadd.f32 0.0, %v1324
    %1326 = vdwg.mxu0
    %v1327 = vmul.f32 %v1322, 0.35355338
    %v1328 = vmul.f32 %v1325, 0.35355338
    %v1329 = vadd.f32 %v1327, %v182
    %v1330 = vadd.f32 %v1328, %v188
    %v1331 = vsel %vm265, %v1329, -inf
    %1332 = vmax.xlane.f32.xlu0 %v1331
    %v1333 = vpop.xlane.xlu0 %1332
    %v1334 = vsel %vm265, %v1330, -inf
    %1335 = vmax.xlane.f32.xlu0 %v1334
    %v1336 = vpop.xlane.xlu0 %1335
    %v1337 = vsub.f32 %v1329, %v1333
    %v1338 = vsub.f32 %v1330, %v1336
    %v1339 = vmul.f32 %v1337, 1.442695
    %v1340 = vpow.pop %v1339
    %v1341 = vmul.f32 %v1338, 1.442695
    %v1342 = vpow.pop %v1341
    %v1343 = vsel %vm265, %v1340, 0.0
    %1344 = vadd.xlane.f32.xlu0 %v1343
    %v1345 = vpop.xlane.xlu0 %1344
    %v1346 = vsel %vm265, %v1342, 0.0
    %1347 = vadd.xlane.f32.xlu0 %v1346
    %v1348 = vpop.xlane.xlu0 %1347
    %v1349 = vrcp.pop %v1345
    %v1350 = vmul.f32 %v1345, %v1349
    %v1351 = vsub.f32 1.0, %v1350
    %v1352 = vmul.f32 %v1349, %v1351
    %v1353 = vadd.f32 %v1349, %v1352
    %vm1354 = vweird.f32 %v1345
    %vm1355 = vweird.f32 %v1349
    %vm1356 = vmor %vm1354, %vm1355
    %v1357 = vsel %vm1356, %v1349, %v1353
    %v1358 = vand.u32 2147483647, %v1345
    %vm1359 = vcmp.eq.f32.partialorder %v1358, 8.507059e+37
    %v1360 = vand.u32 %v1345, 2147483648
    %v1361 = vor.u32 1.1754944e-38, %v1360
    %v1362 = vsel %vm1359, %v1361, %v1357
    %v1363 = vmul.f32 %v1340, %v1362
    %v1364 = vrcp.pop %v1348
    %v1365 = vmul.f32 %v1348, %v1364
    %v1366 = vsub.f32 1.0, %v1365
    %v1367 = vmul.f32 %v1364, %v1366
    %v1368 = vadd.f32 %v1364, %v1367
    %vm1369 = vweird.f32 %v1348
    %vm1370 = vweird.f32 %v1364
    %vm1371 = vmor %vm1369, %vm1370
    %v1372 = vsel %vm1371, %v1364, %v1368
    %v1373 = vand.u32 2147483647, %v1348
    %vm1374 = vcmp.eq.f32.partialorder %v1373, 8.507059e+37
    %v1375 = vand.u32 %v1348, 2147483648
    %v1376 = vor.u32 1.1754944e-38, %v1375
    %v1377 = vsel %vm1374, %v1376, %v1372
    %v1378 = vmul.f32 %v1342, %v1377
    %1379 = vrot.lane.b32.xlu0 %v1034, 48
    %v1380 = vpop.permute.xlu0 %1379
    %1381 = vrot.lane.b32.xlu0 %v1036, 48
    %v1382 = vpop.permute.xlu0 %1381
    %v1386 = vsel %vm265, %v1363, 0
    %v1389 = vsel %vm265, %v1378, 0
    %1391 = vmatpush.msra.mxu0 0.0
    %1392 = vmatpush.msra.mxu0 0.0
    %1393 = vmatpush.msra.mxu0 0.0
    %1394 = vmatpush.msra.mxu0 0.0
    %1395 = vmatpush.msra.mxu0 0.0
    %1396 = vmatpush.msra.mxu0 0.0
    %1397 = vmatpush.msra.mxu0 0.0
    %1398 = vmatpush.msra.mxu0 0.0
    %1399 = vmatpush.msra.mxu0 0.0
    %1400 = vmatpush.msra.mxu0 0.0
    %1401 = vmatpush.msra.mxu0 0.0
    %1402 = vmatpush.msra.mxu0 0.0
    %1403 = vmatpush.msra.mxu0 0.0
    %1404 = vmatpush.msra.mxu0 0.0
    %1405 = vmatpush.msra.mxu0 %v1382
    %1406 = vmatpush.msra.mxu0 %v1380
    %1407 = vmatmul.f32.gmra.mxu0 %v1386
    %v1408 = vpop.f32.mrf.mxu0
    %v1409 = vadd.f32 0.0, %v1408
    %1410 = vmatmul.f32.gmra.mxu0 %v1389
    %v1411 = vpop.f32.mrf.mxu0
    %v1412 = vadd.f32 0.0, %v1411
    %1413 = vdwg.mxu0
    %1414 = vrot.lane.b32.xlu0 %v1034, 104
    %v1415 = vpop.permute.xlu0 %1414
    %1416 = vrot.lane.b32.xlu0 %v1036, 104
    %v1417 = vpop.permute.xlu0 %1416
    %1418 = vrot.lane.b32.xlu0 %v1034, 72
    %v1419 = vpop.permute.xlu0 %1418
    %1420 = vrot.lane.b32.xlu0 %v1036, 72
    %v1421 = vpop.permute.xlu0 %1420
    %v1422 = vsel %vm181, %v1415, 0
    %v1424 = vsel %vm181, %v1417, 0
    %v1426 = vsel %vm181, %v1419, 0
    %v1428 = vsel %vm181, %v1421, 0
    %1430 = vmatpush.xpose.msra.mxu0 0.0
    %1431 = vmatpush.xpose.msra.mxu0 0.0
    %1432 = vmatpush.xpose.msra.mxu0 0.0
    %1433 = vmatpush.xpose.msra.mxu0 0.0
    %1434 = vmatpush.xpose.msra.mxu0 0.0
    %1435 = vmatpush.xpose.msra.mxu0 0.0
    %1436 = vmatpush.xpose.msra.mxu0 0.0
    %1437 = vmatpush.xpose.msra.mxu0 0.0
    %1438 = vmatpush.xpose.msra.mxu0 0.0
    %1439 = vmatpush.xpose.msra.mxu0 0.0
    %1440 = vmatpush.xpose.msra.mxu0 0.0
    %1441 = vmatpush.xpose.msra.mxu0 0.0
    %1442 = vmatpush.xpose.msra.mxu0 0.0
    %1443 = vmatpush.xpose.msra.mxu0 0.0
    %1444 = vmatpush.xpose.msra.mxu0 %v1428
    %1445 = vmatpush.xpose.msra.mxu0 %v1426
    %1446 = vmatmul.f32.gmra.mxu0 %v1422
    %v1447 = vpop.f32.mrf.mxu0
    %v1448 = vadd.f32 0.0, %v1447
    %1449 = vmatmul.f32.gmra.mxu0 %v1424
    %v1450 = vpop.f32.mrf.mxu0
    %v1451 = vadd.f32 0.0, %v1450
    %1452 = vdwg.mxu0
    %v1453 = vmul.f32 %v1448, 0.35355338
    %v1454 = vmul.f32 %v1451, 0.35355338
    %v1455 = vadd.f32 %v1453, %v182
    %v1456 = vadd.f32 %v1454, %v188
    %v1457 = vsel %vm265, %v1455, -inf
    %1458 = vmax.xlane.f32.xlu0 %v1457
    %v1459 = vpop.xlane.xlu0 %1458
    %v1460 = vsel %vm265, %v1456, -inf
    %1461 = vmax.xlane.f32.xlu0 %v1460
    %v1462 = vpop.xlane.xlu0 %1461
    %v1463 = vsub.f32 %v1455, %v1459
    %v1464 = vsub.f32 %v1456, %v1462
    %v1465 = vmul.f32 %v1463, 1.442695
    %v1466 = vpow.pop %v1465
    %v1467 = vmul.f32 %v1464, 1.442695
    %v1468 = vpow.pop %v1467
    %v1469 = vsel %vm265, %v1466, 0.0
    %1470 = vadd.xlane.f32.xlu0 %v1469
    %v1471 = vpop.xlane.xlu0 %1470
    %v1472 = vsel %vm265, %v1468, 0.0
    %1473 = vadd.xlane.f32.xlu0 %v1472
    %v1474 = vpop.xlane.xlu0 %1473
    %v1475 = vrcp.pop %v1471
    %v1476 = vmul.f32 %v1471, %v1475
    %v1477 = vsub.f32 1.0, %v1476
    %v1478 = vmul.f32 %v1475, %v1477
    %v1479 = vadd.f32 %v1475, %v1478
    %vm1480 = vweird.f32 %v1471
    %vm1481 = vweird.f32 %v1475
    %vm1482 = vmor %vm1480, %vm1481
    %v1483 = vsel %vm1482, %v1475, %v1479
    %v1484 = vand.u32 2147483647, %v1471
    %vm1485 = vcmp.eq.f32.partialorder %v1484, 8.507059e+37
    %v1486 = vand.u32 %v1471, 2147483648
    %v1487 = vor.u32 1.1754944e-38, %v1486
    %v1488 = vsel %vm1485, %v1487, %v1483
    %v1489 = vmul.f32 %v1466, %v1488
    %v1490 = vrcp.pop %v1474
    %v1491 = vmul.f32 %v1474, %v1490
    %v1492 = vsub.f32 1.0, %v1491
    %v1493 = vmul.f32 %v1490, %v1492
    %v1494 = vadd.f32 %v1490, %v1493
    %vm1495 = vweird.f32 %v1474
    %vm1496 = vweird.f32 %v1490
    %vm1497 = vmor %vm1495, %vm1496
    %v1498 = vsel %vm1497, %v1490, %v1494
    %v1499 = vand.u32 2147483647, %v1474
    %vm1500 = vcmp.eq.f32.partialorder %v1499, 8.507059e+37
    %v1501 = vand.u32 %v1474, 2147483648
    %v1502 = vor.u32 1.1754944e-38, %v1501
    %v1503 = vsel %vm1500, %v1502, %v1498
    %v1504 = vmul.f32 %v1468, %v1503
    %1505 = vrot.lane.b32.xlu0 %v1034, 40
    %v1506 = vpop.permute.xlu0 %1505
    %1507 = vrot.lane.b32.xlu0 %v1036, 40
    %v1508 = vpop.permute.xlu0 %1507
    %v1512 = vsel %vm265, %v1489, 0
    %v1515 = vsel %vm265, %v1504, 0
    %1517 = vmatpush.msra.mxu0 0.0
    %1518 = vmatpush.msra.mxu0 0.0
    %1519 = vmatpush.msra.mxu0 0.0
    %1520 = vmatpush.msra.mxu0 0.0
    %1521 = vmatpush.msra.mxu0 0.0
    %1522 = vmatpush.msra.mxu0 0.0
    %1523 = vmatpush.msra.mxu0 0.0
    %1524 = vmatpush.msra.mxu0 0.0
    %1525 = vmatpush.msra.mxu0 0.0
    %1526 = vmatpush.msra.mxu0 0.0
    %1527 = vmatpush.msra.mxu0 0.0
    %1528 = vmatpush.msra.mxu0 0.0
    %1529 = vmatpush.msra.mxu0 0.0
    %1530 = vmatpush.msra.mxu0 0.0
    %1531 = vmatpush.msra.mxu0 %v1508
    %1532 = vmatpush.msra.mxu0 %v1506
    %1533 = vmatmul.f32.gmra.mxu0 %v1512
    %v1534 = vpop.f32.mrf.mxu0
    %v1535 = vadd.f32 0.0, %v1534
    %1536 = vmatmul.f32.gmra.mxu0 %v1515
    %v1537 = vpop.f32.mrf.mxu0
    %v1538 = vadd.f32 0.0, %v1537
    %1539 = vdwg.mxu0
    %1542 = vrot.lane.b32.xlu0 %v1283, 8
    %v1543 = vpop.permute.xlu0 %1542
    %1544 = vrot.lane.b32.xlu0 %v1286, 8
    %v1545 = vpop.permute.xlu0 %1544
    %1550 = vrot.lane.b32.xlu0 %v1409, 16
    %v1551 = vpop.permute.xlu0 %1550
    %1552 = vrot.lane.b32.xlu0 %v1412, 16
    %v1553 = vpop.permute.xlu0 %1552
    %1558 = vrot.lane.b32.xlu0 %v1535, 24
    %v1559 = vpop.permute.xlu0 %1558
    %1560 = vrot.lane.b32.xlu0 %v1538, 24
    %v1561 = vpop.permute.xlu0 %1560
    %v1564 = vsel %vm181, %v1157, %v1543
    %v1565 = vsel %vm181, %v1160, %v1545
    %v1566 = vsel %vm265, %v1564, %v1551
    %v1567 = vsel %vm265, %v1565, %v1553
    %v1568 = vsel %vm755, %v1566, %v1559
    %v1569 = vsel %vm755, %v1567, %v1561
    %v1570 = vpack.c.bf16 %v1569, %v1568
    %s1571 = scalar_lea.vmem %s5, 16
    %v1572 = vld [vmem:[%s1571] sm:$0xf]
    %v1573 = vld [vmem:[%s1571 + $0x4] sm:$0xf]
    %v1574 = vld [vmem:[%s1571 + $0x8] sm:$0xf]
    %v1575 = vld [vmem:[%s1571 + $0xc] sm:$0xf]
    %v1576 = vperm.slane %v43, 2
    %v1581 = vunpack.c.l.b16 %v1572
    %v1582 = vunpack.c.l.b16 %v1573
    %v1583 = vunpack.c.l.b16 %v1574
    %v1584 = vunpack.c.l.b16 %v1575
    %v1585 = vpack.c.b16 %v1582, %v1581
    %v1586 = vpack.c.b16 %v1584, %v1583
    %v1590 = vsel %vm120, %v1570, 0
    %1592 = vmatpush.bf16.msra.mxu0 0
    %1593 = vmatpush.bf16.msra.mxu0 0
    %1594 = vmatpush.bf16.msra.mxu0 0
    %1595 = vmatpush.bf16.msra.mxu0 0
    %1596 = vmatpush.bf16.msra.mxu0 0
    %1597 = vmatpush.bf16.msra.mxu0 0
    %1598 = vmatpush.bf16.msra.mxu0 %v1586
    %1599 = vmatpush.bf16.msra.mxu0 %v1585
    %1600 = vmatmul.bf16.gmra.mxu0 %v1590
    %v1601 = vpop.f32.mrf.mxu0
    %v1602 = vadd.f32 %v1576, %v1601
    %v1603 = vpop.f32.mrf.mxu0
    %v1604 = vadd.f32 %v1576, %v1603
    %1605 = vdwg.mxu0
    %v1606 = vadd.f32 %v1000, %v1602
    %v1607 = vadd.f32 %v1001, %v1604
    %v1608 = vsel %vm120, %v1606, 0.0
    %1609 = vadd.xlane.f32.xlu0 %v1608
    %v1610 = vpop.xlane.xlu0 %1609
    %v1611 = vsel %vm120, %v1607, 0.0
    %1612 = vadd.xlane.f32.xlu0 %v1611
    %v1613 = vpop.xlane.xlu0 %1612
    %v1614 = vmul.f32 %v1610, %v133
    %v1615 = vmul.f32 %v1613, %v133
    %v1616 = vsub.f32 %v1606, %v1614
    %v1617 = vsub.f32 %v1607, %v1615
    %v1618 = vmul.f32 %v1616, %v1616
    %v1619 = vmul.f32 %v1617, %v1617
    %v1620 = vsel %vm120, %v1618, 0.0
    %1621 = vadd.xlane.f32.xlu0 %v1620
    %v1622 = vpop.xlane.xlu0 %1621
    %v1623 = vsel %vm120, %v1619, 0.0
    %1624 = vadd.xlane.f32.xlu0 %v1623
    %v1625 = vpop.xlane.xlu0 %1624
    %v1626 = vmul.f32 %v1622, %v133
    %v1627 = vmul.f32 %v1625, %v133
    %v1628 = vadd.f32 %v1626, 1e-12
    %v1629 = vadd.f32 %v1627, 1e-12
    %v1630 = vrsqrt.pop %v1628
    %v1631 = vmul.f32 %v1630, %v1628
    %v1632 = vmul.f32 %v1631, %v1630
    %v1633 = vmul.f32 0.5, %v1632
    %v1634 = vsub.f32 1.5, %v1633
    %v1635 = vmul.f32 %v1630, %v1634
    %vm1636 = vweird.f32 %v1628
    %vm1637 = vweird.f32 %v1630
    %vm1638 = vmor %vm1636, %vm1637
    %v1639 = vsel %vm1638, %v1630, %v1635
    %v1640 = vrsqrt.pop %v1629
    %v1641 = vmul.f32 %v1640, %v1629
    %v1642 = vmul.f32 %v1641, %v1640
    %v1643 = vmul.f32 0.5, %v1642
    %v1644 = vsub.f32 1.5, %v1643
    %v1645 = vmul.f32 %v1640, %v1644
    %vm1646 = vweird.f32 %v1629
    %vm1647 = vweird.f32 %v1640
    %vm1648 = vmor %vm1646, %vm1647
    %v1649 = vsel %vm1648, %v1640, %v1645
    %v1650 = vmul.f32 %v1616, %v1639
    %v1651 = vmul.f32 %v1617, %v1649
    %v1652 = vperm.slane %v42, 6
    %v1653 = vmul.f32 %v1650, %v1652
    %v1654 = vmul.f32 %v1651, %v1652
    %v1655 = vperm.slane %v42, 7
    %v1656 = vadd.f32 %v1653, %v1655
    %v1657 = vadd.f32 %v1654, %v1655
    %v1658 = vpack.c.bf16 %v1657, %v1656
    %s1659 = scalar_lea.vmem %s6, 16
    %v1660 = vld [vmem:[%s1659] sm:$0xf]
    %v1661 = vld [vmem:[%s1659 + $0x4] sm:$0xf]
    %v1662 = vld [vmem:[%s1659 + $0x8] sm:$0xf]
    %v1663 = vld [vmem:[%s1659 + $0xc] sm:$0xf]
    %v1664 = vperm.slane %v44, 3
    %v1669 = vunpack.c.l.b16 %v1660
    %v1670 = vunpack.c.l.b16 %v1661
    %v1671 = vunpack.c.l.b16 %v1662
    %v1672 = vunpack.c.l.b16 %v1663
    %v1673 = vpack.c.b16 %v1670, %v1669
    %v1674 = vpack.c.b16 %v1672, %v1671
    %v1678 = vsel %vm120, %v1658, 0
    %1680 = vmatpush.bf16.msra.mxu0 0
    %1681 = vmatpush.bf16.msra.mxu0 0
    %1682 = vmatpush.bf16.msra.mxu0 0
    %1683 = vmatpush.bf16.msra.mxu0 0
    %1684 = vmatpush.bf16.msra.mxu0 0
    %1685 = vmatpush.bf16.msra.mxu0 0
    %1686 = vmatpush.bf16.msra.mxu0 %v1674
    %1687 = vmatpush.bf16.msra.mxu0 %v1673
    %1688 = vmatmul.bf16.gmra.mxu0 %v1678
    %v1689 = vpop.f32.mrf.mxu0
    %v1690 = vadd.f32 %v1664, %v1689
    %v1691 = vpop.f32.mrf.mxu0
    %v1692 = vadd.f32 %v1664, %v1691
    %1693 = vdwg.mxu0
    %v1694 = vmul.f32 %v1690, %v1690
    %v1695 = vmul.f32 %v1692, %v1692
    %v1696 = vmul.f32 %v1690, %v1694
    %v1697 = vmul.f32 %v1692, %v1695
    %v1698 = vmul.f32 %v1696, 0.044715
    %v1699 = vmul.f32 %v1697, 0.044715
    %v1700 = vadd.f32 %v1690, %v1698
    %v1701 = vadd.f32 %v1692, %v1699
    %v1702 = vmul.f32 %v1700, 0.7978846
    %v1703 = vmul.f32 %v1701, 0.7978846
    %v1704 = vtanh.pop %v1702
    %v1705 = vtanh.pop %v1703
    %v1706 = vadd.f32 %v1704, 1.0
    %v1707 = vadd.f32 %v1705, 1.0
    %v1708 = vmul.f32 %v1706, 0.5
    %v1709 = vmul.f32 %v1707, 0.5
    %v1710 = vmul.f32 %v1690, %v1708
    %v1711 = vmul.f32 %v1692, %v1709
    %v1712 = vpack.c.bf16 %v1711, %v1710
    %s1713 = scalar_lea.vmem %s7, 32
    %v1714 = vld [vmem:[%s1713] sm:$0xf]
    %v1715 = vld [vmem:[%s1713 + $0x4] sm:$0xf]
    %v1716 = vld [vmem:[%s1713 + $0x8] sm:$0xf]
    %v1717 = vld [vmem:[%s1713 + $0xc] sm:$0xf]
    %v1718 = vld [vmem:[%s1713 + $0x10] sm:$0xf]
    %v1719 = vld [vmem:[%s1713 + $0x14] sm:$0xf]
    %v1720 = vld [vmem:[%s1713 + $0x18] sm:$0xf]
    %v1721 = vld [vmem:[%s1713 + $0x1c] sm:$0xf]
    %v1722 = vperm.slane %v43, 3
    %v1731 = vunpack.c.l.b16 %v1714
    %v1732 = vunpack.c.l.b16 %v1715
    %v1733 = vunpack.c.l.b16 %v1716
    %v1734 = vunpack.c.l.b16 %v1717
    %v1735 = vunpack.c.l.b16 %v1718
    %v1736 = vunpack.c.l.b16 %v1719
    %v1737 = vunpack.c.l.b16 %v1720
    %v1738 = vunpack.c.l.b16 %v1721
    %v1739 = vpack.c.b16 %v1732, %v1731
    %v1740 = vpack.c.b16 %v1734, %v1733
    %v1741 = vpack.c.b16 %v1736, %v1735
    %v1742 = vpack.c.b16 %v1738, %v1737
    %v1748 = vsel %vm932, %v1712, 0
    %1750 = vmatpush.bf16.msra.mxu0 0
    %1751 = vmatpush.bf16.msra.mxu0 0
    %1752 = vmatpush.bf16.msra.mxu0 0
    %1753 = vmatpush.bf16.msra.mxu0 0
    %1754 = vmatpush.bf16.msra.mxu0 %v1742
    %1755 = vmatpush.bf16.msra.mxu0 %v1741
    %1756 = vmatpush.bf16.msra.mxu0 %v1740
    %1757 = vmatpush.bf16.msra.mxu0 %v1739
    %1758 = vmatmul.bf16.gmra.mxu0 %v1748
    %v1759 = vpop.f32.mrf.mxu0
    %v1760 = vadd.f32 %v1722, %v1759
    %v1761 = vpop.f32.mrf.mxu0
    %v1762 = vadd.f32 %v1722, %v1761
    %1763 = vdwg.mxu0
    %v1764 = vadd.f32 %v1656, %v1760
    %v1765 = vadd.f32 %v1657, %v1762
    %v1766 = vsel %vm120, %v1764, 0.0
    %1767 = vadd.xlane.f32.xlu0 %v1766
    %v1768 = vpop.xlane.xlu0 %1767
    %v1769 = vsel %vm120, %v1765, 0.0
    %1770 = vadd.xlane.f32.xlu0 %v1769
    %v1771 = vpop.xlane.xlu0 %1770
    %v1772 = vmul.f32 %v1768, %v133
    %v1773 = vmul.f32 %v1771, %v133
    %v1774 = vsub.f32 %v1764, %v1772
    %v1775 = vsub.f32 %v1765, %v1773
    %v1776 = vmul.f32 %v1774, %v1774
    %v1777 = vmul.f32 %v1775, %v1775
    %v1778 = vsel %vm120, %v1776, 0.0
    %1779 = vadd.xlane.f32.xlu0 %v1778
    %v1780 = vpop.xlane.xlu0 %1779
    %v1781 = vsel %vm120, %v1777, 0.0
    %1782 = vadd.xlane.f32.xlu0 %v1781
    %v1783 = vpop.xlane.xlu0 %1782
    %v1784 = vmul.f32 %v1780, %v133
    %v1785 = vmul.f32 %v1783, %v133
    %v1786 = vadd.f32 %v1784, 1e-12
    %v1787 = vadd.f32 %v1785, 1e-12
    %v1788 = vrsqrt.pop %v1786
    %v1789 = vmul.f32 %v1788, %v1786
    %v1790 = vmul.f32 %v1789, %v1788
    %v1791 = vmul.f32 0.5, %v1790
    %v1792 = vsub.f32 1.5, %v1791
    %v1793 = vmul.f32 %v1788, %v1792
    %vm1794 = vweird.f32 %v1786
    %vm1795 = vweird.f32 %v1788
    %vm1796 = vmor %vm1794, %vm1795
    %v1797 = vsel %vm1796, %v1788, %v1793
    %v1798 = vrsqrt.pop %v1787
    %v1799 = vmul.f32 %v1798, %v1787
    %v1800 = vmul.f32 %v1799, %v1798
    %v1801 = vmul.f32 0.5, %v1800
    %v1802 = vsub.f32 1.5, %v1801
    %v1803 = vmul.f32 %v1798, %v1802
    %vm1804 = vweird.f32 %v1787
    %vm1805 = vweird.f32 %v1798
    %vm1806 = vmor %vm1804, %vm1805
    %v1807 = vsel %vm1806, %v1798, %v1803
    %v1808 = vmul.f32 %v1774, %v1797
    %v1809 = vmul.f32 %v1775, %v1807
    %v1810 = vperm.slane %v43, 0
    %v1811 = vmul.f32 %v1808, %v1810
    %v1812 = vmul.f32 %v1809, %v1810
    %v1813 = vperm.slane %v43, 1
    %v1814 = vadd.f32 %v1811, %v1813
    %v1815 = vadd.f32 %v1812, %v1813
    %v1816 = vperm.slane %v45, 0
    %v1818 = vsel %vm120, %v1814, 0
    %v1821 = vsel %vm120, %v1815, 0
    %v1823 = vsel %vm120, %v80, 0
    %1825 = vmatpush.xpose.msra.mxu0 0.0
    %1826 = vmatpush.xpose.msra.mxu0 0.0
    %1827 = vmatpush.xpose.msra.mxu0 0.0
    %1828 = vmatpush.xpose.msra.mxu0 0.0
    %1829 = vmatpush.xpose.msra.mxu0 0.0
    %1830 = vmatpush.xpose.msra.mxu0 0.0
    %1831 = vmatpush.xpose.msra.mxu0 0.0
    %1832 = vmatpush.xpose.msra.mxu0 0.0
    %1833 = vmatpush.xpose.msra.mxu0 0.0
    %1834 = vmatpush.xpose.msra.mxu0 0.0
    %1835 = vmatpush.xpose.msra.mxu0 0.0
    %1836 = vmatpush.xpose.msra.mxu0 0.0
    %1837 = vmatpush.xpose.msra.mxu0 0.0
    %1838 = vmatpush.xpose.msra.mxu0 0.0
    %1839 = vmatpush.xpose.msra.mxu0 0.0
    %1840 = vmatpush.xpose.msra.mxu0 %v1823
    %1841 = vmatmul.f32.gmra.mxu0 %v1818
    %v1842 = vpop.f32.mrf.mxu0
    %v1843 = vadd.f32 %v1816, %v1842
    %1844 = vmatmul.f32.gmra.mxu0 %v1821
    %v1845 = vpop.f32.mrf.mxu0
    %v1846 = vadd.f32 %v1816, %v1845
    %1847 = vdwg.mxu0
    %v1848 = vld [vmem:[%s1] sm:$0xff]
    %v1849 = vld [vmem:[%s1 + $0x8] sm:$0xff]
    %1850 = vset.pattern.permute.xlu0 0
    %1851 = vperm.xlu0 %1850, %v1848
    %v1852 = vpop.permute.xlu0 %1851
    %1853 = vset.pattern.permute.xlu0 0
    %1854 = vperm.xlu0 %1853, %v1849
    %v1855 = vpop.permute.xlu0 %1854
    %vm1856 = vcmp.eq.s32.totalorder %v1852, %v50
    %vm1857 = vcmp.eq.s32.totalorder %v1855, %v50
    %v1858 = vsel %vm1856, 1, 0
    %v1859 = vsel %vm1857, 1, 0
    %v1860 = vcvt.s32.f32 %v1858
    %v1861 = vcvt.s32.f32 %v1859
    %v1862 = vcvt.s32.f32 %v50
    %vm1863 = vcmask 58368
    %v1864 = vsel %vm1863, %v46, 0.0
    %1865 = vadd.xlane.f32.xlu0 %v1864
    %v1866 = vpop.xlane.xlu0 %1865
    %v1867 = vsub.f32 %v1866, 1.0
    %vm1868 = vcmp.eq.f32.partialorder %v1862, %v1867
    %v1869 = vsel %vm1868, 1, 0
    %v1870 = vcvt.s32.f32 %v1869
    %v1871 = vperm.slane %v1870, 0
    %v1872 = vlaneseq
    %v1873 = vshrl.u32 %v1872, 7
    %1875 = vset.pattern.permute.xlu0 %v1873
    %1876 = vperm.xlu0 %1875, %v1871
    %v1877 = vpop.permute.xlu0 %1876
    %v1878 = vperm.slane %v1870, 1
    %v1879 = vlaneseq
    %v1880 = vshrl.u32 %v1879, 7
    %1882 = vset.pattern.permute.xlu0 %v1880
    %1883 = vperm.xlu0 %1882, %v1878
    %v1884 = vpop.permute.xlu0 %1883
    %v1885 = vmul.f32 %v1860, %v1877
    %v1886 = vmul.f32 %v1861, %v1884
    %vm1887 = vcmask 39936
    %v1888 = vsel %vm1887, %v1885, 0.0
    %v1889 = vrot.slane %v1888, 4
    %v1890 = vadd.f32 %v1888, %v1889
    %v1891 = vrot.slane %v1890, 2
    %v1892 = vadd.f32 %v1890, %v1891
    %v1893 = vrot.slane %v1892, 1
    %v1894 = vadd.f32 %v1892, %v1893
    %v1895 = vsel %vm1887, %v1886, 0.0
    %v1896 = vrot.slane %v1895, 4
    %v1897 = vadd.f32 %v1895, %v1896
    %v1898 = vrot.slane %v1897, 2
    %v1899 = vadd.f32 %v1897, %v1898
    %v1900 = vrot.slane %v1899, 1
    %v1901 = vadd.f32 %v1899, %v1900
    %v1902 = vperm.slane %v45, 1
    %v1905 = vrot.slane %v1846, 7
    %vm1906 = vcmask 1041409
    %v1907 = vsel %vm1906, %v1905, %v1843
    %v1909 = vadd.f32 %v1902, %v1907
    %v1912 = vrot.slane %v1861, 7
    %v1913 = vsel %vm1906, %v1912, %v1860
    %v1915 = vmul.f32 %v1909, %v1913
    %vm1916 = vcmask 33792
    %v1917 = vsel %vm1916, %v1915, 0.0
    %1918 = vadd.xlane.f32.xlu0 %v1917
    %v1919 = vpop.xlane.xlu0 %1918
    %v1921 = vrot.slane %v45, 3
    %v1922 = vsel %vm1887, %v1860, 0
    %v1924 = vsel %vm1887, %v1861, 0
    %v1926 = vsel %vm78, %v1921, 0
    %1928 = vmatpush.msra.mxu0 0.0
    %1929 = vmatpush.msra.mxu0 0.0
    %1930 = vmatpush.msra.mxu0 0.0
    %1931 = vmatpush.msra.mxu0 0.0
    %1932 = vmatpush.msra.mxu0 0.0
    %1933 = vmatpush.msra.mxu0 0.0
    %1934 = vmatpush.msra.mxu0 0.0
    %1935 = vmatpush.msra.mxu0 0.0
    %1936 = vmatpush.msra.mxu0 0.0
    %1937 = vmatpush.msra.mxu0 0.0
    %1938 = vmatpush.msra.mxu0 0.0
    %1939 = vmatpush.msra.mxu0 0.0
    %1940 = vmatpush.msra.mxu0 0.0
    %1941 = vmatpush.msra.mxu0 0.0
    %1942 = vmatpush.msra.mxu0 0.0
    %1943 = vmatpush.msra.mxu0 %v1926
    %1944 = vmatmul.f32.gmra.mxu0 %v1922
    %v1945 = vpop.f32.mrf.mxu0
    %v1946 = vadd.f32 0.0, %v1945
    %1947 = vmatmul.f32.gmra.mxu0 %v1924
    %v1948 = vpop.f32.mrf.mxu0
    %v1949 = vadd.f32 0.0, %v1948
    %1950 = vdwg.mxu0
    %v1951 = vrot.slane %v1860, 1
    %v1952 = vrot.slane %v1861, 1
    %v1955 = vmul.f32 %v1946, %v1951
    %v1956 = vmul.f32 %v1949, %v1952
    %vm1957 = vcmask 38912
    %v1958 = vsel %vm1957, %v1955, 0.0
    %1959 = vadd.xlane.f32.xlu0 %v1958
    %v1960 = vpop.xlane.xlu0 %1959
    %v1961 = vsel %vm1957, %v1956, 0.0
    %1962 = vadd.xlane.f32.xlu0 %v1961
    %v1963 = vpop.xlane.xlu0 %1962
    %v1964 = vmul.f32 %v1843, %v1860
    %v1965 = vmul.f32 %v1846, %v1861
    %vm1966 = vcmask 39937
    %v1967 = vsel %vm1966, %v1964, 0.0
    %1968 = vadd.xlane.f32.xlu0 %v1967
    %v1969 = vpop.xlane.xlu0 %1968
    %v1970 = vsel %vm1966, %v1965, 0.0
    %1971 = vadd.xlane.f32.xlu0 %v1970
    %v1972 = vpop.xlane.xlu0 %1971
    %v1975 = vrot.slane %v1969, 1
    %v1976 = vrot.slane %v1972, 1
    %v1979 = vadd.f32 %v1960, %v1975
    %v1980 = vadd.f32 %v1963, %v1976
    %v1982 = vperm.slane %v46, 0
    %v1983 = vlaneseq
    %v1984 = vshrl.u32 %v1983, 7
    %v1985 = vadd.s32 %v1984, 1
    %1986 = vset.pattern.permute.xlu0 %v1985
    %1987 = vperm.xlu0 %1986, %v1982
    %v1988 = vpop.permute.xlu0 %1987
    %v1989 = vperm.slane %v46, 1
    %v1990 = vlaneseq
    %v1991 = vshrl.u32 %v1990, 7
    %v1992 = vadd.s32 %v1991, 1
    %1993 = vset.pattern.permute.xlu0 %v1992
    %1994 = vperm.xlu0 %1993, %v1989
    %v1995 = vpop.permute.xlu0 %1994
    %v1998 = vmul.f32 %v1979, %v1988
    %v1999 = vmul.f32 %v1980, %v1995
    %2002 = vset.pattern.permute.xlu0 0
    %2003 = vperm.xlu0 %2002, %v1998
    %v2004 = vpop.permute.xlu0 %2003
    %2005 = vset.pattern.permute.xlu0 0
    %2006 = vperm.xlu0 %2005, %v1999
    %v2007 = vpop.permute.xlu0 %2006
    %v2008 = vperm.slane %v2004, %v50
    %v2009 = vperm.slane %v2007, %v50
    %v2010 = vsel %vm1906, %v2009, %v2008
    %vm2012 = vcmask 50176
    %v2013 = vsel %vm2012, %v2010, 0.0
    %2014 = vadd.xlane.f32.xlu0 %v2013
    %v2015 = vpop.xlane.xlu0 %2014
    %v2016 = vadd.f32 %v1919, %v2015
    %v2017 = vperm.slane %v45, 2
    %v2020 = vsel %vm1906, %v1901, %v1894
    %v2022 = vmul.f32 %v2017, %v2020
    %v2023 = vsel %vm1916, %v2022, 0.0
    %2024 = vadd.xlane.f32.xlu0 %v2023
    %v2025 = vpop.xlane.xlu0 %2024
    %v2026 = vadd.f32 %v2016, %v2025
    %v2027 = vperm.slane %v1909, 0
    %v2028 = vlaneseq
    %v2029 = vshrl.u32 %v2028, 7
    %2031 = vset.pattern.permute.xlu0 %v2029
    %2032 = vperm.xlu0 %2031, %v2027
    %v2033 = vpop.permute.xlu0 %2032
    %v2034 = vperm.slane %v1909, 1
    %v2035 = vlaneseq
    %v2036 = vshrl.u32 %v2035, 7
    %2038 = vset.pattern.permute.xlu0 %v2036
    %2039 = vperm.xlu0 %2038, %v2034
    %v2040 = vpop.permute.xlu0 %2039
    %v2042 = vadd.f32 %v2033, %v1921
    %v2043 = vadd.f32 %v2040, %v1921
    %v2044 = vperm.slane %v1843, 1
    %v2045 = vperm.slane %v1846, 1
    %v2046 = vadd.f32 %v2042, %v2044
    %v2047 = vadd.f32 %v2043, %v2045
    %vm2048 = vcmask 36864
    %v2049 = vsel %vm2048, %v2046, -inf
    %v2050 = vrot.slane %v2049, 4
    %v2051 = vmax.f32 %v2049, %v2050
    %v2052 = vrot.slane %v2051, 2
    %v2053 = vmax.f32 %v2051, %v2052
    %v2054 = vrot.slane %v2053, 1
    %v2055 = vmax.f32 %v2053, %v2054
    %v2056 = vsel %vm2048, %v2047, -inf
    %v2057 = vrot.slane %v2056, 4
    %v2058 = vmax.f32 %v2056, %v2057
    %v2059 = vrot.slane %v2058, 2
    %v2060 = vmax.f32 %v2058, %v2059
    %v2061 = vrot.slane %v2060, 1
    %v2062 = vmax.f32 %v2060, %v2061
    %v2063 = vsub.f32 %v2046, %v2055
    %v2064 = vsub.f32 %v2047, %v2062
    %v2065 = vmul.f32 %v2063, 1.442695
    %v2066 = vpow.pop %v2065
    %v2067 = vmul.f32 %v2064, 1.442695
    %v2068 = vpow.pop %v2067
    %v2069 = vsel %vm2048, %v2066, 0.0
    %v2070 = vrot.slane %v2069, 4
    %v2071 = vadd.f32 %v2069, %v2070
    %v2072 = vrot.slane %v2071, 2
    %v2073 = vadd.f32 %v2071, %v2072
    %v2074 = vrot.slane %v2073, 1
    %v2075 = vadd.f32 %v2073, %v2074
    %v2076 = vsel %vm2048, %v2068, 0.0
    %v2077 = vrot.slane %v2076, 4
    %v2078 = vadd.f32 %v2076, %v2077
    %v2079 = vrot.slane %v2078, 2
    %v2080 = vadd.f32 %v2078, %v2079
    %v2081 = vrot.slane %v2080, 1
    %v2082 = vadd.f32 %v2080, %v2081
    %v2083 = vlog2.pop %v2075
    %v2084 = vmul.f32 %v2083, 0.6931472
    %v2085 = vlog2.pop %v2082
    %v2086 = vmul.f32 %v2085, 0.6931472
    %v2087 = vadd.f32 %v2084, %v2055
    %v2088 = vadd.f32 %v2086, %v2062
    %vm2089 = vcmp.gt.f32.partialorder %v46, 0.0
    %v2090 = vsel %vm2089, 1, 0
    %2091 = vset.pattern.permute.xlu0 1
    %2092 = vperm.xlu0 %2091, %v2090
    %v2093 = vpop.permute.xlu0 %2092
    %vm2094 = vcmp.eq.s32.totalorder %v2093, 1
    %v2097 = vsel %vm1906, %v2088, %v2087
    %v2099 = vsel %vm2094, %v2097, %v1909
    %v2100 = vperm.slane %v2099, 0
    %v2101 = vlaneseq
    %v2102 = vshrl.u32 %v2101, 7
    %2104 = vset.pattern.permute.xlu0 %v2102
    %2105 = vperm.xlu0 %2104, %v2100
    %v2106 = vpop.permute.xlu0 %2105
    %v2107 = vperm.slane %v2099, 1
    %v2108 = vlaneseq
    %v2109 = vshrl.u32 %v2108, 7
    %2111 = vset.pattern.permute.xlu0 %v2109
    %2112 = vperm.xlu0 %2111, %v2107
    %v2113 = vpop.permute.xlu0 %2112
    %v2114 = vadd.f32 %v2106, %v1921
    %v2115 = vadd.f32 %v2113, %v1921
    %v2116 = vperm.slane %v1843, 2
    %v2117 = vperm.slane %v1846, 2
    %v2118 = vadd.f32 %v2114, %v2116
    %v2119 = vadd.f32 %v2115, %v2117
    %v2120 = vsel %vm2048, %v2118, -inf
    %v2121 = vrot.slane %v2120, 4
    %v2122 = vmax.f32 %v2120, %v2121
    %v2123 = vrot.slane %v2122, 2
    %v2124 = vmax.f32 %v2122, %v2123
    %v2125 = vrot.slane %v2124, 1
    %v2126 = vmax.f32 %v2124, %v2125
    %v2127 = vsel %vm2048, %v2119, -inf
    %v2128 = vrot.slane %v2127, 4
    %v2129 = vmax.f32 %v2127, %v2128
    %v2130 = vrot.slane %v2129, 2
    %v2131 = vmax.f32 %v2129, %v2130
    %v2132 = vrot.slane %v2131, 1
    %v2133 = vmax.f32 %v2131, %v2132
    %v2134 = vsub.f32 %v2118, %v2126
    %v2135 = vsub.f32 %v2119, %v2133
    %v2136 = vmul.f32 %v2134, 1.442695
    %v2137 = vpow.pop %v2136
    %v2138 = vmul.f32 %v2135, 1.442695
    %v2139 = vpow.pop %v2138
    %v2140 = vsel %vm2048, %v2137, 0.0
    %v2141 = vrot.slane %v2140, 4
    %v2142 = vadd.f32 %v2140, %v2141
    %v2143 = vrot.slane %v2142, 2
    %v2144 = vadd.f32 %v2142, %v2143
    %v2145 = vrot.slane %v2144, 1
    %v2146 = vadd.f32 %v2144, %v2145
    %v2147 = vsel %vm2048, %v2139, 0.0
    %v2148 = vrot.slane %v2147, 4
    %v2149 = vadd.f32 %v2147, %v2148
    %v2150 = vrot.slane %v2149, 2
    %v2151 = vadd.f32 %v2149, %v2150
    %v2152 = vrot.slane %v2151, 1
    %v2153 = vadd.f32 %v2151, %v2152
    %v2154 = vlog2.pop %v2146
    %v2155 = vmul.f32 %v2154, 0.6931472
    %v2156 = vlog2.pop %v2153
    %v2157 = vmul.f32 %v2156, 0.6931472
    %v2158 = vadd.f32 %v2155, %v2126
    %v2159 = vadd.f32 %v2157, %v2133
    %2160 = vset.pattern.permute.xlu0 2
    %2161 = vperm.xlu0 %2160, %v2090
    %v2162 = vpop.permute.xlu0 %2161
    %vm2163 = vcmp.eq.s32.totalorder %v2162, 1
    %v2166 = vsel %vm1906, %v2159, %v2158
    %v2168 = vsel %vm2163, %v2166, %v2099
    %v2169 = vperm.slane %v2168, 0
    %v2170 = vlaneseq
    %v2171 = vshrl.u32 %v2170, 7
    %2173 = vset.pattern.permute.xlu0 %v2171
    %2174 = vperm.xlu0 %2173, %v2169
    %v2175 = vpop.permute.xlu0 %2174
    %v2176 = vperm.slane %v2168, 1
    %v2177 = vlaneseq
    %v2178 = vshrl.u32 %v2177, 7
    %2180 = vset.pattern.permute.xlu0 %v2178
    %2181 = vperm.xlu0 %2180, %v2176
    %v2182 = vpop.permute.xlu0 %2181
    %v2183 = vadd.f32 %v2175, %v1921
    %v2184 = vadd.f32 %v2182, %v1921
    %v2185 = vperm.slane %v1843, 3
    %v2186 = vperm.slane %v1846, 3
    %v2187 = vadd.f32 %v2183, %v2185
    %v2188 = vadd.f32 %v2184, %v2186
    %v2189 = vsel %vm2048, %v2187, -inf
    %v2190 = vrot.slane %v2189, 4
    %v2191 = vmax.f32 %v2189, %v2190
    %v2192 = vrot.slane %v2191, 2
    %v2193 = vmax.f32 %v2191, %v2192
    %v2194 = vrot.slane %v2193, 1
    %v2195 = vmax.f32 %v2193, %v2194
    %v2196 = vsel %vm2048, %v2188, -inf
    %v2197 = vrot.slane %v2196, 4
    %v2198 = vmax.f32 %v2196, %v2197
    %v2199 = vrot.slane %v2198, 2
    %v2200 = vmax.f32 %v2198, %v2199
    %v2201 = vrot.slane %v2200, 1
    %v2202 = vmax.f32 %v2200, %v2201
    %v2203 = vsub.f32 %v2187, %v2195
    %v2204 = vsub.f32 %v2188, %v2202
    %v2205 = vmul.f32 %v2203, 1.442695
    %v2206 = vpow.pop %v2205
    %v2207 = vmul.f32 %v2204, 1.442695
    %v2208 = vpow.pop %v2207
    %v2209 = vsel %vm2048, %v2206, 0.0
    %v2210 = vrot.slane %v2209, 4
    %v2211 = vadd.f32 %v2209, %v2210
    %v2212 = vrot.slane %v2211, 2
    %v2213 = vadd.f32 %v2211, %v2212
    %v2214 = vrot.slane %v2213, 1
    %v2215 = vadd.f32 %v2213, %v2214
    %v2216 = vsel %vm2048, %v2208, 0.0
    %v2217 = vrot.slane %v2216, 4
    %v2218 = vadd.f32 %v2216, %v2217
    %v2219 = vrot.slane %v2218, 2
    %v2220 = vadd.f32 %v2218, %v2219
    %v2221 = vrot.slane %v2220, 1
    %v2222 = vadd.f32 %v2220, %v2221
    %v2223 = vlog2.pop %v2215
    %v2224 = vmul.f32 %v2223, 0.6931472
    %v2225 = vlog2.pop %v2222
    %v2226 = vmul.f32 %v2225, 0.6931472
    %v2227 = vadd.f32 %v2224, %v2195
    %v2228 = vadd.f32 %v2226, %v2202
    %2229 = vset.pattern.permute.xlu0 3
    %2230 = vperm.xlu0 %2229, %v2090
    %v2231 = vpop.permute.xlu0 %2230
    %vm2232 = vcmp.eq.s32.totalorder %v2231, 1
    %v2235 = vsel %vm1906, %v2228, %v2227
    %v2237 = vsel %vm2232, %v2235, %v2168
    %v2238 = vperm.slane %v2237, 0
    %v2239 = vlaneseq
    %v2240 = vshrl.u32 %v2239, 7
    %2242 = vset.pattern.permute.xlu0 %v2240
    %2243 = vperm.xlu0 %2242, %v2238
    %v2244 = vpop.permute.xlu0 %2243
    %v2245 = vperm.slane %v2237, 1
    %v2246 = vlaneseq
    %v2247 = vshrl.u32 %v2246, 7
    %2249 = vset.pattern.permute.xlu0 %v2247
    %2250 = vperm.xlu0 %2249, %v2245
    %v2251 = vpop.permute.xlu0 %2250
    %v2252 = vadd.f32 %v2244, %v1921
    %v2253 = vadd.f32 %v2251, %v1921
    %v2254 = vperm.slane %v1843, 4
    %v2255 = vperm.slane %v1846, 4
    %v2256 = vadd.f32 %v2252, %v2254
    %v2257 = vadd.f32 %v2253, %v2255
    %v2258 = vsel %vm2048, %v2256, -inf
    %v2259 = vrot.slane %v2258, 4
    %v2260 = vmax.f32 %v2258, %v2259
    %v2261 = vrot.slane %v2260, 2
    %v2262 = vmax.f32 %v2260, %v2261
    %v2263 = vrot.slane %v2262, 1
    %v2264 = vmax.f32 %v2262, %v2263
    %v2265 = vsel %vm2048, %v2257, -inf
    %v2266 = vrot.slane %v2265, 4
    %v2267 = vmax.f32 %v2265, %v2266
    %v2268 = vrot.slane %v2267, 2
    %v2269 = vmax.f32 %v2267, %v2268
    %v2270 = vrot.slane %v2269, 1
    %v2271 = vmax.f32 %v2269, %v2270
    %v2272 = vsub.f32 %v2256, %v2264
    %v2273 = vsub.f32 %v2257, %v2271
    %v2274 = vmul.f32 %v2272, 1.442695
    %v2275 = vpow.pop %v2274
    %v2276 = vmul.f32 %v2273, 1.442695
    %v2277 = vpow.pop %v2276
    %v2278 = vsel %vm2048, %v2275, 0.0
    %v2279 = vrot.slane %v2278, 4
    %v2280 = vadd.f32 %v2278, %v2279
    %v2281 = vrot.slane %v2280, 2
    %v2282 = vadd.f32 %v2280, %v2281
    %v2283 = vrot.slane %v2282, 1
    %v2284 = vadd.f32 %v2282, %v2283
    %v2285 = vsel %vm2048, %v2277, 0.0
    %v2286 = vrot.slane %v2285, 4
    %v2287 = vadd.f32 %v2285, %v2286
    %v2288 = vrot.slane %v2287, 2
    %v2289 = vadd.f32 %v2287, %v2288
    %v2290 = vrot.slane %v2289, 1
    %v2291 = vadd.f32 %v2289, %v2290
    %v2292 = vlog2.pop %v2284
    %v2293 = vmul.f32 %v2292, 0.6931472
    %v2294 = vlog2.pop %v2291
    %v2295 = vmul.f32 %v2294, 0.6931472
    %v2296 = vadd.f32 %v2293, %v2264
    %v2297 = vadd.f32 %v2295, %v2271
    %2298 = vset.pattern.permute.xlu0 4
    %2299 = vperm.xlu0 %2298, %v2090
    %v2300 = vpop.permute.xlu0 %2299
    %vm2301 = vcmp.eq.s32.totalorder %v2300, 1
    %v2304 = vsel %vm1906, %v2297, %v2296
    %v2306 = vsel %vm2301, %v2304, %v2237
    %v2307 = vperm.slane %v2306, 0
    %v2308 = vlaneseq
    %v2309 = vshrl.u32 %v2308, 7
    %2311 = vset.pattern.permute.xlu0 %v2309
    %2312 = vperm.xlu0 %2311, %v2307
    %v2313 = vpop.permute.xlu0 %2312
    %v2314 = vperm.slane %v2306, 1
    %v2315 = vlaneseq
    %v2316 = vshrl.u32 %v2315, 7
    %2318 = vset.pattern.permute.xlu0 %v2316
    %2319 = vperm.xlu0 %2318, %v2314
    %v2320 = vpop.permute.xlu0 %2319
    %v2321 = vadd.f32 %v2313, %v1921
    %v2322 = vadd.f32 %v2320, %v1921
    %v2323 = vperm.slane %v1843, 5
    %v2324 = vperm.slane %v1846, 5
    %v2325 = vadd.f32 %v2321, %v2323
    %v2326 = vadd.f32 %v2322, %v2324
    %v2327 = vsel %vm2048, %v2325, -inf
    %v2328 = vrot.slane %v2327, 4
    %v2329 = vmax.f32 %v2327, %v2328
    %v2330 = vrot.slane %v2329, 2
    %v2331 = vmax.f32 %v2329, %v2330
    %v2332 = vrot.slane %v2331, 1
    %v2333 = vmax.f32 %v2331, %v2332
    %v2334 = vsel %vm2048, %v2326, -inf
    %v2335 = vrot.slane %v2334, 4
    %v2336 = vmax.f32 %v2334, %v2335
    %v2337 = vrot.slane %v2336, 2
    %v2338 = vmax.f32 %v2336, %v2337
    %v2339 = vrot.slane %v2338, 1
    %v2340 = vmax.f32 %v2338, %v2339
    %v2341 = vsub.f32 %v2325, %v2333
    %v2342 = vsub.f32 %v2326, %v2340
    %v2343 = vmul.f32 %v2341, 1.442695
    %v2344 = vpow.pop %v2343
    %v2345 = vmul.f32 %v2342, 1.442695
    %v2346 = vpow.pop %v2345
    %v2347 = vsel %vm2048, %v2344, 0.0
    %v2348 = vrot.slane %v2347, 4
    %v2349 = vadd.f32 %v2347, %v2348
    %v2350 = vrot.slane %v2349, 2
    %v2351 = vadd.f32 %v2349, %v2350
    %v2352 = vrot.slane %v2351, 1
    %v2353 = vadd.f32 %v2351, %v2352
    %v2354 = vsel %vm2048, %v2346, 0.0
    %v2355 = vrot.slane %v2354, 4
    %v2356 = vadd.f32 %v2354, %v2355
    %v2357 = vrot.slane %v2356, 2
    %v2358 = vadd.f32 %v2356, %v2357
    %v2359 = vrot.slane %v2358, 1
    %v2360 = vadd.f32 %v2358, %v2359
    %v2361 = vlog2.pop %v2353
    %v2362 = vmul.f32 %v2361, 0.6931472
    %v2363 = vlog2.pop %v2360
    %v2364 = vmul.f32 %v2363, 0.6931472
    %v2365 = vadd.f32 %v2362, %v2333
    %v2366 = vadd.f32 %v2364, %v2340
    %2367 = vset.pattern.permute.xlu0 5
    %2368 = vperm.xlu0 %2367, %v2090
    %v2369 = vpop.permute.xlu0 %2368
    %vm2370 = vcmp.eq.s32.totalorder %v2369, 1
    %v2373 = vsel %vm1906, %v2366, %v2365
    %v2375 = vsel %vm2370, %v2373, %v2306
    %v2376 = vperm.slane %v2375, 0
    %v2377 = vlaneseq
    %v2378 = vshrl.u32 %v2377, 7
    %2380 = vset.pattern.permute.xlu0 %v2378
    %2381 = vperm.xlu0 %2380, %v2376
    %v2382 = vpop.permute.xlu0 %2381
    %v2383 = vperm.slane %v2375, 1
    %v2384 = vlaneseq
    %v2385 = vshrl.u32 %v2384, 7
    %2387 = vset.pattern.permute.xlu0 %v2385
    %2388 = vperm.xlu0 %2387, %v2383
    %v2389 = vpop.permute.xlu0 %2388
    %v2390 = vadd.f32 %v2382, %v1921
    %v2391 = vadd.f32 %v2389, %v1921
    %v2392 = vperm.slane %v1843, 6
    %v2393 = vperm.slane %v1846, 6
    %v2394 = vadd.f32 %v2390, %v2392
    %v2395 = vadd.f32 %v2391, %v2393
    %v2396 = vsel %vm2048, %v2394, -inf
    %v2397 = vrot.slane %v2396, 4
    %v2398 = vmax.f32 %v2396, %v2397
    %v2399 = vrot.slane %v2398, 2
    %v2400 = vmax.f32 %v2398, %v2399
    %v2401 = vrot.slane %v2400, 1
    %v2402 = vmax.f32 %v2400, %v2401
    %v2403 = vsel %vm2048, %v2395, -inf
    %v2404 = vrot.slane %v2403, 4
    %v2405 = vmax.f32 %v2403, %v2404
    %v2406 = vrot.slane %v2405, 2
    %v2407 = vmax.f32 %v2405, %v2406
    %v2408 = vrot.slane %v2407, 1
    %v2409 = vmax.f32 %v2407, %v2408
    %v2410 = vsub.f32 %v2394, %v2402
    %v2411 = vsub.f32 %v2395, %v2409
    %v2412 = vmul.f32 %v2410, 1.442695
    %v2413 = vpow.pop %v2412
    %v2414 = vmul.f32 %v2411, 1.442695
    %v2415 = vpow.pop %v2414
    %v2416 = vsel %vm2048, %v2413, 0.0
    %v2417 = vrot.slane %v2416, 4
    %v2418 = vadd.f32 %v2416, %v2417
    %v2419 = vrot.slane %v2418, 2
    %v2420 = vadd.f32 %v2418, %v2419
    %v2421 = vrot.slane %v2420, 1
    %v2422 = vadd.f32 %v2420, %v2421
    %v2423 = vsel %vm2048, %v2415, 0.0
    %v2424 = vrot.slane %v2423, 4
    %v2425 = vadd.f32 %v2423, %v2424
    %v2426 = vrot.slane %v2425, 2
    %v2427 = vadd.f32 %v2425, %v2426
    %v2428 = vrot.slane %v2427, 1
    %v2429 = vadd.f32 %v2427, %v2428
    %v2430 = vlog2.pop %v2422
    %v2431 = vmul.f32 %v2430, 0.6931472
    %v2432 = vlog2.pop %v2429
    %v2433 = vmul.f32 %v2432, 0.6931472
    %v2434 = vadd.f32 %v2431, %v2402
    %v2435 = vadd.f32 %v2433, %v2409
    %2436 = vset.pattern.permute.xlu0 6
    %2437 = vperm.xlu0 %2436, %v2090
    %v2438 = vpop.permute.xlu0 %2437
    %vm2439 = vcmp.eq.s32.totalorder %v2438, 1
    %v2442 = vsel %vm1906, %v2435, %v2434
    %v2444 = vsel %vm2439, %v2442, %v2375
    %v2445 = vperm.slane %v2444, 0
    %v2446 = vlaneseq
    %v2447 = vshrl.u32 %v2446, 7
    %2449 = vset.pattern.permute.xlu0 %v2447
    %2450 = vperm.xlu0 %2449, %v2445
    %v2451 = vpop.permute.xlu0 %2450
    %v2452 = vperm.slane %v2444, 1
    %v2453 = vlaneseq
    %v2454 = vshrl.u32 %v2453, 7
    %2456 = vset.pattern.permute.xlu0 %v2454
    %2457 = vperm.xlu0 %2456, %v2452
    %v2458 = vpop.permute.xlu0 %2457
    %v2459 = vadd.f32 %v2451, %v1921
    %v2460 = vadd.f32 %v2458, %v1921
    %v2461 = vperm.slane %v1843, 7
    %v2462 = vperm.slane %v1846, 7
    %v2463 = vadd.f32 %v2459, %v2461
    %v2464 = vadd.f32 %v2460, %v2462
    %v2465 = vsel %vm2048, %v2463, -inf
    %v2466 = vrot.slane %v2465, 4
    %v2467 = vmax.f32 %v2465, %v2466
    %v2468 = vrot.slane %v2467, 2
    %v2469 = vmax.f32 %v2467, %v2468
    %v2470 = vrot.slane %v2469, 1
    %v2471 = vmax.f32 %v2469, %v2470
    %v2472 = vsel %vm2048, %v2464, -inf
    %v2473 = vrot.slane %v2472, 4
    %v2474 = vmax.f32 %v2472, %v2473
    %v2475 = vrot.slane %v2474, 2
    %v2476 = vmax.f32 %v2474, %v2475
    %v2477 = vrot.slane %v2476, 1
    %v2478 = vmax.f32 %v2476, %v2477
    %v2479 = vsub.f32 %v2463, %v2471
    %v2480 = vsub.f32 %v2464, %v2478
    %v2481 = vmul.f32 %v2479, 1.442695
    %v2482 = vpow.pop %v2481
    %v2483 = vmul.f32 %v2480, 1.442695
    %v2484 = vpow.pop %v2483
    %v2485 = vsel %vm2048, %v2482, 0.0
    %v2486 = vrot.slane %v2485, 4
    %v2487 = vadd.f32 %v2485, %v2486
    %v2488 = vrot.slane %v2487, 2
    %v2489 = vadd.f32 %v2487, %v2488
    %v2490 = vrot.slane %v2489, 1
    %v2491 = vadd.f32 %v2489, %v2490
    %v2492 = vsel %vm2048, %v2484, 0.0
    %v2493 = vrot.slane %v2492, 4
    %v2494 = vadd.f32 %v2492, %v2493
    %v2495 = vrot.slane %v2494, 2
    %v2496 = vadd.f32 %v2494, %v2495
    %v2497 = vrot.slane %v2496, 1
    %v2498 = vadd.f32 %v2496, %v2497
    %v2499 = vlog2.pop %v2491
    %v2500 = vmul.f32 %v2499, 0.6931472
    %v2501 = vlog2.pop %v2498
    %v2502 = vmul.f32 %v2501, 0.6931472
    %v2503 = vadd.f32 %v2500, %v2471
    %v2504 = vadd.f32 %v2502, %v2478
    %2505 = vset.pattern.permute.xlu0 7
    %2506 = vperm.xlu0 %2505, %v2090
    %v2507 = vpop.permute.xlu0 %2506
    %vm2508 = vcmp.eq.s32.totalorder %v2507, 1
    %v2511 = vsel %vm1906, %v2504, %v2503
    %v2513 = vsel %vm2508, %v2511, %v2444
    %v2514 = vadd.f32 %v2513, %v2017
    %v2515 = vsel %vm1916, %v2514, -inf
    %2516 = vmax.xlane.f32.xlu0 %v2515
    %v2517 = vpop.xlane.xlu0 %2516
    %v2518 = vsub.f32 %v2514, %v2517
    %v2519 = vmul.f32 %v2518, 1.442695
    %v2520 = vpow.pop %v2519
    %v2521 = vsel %vm1916, %v2520, 0.0
    %2522 = vadd.xlane.f32.xlu0 %v2521
    %v2523 = vpop.xlane.xlu0 %2522
    %v2524 = vlog2.pop %v2523
    %v2525 = vmul.f32 %v2524, 0.6931472
    %v2526 = vadd.f32 %v2525, %v2517
    %v2527 = vsub.f32 %v2026, %v2526
    %vm2528 = vcmask 1041408
    %v2529 = vsel %vm2528, %v2527, 0.0
    %v2530 = vrot.slane %v2529, 4
    %v2531 = vadd.f32 %v2529, %v2530
    %v2532 = vrot.slane %v2531, 2
    %v2533 = vadd.f32 %v2531, %v2532
    %v2534 = vrot.slane %v2533, 1
    %v2535 = vadd.f32 %v2533, %v2534
    %v2536 = vsub.f32 0.0, %v2535
    %vm2537 = vcmask 0
    %2538 = vst.msk [vmem:[#allocation2] sm:$0x1] %vm2537, %v2536
    // Predicated region
    $region46: #{bert_for_ner_loss.1} parent=1 // pred_check
      _
    $region47: #{bert_for_ner_loss.1} parent=1 // pred_check_branch
      %2540 = sbr.rel (0) target = $region49
    $region48: #{bert_for_ner_loss.1} parent=1 // pred_region
      %2542 = vsyncadd [#allocation3], 0
      %s2544 = sshll.u32 [#allocation2], 4
      %s2545 = int_to_ptr.vmem [resolvable:$true] %s2544
      %s2546 = sshll.u32 %s11, 4
      %s2547 = int_to_ptr.hbm [resolvable:$true] %s2546
      %2549 = dma.vmem_to_hbm [thread:$0]  %s2545, 16, %s2547, [#allocation3]
    $region49: #{bert_for_ner_loss.1} parent=1 // pred_fallthru
      _
    // Predicated region
    $region50: #{bert_for_ner_loss.1} parent=1 // pred_check
      _
    $region51: #{bert_for_ner_loss.1} parent=1 // pred_check_branch
      %2551 = sbr.rel (0) target = $region53
    $region52: #{bert_for_ner_loss.1} parent=1 // pred_region
      %2553 = dma.done [#allocation3], 16
    $region53: #{bert_for_ner_loss.1} parent=1 // pred_fallthru
      _
    %2554 = vsyncpa [#allocation3], 1

</llo_original>
